<compile_context>
chip_gen: v5e
topology: v5e:2x2
jax: 0.10.0
libtpu: 0.0.40
codegen_flags: <defaults>
</compile_context>

<pallas_src>
import functools

import jax
import jax.numpy as jnp
from jax.experimental import pallas as pl
from jax.experimental.pallas import tpu as pltpu


def _ffn_block_kernel(x_ref, g_ref, w0_ref, w1_ref, wout_ref, o_ref,
                      xn_ref, acc_ref, *, eps):
    """One (tm, D) row tile x one (tf) slice of dim_ff.

    x_ref   : (tm, D)   input rows (resident across the f axis)
    g_ref   : (1, D)    layernorm weight
    w0_ref  : (tf, D)   gate projection slice  (native (F, D) layout)
    w1_ref  : (tf, D)   up   projection slice  (native (F, D) layout)
    wout_ref: (D, tf)   down projection slice  (native (D, F) layout)
    o_ref   : (tm, D)   output rows
    xn_ref  : (tm, D)   bf16 scratch: normalized rows (computed once per row tile)
    acc_ref : (tm, D)   f32 scratch: down-projection accumulator
    """
    f = pl.program_id(1)

    # ---- init phase: RMS-norm once per row tile, zero the accumulator.
    @pl.when(f == 0)
    def _init():
        x = x_ref[...].astype(jnp.float32)
        var = jnp.mean(x * x, axis=-1, keepdims=True)
        xn = x * jax.lax.rsqrt(var + eps) * g_ref[...].astype(jnp.float32)
        xn_ref[...] = xn.astype(xn_ref.dtype)          # bf16 for the MXU
        acc_ref[...] = jnp.zeros_like(acc_ref)

    xn = xn_ref[...]                                    # (tm, D) bf16

    # gate / up projections: (tm, D) x (tf, D) contracting on D -> (tm, tf)
    dnums_ffn = (((1,), (1,)), ((), ()))
    gate = jax.lax.dot_general(xn, w0_ref[...], dnums_ffn,
                               preferred_element_type=jnp.float32)
    up = jax.lax.dot_general(xn, w1_ref[...], dnums_ffn,
                             preferred_element_type=jnp.float32)

    # silu gating in f32, then back to bf16 for the down projection.
    h = (gate * jax.nn.sigmoid(gate) * up).astype(jnp.bfloat16)

    # down projection partial: (tm, tf) x (D, tf) contracting on tf -> (tm, D)
    acc_ref[...] += jax.lax.dot_general(h, wout_ref[...], (((1,), (1,)), ((), ())),
                                        preferred_element_type=jnp.float32)

    # ---- finalize: residual add, cast, store.
    @pl.when(f == pl.num_programs(1) - 1)
    def _finalize():
        o_ref[...] = (x_ref[...].astype(jnp.float32)
                      + acc_ref[...]).astype(o_ref.dtype)


def _round_up(n, m):
    return (n + m - 1) // m * m


def ffn_block(hidden_states, ln_weight, w0, w1, w_out, *,
              eps=1e-6, tm=256, tf=512):
    """hidden_states: (B, S, D); ln_weight: (D,); w0, w1: (F, D); w_out: (D, F)."""
    B, S, D = hidden_states.shape
    F, D2 = w0.shape
    assert D2 == D and w1.shape == (F, D) and w_out.shape == (D, F)
    M = B * S

    # Row tile: as large as the (padded) problem allows, multiple of 8 sublanes.
    tm = max(8, min(tm, _round_up(M, 8)))
    Mp = _round_up(M, tm)

    # dim_ff tile: must divide F.
    if F % tf != 0:
        tf = F  # TODO(synk): pick the largest 128-multiple divisor for odd dim_ff
    grid = (Mp // tm, F // tf)

    # Flatten + zero-pad rows (zero rows normalize to zero -> harmless, sliced off).
    x2 = hidden_states.reshape(M, D)
    if Mp != M:
        x2 = jnp.pad(x2, ((0, Mp - M), (0, 0)))

    # bf16 weights for the MXU (no-op if already bf16); layernorm weight as (1, D).
    w0b = w0.astype(jnp.bfloat16)
    w1b = w1.astype(jnp.bfloat16)
    wob = w_out.astype(jnp.bfloat16)
    g2 = ln_weight.reshape(1, D)

    cost = pl.CostEstimate(
        flops=6 * Mp * D * F,                       # three matmuls
        transcendentals=Mp * F,                     # sigmoid in silu
        bytes_accessed=(2 * Mp * D * hidden_states.dtype.itemsize
                        + 3 * D * F * 2),
    )

    out = pl.pallas_call(
        functools.partial(_ffn_block_kernel, eps=eps),
        out_shape=jax.ShapeDtypeStruct((Mp, D), hidden_states.dtype),
        grid_spec=pltpu.PrefetchScalarGridSpec(
            num_scalar_prefetch=0,
            grid=grid,
            in_specs=[
                pl.BlockSpec((tm, D), lambda i, f: (i, 0)),   # x rows (resident over f)
                pl.BlockSpec((1, D), lambda i, f: (0, 0)),    # layernorm weight
                pl.BlockSpec((tf, D), lambda i, f: (f, 0)),   # W0 slice (F, D)
                pl.BlockSpec((tf, D), lambda i, f: (f, 0)),   # W1 slice (F, D)
                pl.BlockSpec((D, tf), lambda i, f: (0, f)),   # Wout slice (D, F)
            ],
            out_specs=pl.BlockSpec((tm, D), lambda i, f: (i, 0)),
            scratch_shapes=[
                pltpu.VMEM((tm, D), jnp.bfloat16),            # normalized rows
                pltpu.VMEM((tm, D), jnp.float32),             # down-proj accumulator
            ],
        ),
        compiler_params=pltpu.CompilerParams(
            dimension_semantics=("parallel", "arbitrary"),
            vmem_limit_bytes=64 * 1024 * 1024,
        ),
        cost_estimate=cost,
    )(x2, g2, w0b, w1b, wob)

    return out[:M].reshape(B, S, D)


def _reference(hidden, ln_weight, w0, w1, w_out, eps=1e-6):
    xf = hidden.astype(jnp.float32)
    var = jnp.mean(xf * xf, axis=-1, keepdims=True)
    xn = xf * jax.lax.rsqrt(var + eps) * ln_weight.astype(jnp.float32)
    gate = jax.nn.silu(xn @ w0.astype(jnp.float32).T)
    up = xn @ w1.astype(jnp.float32).T
    y = (gate * up) @ w_out.astype(jnp.float32).T
    return (hidden.astype(jnp.float32) + y).astype(hidden.dtype)


if __name__ == "__main__":
    # Small shapes consistent with (batch, seq_self, dim_model) / dim_ff.
    B, S, D, F = 2, 72, 256, 1024
    dtype = jnp.float32

    key = jax.random.PRNGKey(0)
    k_x, k_ln, k_w0, k_w1, k_wo = jax.random.split(key, 5)

    hidden = jax.random.normal(k_x, (B, S, D), dtype=dtype)
    ln_weight = 1.0 + 0.02 * jax.random.normal(k_ln, (D,), dtype=dtype)
    w0 = (0.05 * jax.random.normal(k_w0, (F, D), dtype=dtype)).astype(jnp.bfloat16)
    w1 = (0.05 * jax.random.normal(k_w1, (F, D), dtype=dtype)).astype(jnp.bfloat16)
    w_out = (0.05 * jax.random.normal(k_wo, (D, F), dtype=dtype)).astype(jnp.bfloat16)

    ref = _reference(hidden, ln_weight, w0, w1, w_out, eps=1e-6)

    # Default tiling (single large row tile here).
    out = ffn_block(hidden, ln_weight, w0, w1, w_out, eps=1e-6)
    out = jax.block_until_ready(out)
    assert out.shape == (B, S, D)
    assert jnp.allclose(out, ref, atol=2e-2, rtol=2e-2)

    # Explicit small tiles: exercises row padding (144 -> 192), multi-step row
    # grid, and the F-axis accumulation across two tf slices.
    out2 = ffn_block(hidden, ln_weight, w0, w1, w_out, eps=1e-6, tm=64, tf=512)
    out2 = jax.block_until_ready(out2)
    assert jnp.allclose(out2, ref, atol=2e-2, rtol=2e-2)

    print("KERNEL_OK")
</pallas_src>

<mosaic_0001>
module attributes {stable_mosaic.version = 11 : i64} {
  func.func @_ffn_block_kernel(%arg0: i32, %arg1: i32, %arg2: memref<144x256xf32, #tpu.memory_space<vmem>>, %arg3: memref<1x256xf32, #tpu.memory_space<vmem>>, %arg4: memref<512x256xbf16, #tpu.memory_space<vmem>>, %arg5: memref<512x256xbf16, #tpu.memory_space<vmem>>, %arg6: memref<256x512xbf16, #tpu.memory_space<vmem>>, %arg7: memref<144x256xf32, #tpu.memory_space<vmem>>, %arg8: memref<144x256xbf16, #tpu.memory_space<vmem>>, %arg9: memref<144x256xf32, #tpu.memory_space<vmem>>) attributes {dimension_semantics = [#tpu.dimension_semantics<parallel>, #tpu.dimension_semantics<arbitrary>], iteration_bounds = array<i64: 1, 2>, scalar_prefetch = 0 : i64, scratch_operands = 2 : i64, tpu.core_type = #tpu.core_type<tc>, window_params = [{transform_indices = @transform_0, window_bounds = array<i64: 144, 256>}, {pipeline_mode = #tpu.pipeline_mode<synchronous>, transform_indices = @transform_1, window_bounds = array<i64: 1, 256>}, {transform_indices = @transform_2, window_bounds = array<i64: 512, 256>}, {transform_indices = @transform_3, window_bounds = array<i64: 512, 256>}, {transform_indices = @transform_4, window_bounds = array<i64: 256, 512>}, {transform_indices = @transform_5, window_bounds = array<i64: 144, 256>}]} {
    %c0_i32 = arith.constant 0 : i32
    %0 = arith.cmpi eq, %arg1, %c0_i32 : i32
    %1 = arith.extui %0 : i1 to i32
    %c0_i32_0 = arith.constant 0 : i32
    %2 = arith.cmpi ne, %1, %c0_i32_0 : i32
    scf.if %2 {
      %c0_16 = arith.constant 0 : index
      %c0_17 = arith.constant 0 : index
      %24 = vector.load %arg2[%c0_16, %c0_17] : memref<144x256xf32, #tpu.memory_space<vmem>>, vector<144x256xf32>
      %25 = arith.mulf %24, %24 : vector<144x256xf32>
      %cst_18 = arith.constant dense<0.000000e+00> : vector<144xf32>
      %26 = vector.multi_reduction <add>, %25, %cst_18 [1] : vector<144x256xf32> to vector<144xf32>
      %27 = vector.shape_cast %26 : vector<144xf32> to vector<144x1xf32>
      %cst_19 = arith.constant 2.560000e+02 : f32
      %28 = vector.broadcast %cst_19 : f32 to vector<144x1xf32>
      %29 = arith.divf %27, %28 : vector<144x1xf32>
      %cst_20 = arith.constant 9.99999997E-7 : f32
      %30 = vector.broadcast %cst_20 : f32 to vector<144x1xf32>
      %31 = arith.addf %29, %30 : vector<144x1xf32>
      %32 = math.rsqrt %31 : vector<144x1xf32>
      %33 = vector.broadcast %32 : vector<144x1xf32> to vector<144x256xf32>
      %34 = arith.mulf %24, %33 : vector<144x256xf32>
      %c0_21 = arith.constant 0 : index
      %c0_22 = arith.constant 0 : index
      %35 = vector.load %arg3[%c0_21, %c0_22] : memref<1x256xf32, #tpu.memory_space<vmem>>, vector<1x256xf32>
      %36 = vector.broadcast %35 : vector<1x256xf32> to vector<144x256xf32>
      %37 = arith.mulf %34, %36 : vector<144x256xf32>
      %38 = arith.truncf %37 : vector<144x256xf32> to vector<144x256xbf16>
      %c0_23 = arith.constant 0 : index
      %c0_24 = arith.constant 0 : index
      %39 = vector.load %arg8[%c0_23, %c0_24] : memref<144x256xbf16, #tpu.memory_space<vmem>>, vector<144x256xbf16>
      tpu.vector_store %arg8[%c0_23, %c0_24], %38 {strides = array<i32>} : memref<144x256xbf16, #tpu.memory_space<vmem>>, vector<144x256xbf16>,
      %cst_25 = arith.constant 0.000000e+00 : f32
      %40 = vector.broadcast %cst_25 : f32 to vector<144x256xf32>
      %c0_26 = arith.constant 0 : index
      %c0_27 = arith.constant 0 : index
      %41 = vector.load %arg9[%c0_26, %c0_27] : memref<144x256xf32, #tpu.memory_space<vmem>>, vector<144x256xf32>
      tpu.vector_store %arg9[%c0_26, %c0_27], %40 {strides = array<i32>} : memref<144x256xf32, #tpu.memory_space<vmem>>, vector<144x256xf32>,
    } else {
    }
    %c0 = arith.constant 0 : index
    %c0_1 = arith.constant 0 : index
    %3 = vector.load %arg8[%c0, %c0_1] : memref<144x256xbf16, #tpu.memory_space<vmem>>, vector<144x256xbf16>
    %c0_2 = arith.constant 0 : index
    %c0_3 = arith.constant 0 : index
    %4 = vector.load %arg4[%c0_2, %c0_3] : memref<512x256xbf16, #tpu.memory_space<vmem>>, vector<512x256xbf16>
    %cst = arith.constant dense<0.000000e+00> : vector<144x512xf32>
    %5 = tpu.matmul %3, %4, %cst {dimension_numbers = #tpu.dot_dimension_numbers<[1], [1], [0], [0], [0, 0, 1, 0], [], []>} : vector<144x256xbf16>, vector<512x256xbf16>, vector<144x512xf32> -> vector<144x512xf32>
    %c0_4 = arith.constant 0 : index
    %c0_5 = arith.constant 0 : index
    %6 = vector.load %arg5[%c0_4, %c0_5] : memref<512x256xbf16, #tpu.memory_space<vmem>>, vector<512x256xbf16>
    %cst_6 = arith.constant dense<0.000000e+00> : vector<144x512xf32>
    %7 = tpu.matmul %3, %6, %cst_6 {dimension_numbers = #tpu.dot_dimension_numbers<[1], [1], [0], [0], [0, 0, 1, 0], [], []>} : vector<144x256xbf16>, vector<512x256xbf16>, vector<144x512xf32> -> vector<144x512xf32>
    %8 = arith.negf %5 : vector<144x512xf32>
    %9 = math.exp %8 : vector<144x512xf32>
    %cst_7 = arith.constant 1.000000e+00 : f32
    %10 = vector.broadcast %cst_7 : f32 to vector<144x512xf32>
    %11 = arith.addf %10, %9 : vector<144x512xf32>
    %12 = arith.divf %10, %11 : vector<144x512xf32>
    %13 = arith.mulf %5, %12 : vector<144x512xf32>
    %14 = arith.mulf %13, %7 : vector<144x512xf32>
    %15 = arith.truncf %14 : vector<144x512xf32> to vector<144x512xbf16>
    %c0_8 = arith.constant 0 : index
    %c0_9 = arith.constant 0 : index
    %16 = vector.load %arg9[%c0_8, %c0_9] : memref<144x256xf32, #tpu.memory_space<vmem>>, vector<144x256xf32>
    %c0_10 = arith.constant 0 : index
    %c0_11 = arith.constant 0 : index
    %17 = vector.load %arg6[%c0_10, %c0_11] : memref<256x512xbf16, #tpu.memory_space<vmem>>, vector<256x512xbf16>
    %cst_12 = arith.constant dense<0.000000e+00> : vector<144x256xf32>
    %18 = tpu.matmul %15, %17, %cst_12 {dimension_numbers = #tpu.dot_dimension_numbers<[1], [1], [0], [0], [0, 0, 1, 0], [], []>} : vector<144x512xbf16>, vector<256x512xbf16>, vector<144x256xf32> -> vector<144x256xf32>
    %19 = arith.addf %16, %18 : vector<144x256xf32>
    %c0_13 = arith.constant 0 : index
    %c0_14 = arith.constant 0 : index
    %20 = vector.load %arg9[%c0_13, %c0_14] : memref<144x256xf32, #tpu.memory_space<vmem>>, vector<144x256xf32>
    tpu.vector_store %arg9[%c0_13, %c0_14], %19 {strides = array<i32>} : memref<144x256xf32, #tpu.memory_space<vmem>>, vector<144x256xf32>,
    %c1_i32 = arith.constant 1 : i32
    %21 = arith.cmpi eq, %arg1, %c1_i32 : i32
    %22 = arith.extui %21 : i1 to i32
    %c0_i32_15 = arith.constant 0 : i32
    %23 = arith.cmpi ne, %22, %c0_i32_15 : i32
    scf.if %23 {
      %c0_16 = arith.constant 0 : index
      %c0_17 = arith.constant 0 : index
      %24 = vector.load %arg2[%c0_16, %c0_17] : memref<144x256xf32, #tpu.memory_space<vmem>>, vector<144x256xf32>
      %c0_18 = arith.constant 0 : index
      %c0_19 = arith.constant 0 : index
      %25 = vector.load %arg9[%c0_18, %c0_19] : memref<144x256xf32, #tpu.memory_space<vmem>>, vector<144x256xf32>
      %26 = arith.addf %24, %25 : vector<144x256xf32>
      %c0_20 = arith.constant 0 : index
      %c0_21 = arith.constant 0 : index
      %27 = vector.load %arg7[%c0_20, %c0_21] : memref<144x256xf32, #tpu.memory_space<vmem>>, vector<144x256xf32>
      tpu.vector_store %arg7[%c0_20, %c0_21], %26 {strides = array<i32>} : memref<144x256xf32, #tpu.memory_space<vmem>>, vector<144x256xf32>,
    } else {
    }
    return
  }
  func.func @transform_0(%arg0: i32, %arg1: i32) -> (i32, i32) {
    %c0_i32 = arith.constant 0 : i32
    %c0_i32_0 = arith.constant 0 : i32
    return %arg0, %c0_i32 : i32, i32
  }
  func.func @transform_1(%arg0: i32, %arg1: i32) -> (i32, i32) {
    %c0_i32 = arith.constant 0 : i32
    %c0_i32_0 = arith.constant 0 : i32
    %c0_i32_1 = arith.constant 0 : i32
    return %c0_i32, %c0_i32_0 : i32, i32
  }
  func.func @transform_2(%arg0: i32, %arg1: i32) -> (i32, i32) {
    %c0_i32 = arith.constant 0 : i32
    %c0_i32_0 = arith.constant 0 : i32
    return %arg1, %c0_i32 : i32, i32
  }
  func.func @transform_3(%arg0: i32, %arg1: i32) -> (i32, i32) {
    %c0_i32 = arith.constant 0 : i32
    %c0_i32_0 = arith.constant 0 : i32
    return %arg1, %c0_i32 : i32, i32
  }
  func.func @transform_4(%arg0: i32, %arg1: i32) -> (i32, i32) {
    %c0_i32 = arith.constant 0 : i32
    %c0_i32_0 = arith.constant 0 : i32
    return %c0_i32, %arg1 : i32, i32
  }
  func.func @transform_5(%arg0: i32, %arg1: i32) -> (i32, i32) {
    %c0_i32 = arith.constant 0 : i32
    %c0_i32_0 = arith.constant 0 : i32
    return %arg0, %c0_i32 : i32, i32
  }
}

</mosaic_0001>

<llo_original>
// kernel: tpu_custom_call.1
$region0: #{tpu_custom_call.1}
  #allocation0 [shape = 'u32[]', space=smem, size = 0x4, offset = 0x4, fixed_abs, tag = 'smem constant byte address 0x4 - core index']
  #allocation1 [shape = 'u32[72,128]{1,0:T(1,128)}', space=vmem, size = 0x9000, scoped, tag = 'internal scratch']
  #allocation2 [shape = 'bf16[144,256]{1,0:T(8,128)(2,1)}', space=vmem, size = 0x12000, scoped, tag = 'scratch operand']
  #allocation3 [shape = 'f32[144,256]{1,0:T(8,128)}', space=vmem, size = 0x24000, scoped, tag = 'scratch operand']
  %s0 = inlined_call_operand.hbm [shape: f32[144,256], index: 0, kind: input, shape index: {}]
  %s1 = inlined_call_operand.hbm [shape: f32[1,256], index: 1, kind: input, shape index: {}]
  %s2 = inlined_call_operand.hbm [shape: bf16[1024,256], index: 2, kind: input, shape index: {}]
  %s3 = inlined_call_operand.hbm [shape: bf16[1024,256], index: 3, kind: input, shape index: {}]
  %s4 = inlined_call_operand.hbm [shape: bf16[256,1024], index: 4, kind: input, shape index: {}]
  %s5 = inlined_call_operand.hbm [shape: f32[144,256], index: 5, kind: output, shape index: {}]
  %s6 = sld [smem:[#allocation0]]
  $region81: #{tpu_custom_call.1} parent=0
    _
  %s8 = ssub.s32 1, %s6
  %s9 = scalar_select 0, %s8, %s6
  $region1: #{tpu_custom_call.1} parent=0
    #allocation4 [shape = 'u8[147456]{0}', space=vmem, size = 0x24000, scoped, tag = 'input window, operand 0, single buffered']
    #allocation5 [shape = 's32[2]{0}', space=sflag, size = 0x8, scoped, tag = 'scoped memory for tpu_custom_call.1']
    #allocation6 [shape = 's32[2]{0}', space=sflag, size = 0x8, scoped, tag = 'scoped memory for tpu_custom_call.1']
    #allocation7 [shape = 'u8[1024]{0}', space=vmem, size = 0x400, scoped, tag = 'input window, operand 1, single buffered']
    #allocation8 [shape = 's32[1]{0}', space=sflag, size = 0x4, scoped, tag = 'scoped memory for tpu_custom_call.1']
    #allocation9 [shape = 'u8[524288]{0}', space=vmem, size = 0x80000, scoped, tag = 'input window, operand 2']
    #allocation10 [shape = 'u8[524288]{0}', space=vmem, size = 0x80000, scoped, tag = 'input window, operand 3']
    #allocation11 [shape = 'u8[524288]{0}', space=vmem, size = 0x80000, scoped, tag = 'input window, operand 4']
    #allocation12 [shape = 'u8[147456]{0}', space=vmem, size = 0x24000, scoped, tag = 'output window, operand 0, single buffered']
    %10 = vsyncpa [#allocation5], 0
    %11 = vsyncpa [#allocation8], 0
    %12 = vsyncpa [#allocation6], 0
    loop: start=0, step=1, limit=4
    $region2: #{tpu_custom_call.1} parent=1 // loop_pre_header
      _
    $region3: #{tpu_custom_call.1} parent=1 // loop_header
      %s14 = sphi 0, %s18
      %p15 = scmp.ge.s32.totalorder %s14, 4
      %s21 = sphi 0, %s33
      %s22 = sphi 0, %s29
      %s23 = sphi 0, %s21
      %s24 = sphi 0, %s22
      %s25 = sphi 0, %s23
      %s26 = sphi 0, %s24
      %s36 = sphi 0, %s38
      %s39 = sphi 0, %s36
      %s40 = sphi 0, %s39
      %s56 = sphi 0, %s40
      %s60 = sphi 0, %s60
      %s62 = sphi 0, %s60
      %s63 = sphi 0, %s62
      %s77 = sphi 0, %s63
      %s83 = sphi 0, %s85
      %s86 = sphi 0, %s83
      %s87 = sphi 0, %s86
      %s103 = sphi 0, %s87
      %s109 = sphi 0, %s111
      %s112 = sphi 0, %s109
      %s113 = sphi 0, %s112
      %s129 = sphi 0, %s113
      %s135 = sphi 0, %s137
      %s138 = sphi 0, %s135
      %s139 = sphi 0, %s138
      %s155 = sphi 0, %s139
      %s161 = sphi 0, %s163
      %s164 = sphi 0, %s161
      %s165 = sphi 0, %s164
      %s181 = sphi 0, %s165
    $region4: #{tpu_custom_call.1} parent=1 // loop_header_branch
      %17 = sbr.rel (%p15) target = $region8
    $region5: #{tpu_custom_call.1} parent=1 // loop_body
      %s19 = ssub.s32 %s14, 1
      %s20 = ssub.s32 %s14, 2
      %s27 = sadd.s32 1, %s22
      %p28 = scmp.ge.s32.totalorder %s27, 2
      %s29 = scalar_select %p28, 0, %s27
      %s30 = sadd.s32 1, %s21
      %s31 = scalar_select %p28, %s30, %s21
      %p32 = scmp.ge.s32.totalorder %s31, 1
      %s33 = scalar_select %p32, 0, %s31
      %s34 = ssub.s32 %s21, %s33
      %p35 = scmp.eq.s32.totalorder %s34, 0
      %s37 = sadd.s32 %s36, 1
      %s38 = scalar_select %p35, %s36, %s37
      %p41 = pneg %p35
      %p42 = scmp.eq.s32.totalorder %s14, 1
      %p43 = por %p41, %p42
      %p44 = scmp.ne.s32.totalorder %s36, %s39
      %p45 = scmp.eq.s32.totalorder %s14, 0
      %p46 = por %p44, %p45
      %p47 = scmp.ne.s32.totalorder %s36, %s39
      %p48 = scmp.eq.s32.totalorder %s19, 1
      %p49 = por %p47, %p48
      %p50 = scmp.ne.s32.totalorder %s39, %s40
      %p51 = scmp.eq.s32.totalorder %s19, 0
      %p52 = por %p50, %p51
      %p53 = scmp.ne.s32.totalorder %s39, %s40
      %p54 = scmp.eq.s32.totalorder %s20, 1
      %p55 = por %p53, %p54
      %p57 = scmp.ne.s32.totalorder %s40, %s56
      %p58 = scmp.eq.s32.totalorder %s20, 0
      %p59 = por %p57, %p58
      %s61 = sadd.s32 %s60, 1
      %p64 = scmp.eq.s32.totalorder %s14, 1
      %p65 = scmp.ne.s32.totalorder %s60, %s62
      %p66 = scmp.eq.s32.totalorder %s14, 0
      %p67 = por %p65, %p66
      %p68 = scmp.ne.s32.totalorder %s60, %s62
      %p69 = scmp.eq.s32.totalorder %s19, 1
      %p70 = por %p68, %p69
      %p71 = scmp.ne.s32.totalorder %s62, %s63
      %p72 = scmp.eq.s32.totalorder %s19, 0
      %p73 = por %p71, %p72
      %p74 = scmp.ne.s32.totalorder %s62, %s63
      %p75 = scmp.eq.s32.totalorder %s20, 1
      %p76 = por %p74, %p75
      %p78 = scmp.ne.s32.totalorder %s63, %s77
      %p79 = scmp.eq.s32.totalorder %s20, 0
      %p80 = por %p78, %p79
      %s81 = ssub.s32 %s22, %s29
      %p82 = scmp.eq.s32.totalorder %s81, 0
      %s84 = sadd.s32 %s83, 1
      %s85 = scalar_select %p82, %s83, %s84
      %p88 = pneg %p82
      %p89 = scmp.eq.s32.totalorder %s14, 1
      %p90 = por %p88, %p89
      %p91 = scmp.ne.s32.totalorder %s83, %s86
      %p92 = scmp.eq.s32.totalorder %s14, 0
      %p93 = por %p91, %p92
      %p94 = scmp.ne.s32.totalorder %s83, %s86
      %p95 = scmp.eq.s32.totalorder %s19, 1
      %p96 = por %p94, %p95
      %p97 = scmp.ne.s32.totalorder %s86, %s87
      %p98 = scmp.eq.s32.totalorder %s19, 0
      %p99 = por %p97, %p98
      %p100 = scmp.ne.s32.totalorder %s86, %s87
      %p101 = scmp.eq.s32.totalorder %s20, 1
      %p102 = por %p100, %p101
      %p104 = scmp.ne.s32.totalorder %s87, %s103
      %p105 = scmp.eq.s32.totalorder %s20, 0
      %p106 = por %p104, %p105
      %s107 = ssub.s32 %s22, %s29
      %p108 = scmp.eq.s32.totalorder %s107, 0
      %s110 = sadd.s32 %s109, 1
      %s111 = scalar_select %p108, %s109, %s110
      %p114 = pneg %p108
      %p115 = scmp.eq.s32.totalorder %s14, 1
      %p116 = por %p114, %p115
      %p117 = scmp.ne.s32.totalorder %s109, %s112
      %p118 = scmp.eq.s32.totalorder %s14, 0
      %p119 = por %p117, %p118
      %p120 = scmp.ne.s32.totalorder %s109, %s112
      %p121 = scmp.eq.s32.totalorder %s19, 1
      %p122 = por %p120, %p121
      %p123 = scmp.ne.s32.totalorder %s112, %s113
      %p124 = scmp.eq.s32.totalorder %s19, 0
      %p125 = por %p123, %p124
      %p126 = scmp.ne.s32.totalorder %s112, %s113
      %p127 = scmp.eq.s32.totalorder %s20, 1
      %p128 = por %p126, %p127
      %p130 = scmp.ne.s32.totalorder %s113, %s129
      %p131 = scmp.eq.s32.totalorder %s20, 0
      %p132 = por %p130, %p131
      %s133 = ssub.s32 %s22, %s29
      %p134 = scmp.eq.s32.totalorder %s133, 0
      %s136 = sadd.s32 %s135, 1
      %s137 = scalar_select %p134, %s135, %s136
      %p140 = pneg %p134
      %p141 = scmp.eq.s32.totalorder %s14, 1
      %p142 = por %p140, %p141
      %p143 = scmp.ne.s32.totalorder %s135, %s138
      %p144 = scmp.eq.s32.totalorder %s14, 0
      %p145 = por %p143, %p144
      %p146 = scmp.ne.s32.totalorder %s135, %s138
      %p147 = scmp.eq.s32.totalorder %s19, 1
      %p148 = por %p146, %p147
      %p149 = scmp.ne.s32.totalorder %s138, %s139
      %p150 = scmp.eq.s32.totalorder %s19, 0
      %p151 = por %p149, %p150
      %p152 = scmp.ne.s32.totalorder %s138, %s139
      %p153 = scmp.eq.s32.totalorder %s20, 1
      %p154 = por %p152, %p153
      %p156 = scmp.ne.s32.totalorder %s139, %s155
      %p157 = scmp.eq.s32.totalorder %s20, 0
      %p158 = por %p156, %p157
      %s159 = ssub.s32 %s21, %s33
      %p160 = scmp.eq.s32.totalorder %s159, 0
      %s162 = sadd.s32 %s161, 1
      %s163 = scalar_select %p160, %s161, %s162
      %p166 = pneg %p160
      %p167 = scmp.eq.s32.totalorder %s14, 1
      %p168 = por %p166, %p167
      %p169 = scmp.ne.s32.totalorder %s161, %s164
      %p170 = scmp.eq.s32.totalorder %s14, 0
      %p171 = por %p169, %p170
      %p172 = scmp.ne.s32.totalorder %s161, %s164
      %p173 = scmp.eq.s32.totalorder %s19, 1
      %p174 = por %p172, %p173
      %p175 = scmp.ne.s32.totalorder %s164, %s165
      %p176 = scmp.eq.s32.totalorder %s19, 0
      %p177 = por %p175, %p176
      %p178 = scmp.ne.s32.totalorder %s164, %s165
      %p179 = scmp.eq.s32.totalorder %s20, 1
      %p180 = por %p178, %p179
      %p182 = scmp.ne.s32.totalorder %s165, %s181
      %p183 = scmp.eq.s32.totalorder %s20, 0
      %p184 = por %p182, %p183
      %p185 = scmp.le.s32.totalorder 1, %s14
      %p186 = scmp.lt.s32.totalorder %s14, 3
      %p187 = pnand %p185, %p186
      %p188 = pneg %p187
      // Predicated region
      $region9: #{tpu_custom_call.1} parent=5 // pred_check
        _
      $region10: #{tpu_custom_call.1} parent=5 // pred_check_branch
        %190 = sbr.rel (%p187) target = $region12
      $region11: #{tpu_custom_call.1} parent=5 // pred_region
        %s191 = ssub.s32 %s14, 1
        // Predicated region
        $region13: #{tpu_custom_call.1} parent=11 // pred_check
          %p192 = pneg %p52
        $region14: #{tpu_custom_call.1} parent=11 // pred_check_branch
          %194 = sbr.rel (%p192) target = $region16
        $region15: #{tpu_custom_call.1} parent=11 // pred_region
          %s195 = smul.u32 18, %s23
          %197 = vsyncadd [#allocation5], 0
          %s198 = smul.addr %s195, 2
          %s199 = smul.addr %s198, 8
          %s200 = scalar_lea.hbm %s0, %s199
          %s201 = sshll.u32 %s200, 4
          %s202 = int_to_ptr.hbm [resolvable:$true] %s201
          %s203 = sshll.u32 [#allocation4], 4
          %s204 = int_to_ptr.vmem [resolvable:$true] %s203
          %209 = dma.hbm_to_vmem [thread:$0]  %s202, 4608, %s204, [#allocation5], 256, 256, 16
        $region16: #{tpu_custom_call.1} parent=11 // pred_fallthru
          _
        // Predicated region
        $region17: #{tpu_custom_call.1} parent=11 // pred_check
          %p210 = pneg %p73
        $region18: #{tpu_custom_call.1} parent=11 // pred_check_branch
          %212 = sbr.rel (%p210) target = $region20
        $region19: #{tpu_custom_call.1} parent=11 // pred_region
          %214 = vsyncadd [#allocation8], 0
          %s216 = sshll.u32 %s1, 4
          %s217 = int_to_ptr.hbm [resolvable:$true] %s216
          %s218 = sshll.u32 [#allocation7], 4
          %s219 = int_to_ptr.vmem [resolvable:$true] %s218
          %221 = dma.hbm_to_vmem [thread:$0]  %s217, 32, %s219, [#allocation8]
        $region20: #{tpu_custom_call.1} parent=11 // pred_fallthru
          _
      $region12: #{tpu_custom_call.1} parent=5 // pred_fallthru
        _
      %p222 = scmp.lt.s32.totalorder %s14, 2
      // Predicated region
      $region21: #{tpu_custom_call.1} parent=5 // pred_check
        %p223 = pneg %p222
      $region22: #{tpu_custom_call.1} parent=5 // pred_check_branch
        %225 = sbr.rel (%p223) target = $region24
      $region23: #{tpu_custom_call.1} parent=5 // pred_region
        // Predicated region
        $region25: #{tpu_custom_call.1} parent=23 // pred_check
          %p226 = pneg %p93
        $region26: #{tpu_custom_call.1} parent=23 // pred_check_branch
          %228 = sbr.rel (%p226) target = $region28
        $region27: #{tpu_custom_call.1} parent=23 // pred_region
          %s229 = sand.u32 %s14, 1
          %s230 = scalar_lea.sflag [#allocation5], %s229
          %s231 = sand.u32 %s83, 1
          %s232 = smul.addr %s231, 512
          %s233 = scalar_lea.vmem [#allocation9], %s232
          %s234 = smul.u32 64, %s22
          %236 = vsyncadd %s230, 0
          %s237 = smul.addr %s234, 2
          %s238 = smul.addr %s237, 4
          %s239 = scalar_lea.hbm %s2, %s238
          %s240 = sshll.u32 %s239, 4
          %s241 = int_to_ptr.hbm [resolvable:$true] %s240
          %s242 = sshll.u32 %s233, 4
          %s243 = int_to_ptr.vmem [resolvable:$true] %s242
          %248 = dma.hbm_to_vmem [thread:$0]  %s241, 8192, %s243, %s230, 128, 128, 8
        $region28: #{tpu_custom_call.1} parent=23 // pred_fallthru
          _
        // Predicated region
        $region29: #{tpu_custom_call.1} parent=23 // pred_check
          %p249 = pneg %p119
        $region30: #{tpu_custom_call.1} parent=23 // pred_check_branch
          %251 = sbr.rel (%p249) target = $region32
        $region31: #{tpu_custom_call.1} parent=23 // pred_region
          %s252 = sand.u32 %s14, 1
          %s253 = scalar_lea.sflag [#allocation5], %s252
          %s254 = sand.u32 %s109, 1
          %s255 = smul.addr %s254, 512
          %s256 = scalar_lea.vmem [#allocation10], %s255
          %s257 = smul.u32 64, %s22
          %259 = vsyncadd %s253, 0
          %s260 = smul.addr %s257, 2
          %s261 = smul.addr %s260, 4
          %s262 = scalar_lea.hbm %s3, %s261
          %s263 = sshll.u32 %s262, 4
          %s264 = int_to_ptr.hbm [resolvable:$true] %s263
          %s265 = sshll.u32 %s256, 4
          %s266 = int_to_ptr.vmem [resolvable:$true] %s265
          %271 = dma.hbm_to_vmem [thread:$0]  %s264, 8192, %s266, %s253, 128, 128, 8
        $region32: #{tpu_custom_call.1} parent=23 // pred_fallthru
          _
        // Predicated region
        $region33: #{tpu_custom_call.1} parent=23 // pred_check
          %p272 = pneg %p145
        $region34: #{tpu_custom_call.1} parent=23 // pred_check_branch
          %274 = sbr.rel (%p272) target = $region36
        $region35: #{tpu_custom_call.1} parent=23 // pred_region
          %s275 = sand.u32 %s14, 1
          %s276 = scalar_lea.sflag [#allocation5], %s275
          %s277 = sand.u32 %s135, 1
          %s278 = smul.addr %s277, 512
          %s279 = scalar_lea.vmem [#allocation11], %s278
          %s280 = smul.u32 4, %s22
          %282 = vsyncadd %s276, 0
          %s283 = smul.addr %s280, 4
          %s284 = scalar_lea.hbm %s4, %s283
          %s285 = sshll.u32 %s284, 4
          %s286 = int_to_ptr.hbm [resolvable:$true] %s285
          %s287 = sshll.u32 %s279, 4
          %s288 = int_to_ptr.vmem [resolvable:$true] %s287
          %293 = dma.hbm_to_vmem [thread:$0]  %s286, 8192, %s288, %s276, 512, 256, 16
        $region36: #{tpu_custom_call.1} parent=23 // pred_fallthru
          _
      $region24: #{tpu_custom_call.1} parent=5 // pred_fallthru
        _
      %p294 = scmp.le.s32.totalorder 1, %s14
      %p295 = scmp.lt.s32.totalorder %s14, 3
      %p296 = pnand %p294, %p295
      %p297 = pneg %p296
      // Predicated region
      $region37: #{tpu_custom_call.1} parent=5 // pred_check
        _
      $region38: #{tpu_custom_call.1} parent=5 // pred_check_branch
        %299 = sbr.rel (%p296) target = $region40
      $region39: #{tpu_custom_call.1} parent=5 // pred_region
        %s300 = ssub.s32 %s14, 1
        // Predicated region
        $region41: #{tpu_custom_call.1} parent=39 // pred_check
          %p301 = pneg %p52
        $region42: #{tpu_custom_call.1} parent=39 // pred_check_branch
          %303 = sbr.rel (%p301) target = $region44
        $region43: #{tpu_custom_call.1} parent=39 // pred_region
          %305 = dma.done [#allocation5], 4608
        $region44: #{tpu_custom_call.1} parent=39 // pred_fallthru
          _
        // Predicated region
        $region45: #{tpu_custom_call.1} parent=39 // pred_check
          %p306 = pneg %p73
        $region46: #{tpu_custom_call.1} parent=39 // pred_check_branch
          %308 = sbr.rel (%p306) target = $region48
        $region47: #{tpu_custom_call.1} parent=39 // pred_region
          %310 = dma.done [#allocation8], 32
        $region48: #{tpu_custom_call.1} parent=39 // pred_fallthru
          _
        %s311 = sand.u32 %s19, 1
        %s312 = scalar_lea.sflag [#allocation5], %s311
        %s313 = sand.u32 %s86, 1
        %s314 = smul.addr %s313, 512
        %s315 = scalar_lea.vmem [#allocation9], %s314
        // Predicated region
        $region49: #{tpu_custom_call.1} parent=39 // pred_check
          %p316 = pneg %p99
        $region50: #{tpu_custom_call.1} parent=39 // pred_check_branch
          %318 = sbr.rel (%p316) target = $region52
        $region51: #{tpu_custom_call.1} parent=39 // pred_region
          %320 = dma.done %s312, 8192
        $region52: #{tpu_custom_call.1} parent=39 // pred_fallthru
          _
        %s321 = sand.u32 %s19, 1
        %s322 = scalar_lea.sflag [#allocation5], %s321
        %s323 = sand.u32 %s112, 1
        %s324 = smul.addr %s323, 512
        %s325 = scalar_lea.vmem [#allocation10], %s324
        // Predicated region
        $region53: #{tpu_custom_call.1} parent=39 // pred_check
          %p326 = pneg %p125
        $region54: #{tpu_custom_call.1} parent=39 // pred_check_branch
          %328 = sbr.rel (%p326) target = $region56
        $region55: #{tpu_custom_call.1} parent=39 // pred_region
          %330 = dma.done %s322, 8192
        $region56: #{tpu_custom_call.1} parent=39 // pred_fallthru
          _
        %s331 = sand.u32 %s19, 1
        %s332 = scalar_lea.sflag [#allocation5], %s331
        %s333 = sand.u32 %s138, 1
        %s334 = smul.addr %s333, 512
        %s335 = scalar_lea.vmem [#allocation11], %s334
        // Predicated region
        $region57: #{tpu_custom_call.1} parent=39 // pred_check
          %p336 = pneg %p151
        $region58: #{tpu_custom_call.1} parent=39 // pred_check_branch
          %338 = sbr.rel (%p336) target = $region60
        $region59: #{tpu_custom_call.1} parent=39 // pred_region
          %340 = dma.done %s332, 8192
        $region60: #{tpu_custom_call.1} parent=39 // pred_fallthru
          _
        %p341 = pneg %p52
        %p342 = pneg %p49
        %p343 = pneg %p73
        %p344 = pneg %p70
        %s345 = sand.u32 %s19, 1
        %s346 = scalar_lea.sflag [#allocation5], %s345
        %s347 = sand.u32 %s86, 1
        %s348 = smul.addr %s347, 512
        %s349 = scalar_lea.vmem [#allocation9], %s348
        %p350 = pneg %p99
        %p351 = pneg %p96
        %s352 = sand.u32 %s19, 1
        %s353 = scalar_lea.sflag [#allocation5], %s352
        %s354 = sand.u32 %s112, 1
        %s355 = smul.addr %s354, 512
        %s356 = scalar_lea.vmem [#allocation10], %s355
        %p357 = pneg %p125
        %p358 = pneg %p122
        %s359 = sand.u32 %s19, 1
        %s360 = scalar_lea.sflag [#allocation5], %s359
        %s361 = sand.u32 %s138, 1
        %s362 = smul.addr %s361, 512
        %s363 = scalar_lea.vmem [#allocation11], %s362
        %p364 = pneg %p151
        %p365 = pneg %p148
        %p366 = pneg %p177
        %p367 = pneg %p174
        %s368 = smul.u32 18, %s23
        %s369 = smul.u32 64, %s24
        %s370 = smul.u32 64, %s24
        %s371 = smul.u32 4, %s24
        %s372 = smul.u32 18, %s23
        %p373 = scmp.eq.s32.totalorder %s24, 0
        // Predicated region
        $region61: #{tpu_custom_call.1} parent=39 // pred_check
          %p374 = pneg %p373
        $region62: #{tpu_custom_call.1} parent=39 // pred_check_branch
          %376 = sbr.rel (%p374) target = $region64
        $region63: #{tpu_custom_call.1} parent=39 // pred_region
          %v377 = vld [vmem:[#allocation4] sm:$0xff]
          %v378 = vld [vmem:[#allocation4 + $0x8] sm:$0xff]
          %v379 = vld [vmem:[#allocation4 + $0x10] sm:$0xff]
          %v380 = vld [vmem:[#allocation4 + $0x18] sm:$0xff]
          %v381 = vld [vmem:[#allocation4 + $0x20] sm:$0xff]
          %v382 = vld [vmem:[#allocation4 + $0x28] sm:$0xff]
          %v383 = vld [vmem:[#allocation4 + $0x30] sm:$0xff]
          %v384 = vld [vmem:[#allocation4 + $0x38] sm:$0xff]
          %v385 = vld [vmem:[#allocation4 + $0x40] sm:$0xff]
          %v386 = vld [vmem:[#allocation4 + $0x48] sm:$0xff]
          %v387 = vld [vmem:[#allocation4 + $0x50] sm:$0xff]
          %v388 = vld [vmem:[#allocation4 + $0x58] sm:$0xff]
          %v389 = vld [vmem:[#allocation4 + $0x60] sm:$0xff]
          %v390 = vld [vmem:[#allocation4 + $0x68] sm:$0xff]
          %v391 = vld [vmem:[#allocation4 + $0x70] sm:$0xff]
          %v392 = vld [vmem:[#allocation4 + $0x78] sm:$0xff]
          %v393 = vld [vmem:[#allocation4 + $0x80] sm:$0xff]
          %v394 = vld [vmem:[#allocation4 + $0x88] sm:$0xff]
          %v395 = vld [vmem:[#allocation4 + $0x90] sm:$0xff]
          %v396 = vld [vmem:[#allocation4 + $0x98] sm:$0xff]
          %v397 = vld [vmem:[#allocation4 + $0xa0] sm:$0xff]
          %v398 = vld [vmem:[#allocation4 + $0xa8] sm:$0xff]
          %v399 = vld [vmem:[#allocation4 + $0xb0] sm:$0xff]
          %v400 = vld [vmem:[#allocation4 + $0xb8] sm:$0xff]
          %v401 = vld [vmem:[#allocation4 + $0xc0] sm:$0xff]
          %v402 = vld [vmem:[#allocation4 + $0xc8] sm:$0xff]
          %v403 = vld [vmem:[#allocation4 + $0xd0] sm:$0xff]
          %v404 = vld [vmem:[#allocation4 + $0xd8] sm:$0xff]
          %v405 = vld [vmem:[#allocation4 + $0xe0] sm:$0xff]
          %v406 = vld [vmem:[#allocation4 + $0xe8] sm:$0xff]
          %v407 = vld [vmem:[#allocation4 + $0xf0] sm:$0xff]
          %v408 = vld [vmem:[#allocation4 + $0xf8] sm:$0xff]
          %v409 = vld [vmem:[#allocation4 + $0x100] sm:$0xff]
          %v410 = vld [vmem:[#allocation4 + $0x108] sm:$0xff]
          %v411 = vld [vmem:[#allocation4 + $0x110] sm:$0xff]
          %v412 = vld [vmem:[#allocation4 + $0x118] sm:$0xff]
          %v413 = vmul.f32 %v377, %v377
          %v414 = vmul.f32 %v378, %v378
          %v415 = vmul.f32 %v379, %v379
          %v416 = vmul.f32 %v380, %v380
          %v417 = vmul.f32 %v381, %v381
          %v418 = vmul.f32 %v382, %v382
          %v419 = vmul.f32 %v383, %v383
          %v420 = vmul.f32 %v384, %v384
          %v421 = vmul.f32 %v385, %v385
          %v422 = vmul.f32 %v386, %v386
          %v423 = vmul.f32 %v387, %v387
          %v424 = vmul.f32 %v388, %v388
          %v425 = vmul.f32 %v389, %v389
          %v426 = vmul.f32 %v390, %v390
          %v427 = vmul.f32 %v391, %v391
          %v428 = vmul.f32 %v392, %v392
          %v429 = vmul.f32 %v393, %v393
          %v430 = vmul.f32 %v394, %v394
          %v431 = vmul.f32 %v395, %v395
          %v432 = vmul.f32 %v396, %v396
          %v433 = vmul.f32 %v397, %v397
          %v434 = vmul.f32 %v398, %v398
          %v435 = vmul.f32 %v399, %v399
          %v436 = vmul.f32 %v400, %v400
          %v437 = vmul.f32 %v401, %v401
          %v438 = vmul.f32 %v402, %v402
          %v439 = vmul.f32 %v403, %v403
          %v440 = vmul.f32 %v404, %v404
          %v441 = vmul.f32 %v405, %v405
          %v442 = vmul.f32 %v406, %v406
          %v443 = vmul.f32 %v407, %v407
          %v444 = vmul.f32 %v408, %v408
          %v445 = vmul.f32 %v409, %v409
          %v446 = vmul.f32 %v410, %v410
          %v447 = vmul.f32 %v411, %v411
          %v448 = vmul.f32 %v412, %v412
          %v449 = vadd.f32 %v413, %v414
          %450 = vadd.xlane.f32.xlu0 %v449
          %v451 = vpop.xlane.xlu0 %450
          %v452 = vadd.f32 %v415, %v416
          %453 = vadd.xlane.f32.xlu0 %v452
          %v454 = vpop.xlane.xlu0 %453
          %v455 = vadd.f32 %v417, %v418
          %456 = vadd.xlane.f32.xlu0 %v455
          %v457 = vpop.xlane.xlu0 %456
          %v458 = vadd.f32 %v419, %v420
          %459 = vadd.xlane.f32.xlu0 %v458
          %v460 = vpop.xlane.xlu0 %459
          %v461 = vadd.f32 %v421, %v422
          %462 = vadd.xlane.f32.xlu0 %v461
          %v463 = vpop.xlane.xlu0 %462
          %v464 = vadd.f32 %v423, %v424
          %465 = vadd.xlane.f32.xlu0 %v464
          %v466 = vpop.xlane.xlu0 %465
          %v467 = vadd.f32 %v425, %v426
          %468 = vadd.xlane.f32.xlu0 %v467
          %v469 = vpop.xlane.xlu0 %468
          %v470 = vadd.f32 %v427, %v428
          %471 = vadd.xlane.f32.xlu0 %v470
          %v472 = vpop.xlane.xlu0 %471
          %v473 = vadd.f32 %v429, %v430
          %474 = vadd.xlane.f32.xlu0 %v473
          %v475 = vpop.xlane.xlu0 %474
          %v476 = vadd.f32 %v431, %v432
          %477 = vadd.xlane.f32.xlu0 %v476
          %v478 = vpop.xlane.xlu0 %477
          %v479 = vadd.f32 %v433, %v434
          %480 = vadd.xlane.f32.xlu0 %v479
          %v481 = vpop.xlane.xlu0 %480
          %v482 = vadd.f32 %v435, %v436
          %483 = vadd.xlane.f32.xlu0 %v482
          %v484 = vpop.xlane.xlu0 %483
          %v485 = vadd.f32 %v437, %v438
          %486 = vadd.xlane.f32.xlu0 %v485
          %v487 = vpop.xlane.xlu0 %486
          %v488 = vadd.f32 %v439, %v440
          %489 = vadd.xlane.f32.xlu0 %v488
          %v490 = vpop.xlane.xlu0 %489
          %v491 = vadd.f32 %v441, %v442
          %492 = vadd.xlane.f32.xlu0 %v491
          %v493 = vpop.xlane.xlu0 %492
          %v494 = vadd.f32 %v443, %v444
          %495 = vadd.xlane.f32.xlu0 %v494
          %v496 = vpop.xlane.xlu0 %495
          %v497 = vadd.f32 %v445, %v446
          %498 = vadd.xlane.f32.xlu0 %v497
          %v499 = vpop.xlane.xlu0 %498
          %v500 = vadd.f32 %v447, %v448
          %501 = vadd.xlane.f32.xlu0 %v500
          %v502 = vpop.xlane.xlu0 %501
          %v503 = vrcp.pop 256.0
          %v504 = vmul.f32 256.0, %v503
          %v505 = vsub.f32 1.0, %v504
          %v506 = vmul.f32 %v503, %v505
          %v507 = vadd.f32 %v503, %v506
          %vm508 = vweird.f32 %v503
          %v509 = vsel %vm508, %v503, %v507
          %v510 = vmul.f32 %v451, %v509
          %v511 = vmul.f32 %v454, %v509
          %v512 = vmul.f32 %v457, %v509
          %v513 = vmul.f32 %v460, %v509
          %v514 = vmul.f32 %v463, %v509
          %v515 = vmul.f32 %v466, %v509
          %v516 = vmul.f32 %v469, %v509
          %v517 = vmul.f32 %v472, %v509
          %v518 = vmul.f32 %v475, %v509
          %v519 = vmul.f32 %v478, %v509
          %v520 = vmul.f32 %v481, %v509
          %v521 = vmul.f32 %v484, %v509
          %v522 = vmul.f32 %v487, %v509
          %v523 = vmul.f32 %v490, %v509
          %v524 = vmul.f32 %v493, %v509
          %v525 = vmul.f32 %v496, %v509
          %v526 = vmul.f32 %v499, %v509
          %v527 = vmul.f32 %v502, %v509
          %v528 = vadd.f32 %v510, 1e-06
          %v529 = vadd.f32 %v511, 1e-06
          %v530 = vadd.f32 %v512, 1e-06
          %v531 = vadd.f32 %v513, 1e-06
          %v532 = vadd.f32 %v514, 1e-06
          %v533 = vadd.f32 %v515, 1e-06
          %v534 = vadd.f32 %v516, 1e-06
          %v535 = vadd.f32 %v517, 1e-06
          %v536 = vadd.f32 %v518, 1e-06
          %v537 = vadd.f32 %v519, 1e-06
          %v538 = vadd.f32 %v520, 1e-06
          %v539 = vadd.f32 %v521, 1e-06
          %v540 = vadd.f32 %v522, 1e-06
          %v541 = vadd.f32 %v523, 1e-06
          %v542 = vadd.f32 %v524, 1e-06
          %v543 = vadd.f32 %v525, 1e-06
          %v544 = vadd.f32 %v526, 1e-06
          %v545 = vadd.f32 %v527, 1e-06
          %v546 = vrsqrt.pop %v528
          %v547 = vmul.f32 %v546, %v528
          %v548 = vmul.f32 %v547, %v546
          %v549 = vmul.f32 0.5, %v548
          %v550 = vsub.f32 1.5, %v549
          %v551 = vmul.f32 %v546, %v550
          %vm552 = vweird.f32 %v528
          %vm553 = vweird.f32 %v546
          %vm554 = vmor %vm552, %vm553
          %v555 = vsel %vm554, %v546, %v551
          %v556 = vrsqrt.pop %v529
          %v557 = vmul.f32 %v556, %v529
          %v558 = vmul.f32 %v557, %v556
          %v559 = vmul.f32 0.5, %v558
          %v560 = vsub.f32 1.5, %v559
          %v561 = vmul.f32 %v556, %v560
          %vm562 = vweird.f32 %v529
          %vm563 = vweird.f32 %v556
          %vm564 = vmor %vm562, %vm563
          %v565 = vsel %vm564, %v556, %v561
          %v566 = vrsqrt.pop %v530
          %v567 = vmul.f32 %v566, %v530
          %v568 = vmul.f32 %v567, %v566
          %v569 = vmul.f32 0.5, %v568
          %v570 = vsub.f32 1.5, %v569
          %v571 = vmul.f32 %v566, %v570
          %vm572 = vweird.f32 %v530
          %vm573 = vweird.f32 %v566
          %vm574 = vmor %vm572, %vm573
          %v575 = vsel %vm574, %v566, %v571
          %v576 = vrsqrt.pop %v531
          %v577 = vmul.f32 %v576, %v531
          %v578 = vmul.f32 %v577, %v576
          %v579 = vmul.f32 0.5, %v578
          %v580 = vsub.f32 1.5, %v579
          %v581 = vmul.f32 %v576, %v580
          %vm582 = vweird.f32 %v531
          %vm583 = vweird.f32 %v576
          %vm584 = vmor %vm582, %vm583
          %v585 = vsel %vm584, %v576, %v581
          %v586 = vrsqrt.pop %v532
          %v587 = vmul.f32 %v586, %v532
          %v588 = vmul.f32 %v587, %v586
          %v589 = vmul.f32 0.5, %v588
          %v590 = vsub.f32 1.5, %v589
          %v591 = vmul.f32 %v586, %v590
          %vm592 = vweird.f32 %v532
          %vm593 = vweird.f32 %v586
          %vm594 = vmor %vm592, %vm593
          %v595 = vsel %vm594, %v586, %v591
          %v596 = vrsqrt.pop %v533
          %v597 = vmul.f32 %v596, %v533
          %v598 = vmul.f32 %v597, %v596
          %v599 = vmul.f32 0.5, %v598
          %v600 = vsub.f32 1.5, %v599
          %v601 = vmul.f32 %v596, %v600
          %vm602 = vweird.f32 %v533
          %vm603 = vweird.f32 %v596
          %vm604 = vmor %vm602, %vm603
          %v605 = vsel %vm604, %v596, %v601
          %v606 = vrsqrt.pop %v534
          %v607 = vmul.f32 %v606, %v534
          %v608 = vmul.f32 %v607, %v606
          %v609 = vmul.f32 0.5, %v608
          %v610 = vsub.f32 1.5, %v609
          %v611 = vmul.f32 %v606, %v610
          %vm612 = vweird.f32 %v534
          %vm613 = vweird.f32 %v606
          %vm614 = vmor %vm612, %vm613
          %v615 = vsel %vm614, %v606, %v611
          %v616 = vrsqrt.pop %v535
          %v617 = vmul.f32 %v616, %v535
          %v618 = vmul.f32 %v617, %v616
          %v619 = vmul.f32 0.5, %v618
          %v620 = vsub.f32 1.5, %v619
          %v621 = vmul.f32 %v616, %v620
          %vm622 = vweird.f32 %v535
          %vm623 = vweird.f32 %v616
          %vm624 = vmor %vm622, %vm623
          %v625 = vsel %vm624, %v616, %v621
          %v626 = vrsqrt.pop %v536
          %v627 = vmul.f32 %v626, %v536
          %v628 = vmul.f32 %v627, %v626
          %v629 = vmul.f32 0.5, %v628
          %v630 = vsub.f32 1.5, %v629
          %v631 = vmul.f32 %v626, %v630
          %vm632 = vweird.f32 %v536
          %vm633 = vweird.f32 %v626
          %vm634 = vmor %vm632, %vm633
          %v635 = vsel %vm634, %v626, %v631
          %v636 = vrsqrt.pop %v537
          %v637 = vmul.f32 %v636, %v537
          %v638 = vmul.f32 %v637, %v636
          %v639 = vmul.f32 0.5, %v638
          %v640 = vsub.f32 1.5, %v639
          %v641 = vmul.f32 %v636, %v640
          %vm642 = vweird.f32 %v537
          %vm643 = vweird.f32 %v636
          %vm644 = vmor %vm642, %vm643
          %v645 = vsel %vm644, %v636, %v641
          %v646 = vrsqrt.pop %v538
          %v647 = vmul.f32 %v646, %v538
          %v648 = vmul.f32 %v647, %v646
          %v649 = vmul.f32 0.5, %v648
          %v650 = vsub.f32 1.5, %v649
          %v651 = vmul.f32 %v646, %v650
          %vm652 = vweird.f32 %v538
          %vm653 = vweird.f32 %v646
          %vm654 = vmor %vm652, %vm653
          %v655 = vsel %vm654, %v646, %v651
          %v656 = vrsqrt.pop %v539
          %v657 = vmul.f32 %v656, %v539
          %v658 = vmul.f32 %v657, %v656
          %v659 = vmul.f32 0.5, %v658
          %v660 = vsub.f32 1.5, %v659
          %v661 = vmul.f32 %v656, %v660
          %vm662 = vweird.f32 %v539
          %vm663 = vweird.f32 %v656
          %vm664 = vmor %vm662, %vm663
          %v665 = vsel %vm664, %v656, %v661
          %v666 = vrsqrt.pop %v540
          %v667 = vmul.f32 %v666, %v540
          %v668 = vmul.f32 %v667, %v666
          %v669 = vmul.f32 0.5, %v668
          %v670 = vsub.f32 1.5, %v669
          %v671 = vmul.f32 %v666, %v670
          %vm672 = vweird.f32 %v540
          %vm673 = vweird.f32 %v666
          %vm674 = vmor %vm672, %vm673
          %v675 = vsel %vm674, %v666, %v671
          %v676 = vrsqrt.pop %v541
          %v677 = vmul.f32 %v676, %v541
          %v678 = vmul.f32 %v677, %v676
          %v679 = vmul.f32 0.5, %v678
          %v680 = vsub.f32 1.5, %v679
          %v681 = vmul.f32 %v676, %v680
          %vm682 = vweird.f32 %v541
          %vm683 = vweird.f32 %v676
          %vm684 = vmor %vm682, %vm683
          %v685 = vsel %vm684, %v676, %v681
          %v686 = vrsqrt.pop %v542
          %v687 = vmul.f32 %v686, %v542
          %v688 = vmul.f32 %v687, %v686
          %v689 = vmul.f32 0.5, %v688
          %v690 = vsub.f32 1.5, %v689
          %v691 = vmul.f32 %v686, %v690
          %vm692 = vweird.f32 %v542
          %vm693 = vweird.f32 %v686
          %vm694 = vmor %vm692, %vm693
          %v695 = vsel %vm694, %v686, %v691
          %v696 = vrsqrt.pop %v543
          %v697 = vmul.f32 %v696, %v543
          %v698 = vmul.f32 %v697, %v696
          %v699 = vmul.f32 0.5, %v698
          %v700 = vsub.f32 1.5, %v699
          %v701 = vmul.f32 %v696, %v700
          %vm702 = vweird.f32 %v543
          %vm703 = vweird.f32 %v696
          %vm704 = vmor %vm702, %vm703
          %v705 = vsel %vm704, %v696, %v701
          %v706 = vrsqrt.pop %v544
          %v707 = vmul.f32 %v706, %v544
          %v708 = vmul.f32 %v707, %v706
          %v709 = vmul.f32 0.5, %v708
          %v710 = vsub.f32 1.5, %v709
          %v711 = vmul.f32 %v706, %v710
          %vm712 = vweird.f32 %v544
          %vm713 = vweird.f32 %v706
          %vm714 = vmor %vm712, %vm713
          %v715 = vsel %vm714, %v706, %v711
          %v716 = vrsqrt.pop %v545
          %v717 = vmul.f32 %v716, %v545
          %v718 = vmul.f32 %v717, %v716
          %v719 = vmul.f32 0.5, %v718
          %v720 = vsub.f32 1.5, %v719
          %v721 = vmul.f32 %v716, %v720
          %vm722 = vweird.f32 %v545
          %vm723 = vweird.f32 %v716
          %vm724 = vmor %vm722, %vm723
          %v725 = vsel %vm724, %v716, %v721
          %v726 = vmul.f32 %v377, %v555
          %v727 = vmul.f32 %v378, %v555
          %v728 = vmul.f32 %v379, %v565
          %v729 = vmul.f32 %v380, %v565
          %v730 = vmul.f32 %v381, %v575
          %v731 = vmul.f32 %v382, %v575
          %v732 = vmul.f32 %v383, %v585
          %v733 = vmul.f32 %v384, %v585
          %v734 = vmul.f32 %v385, %v595
          %v735 = vmul.f32 %v386, %v595
          %v736 = vmul.f32 %v387, %v605
          %v737 = vmul.f32 %v388, %v605
          %v738 = vmul.f32 %v389, %v615
          %v739 = vmul.f32 %v390, %v615
          %v740 = vmul.f32 %v391, %v625
          %v741 = vmul.f32 %v392, %v625
          %v742 = vmul.f32 %v393, %v635
          %v743 = vmul.f32 %v394, %v635
          %v744 = vmul.f32 %v395, %v645
          %v745 = vmul.f32 %v396, %v645
          %v746 = vmul.f32 %v397, %v655
          %v747 = vmul.f32 %v398, %v655
          %v748 = vmul.f32 %v399, %v665
          %v749 = vmul.f32 %v400, %v665
          %v750 = vmul.f32 %v401, %v675
          %v751 = vmul.f32 %v402, %v675
          %v752 = vmul.f32 %v403, %v685
          %v753 = vmul.f32 %v404, %v685
          %v754 = vmul.f32 %v405, %v695
          %v755 = vmul.f32 %v406, %v695
          %v756 = vmul.f32 %v407, %v705
          %v757 = vmul.f32 %v408, %v705
          %v758 = vmul.f32 %v409, %v715
          %v759 = vmul.f32 %v410, %v715
          %v760 = vmul.f32 %v411, %v725
          %v761 = vmul.f32 %v412, %v725
          %v762 = vld [vmem:[#allocation7] sm:$0x3]
          %v764 = vperm.slane %v762, 0
          %v765 = vperm.slane %v762, 1
          %v768 = vmul.f32 %v726, %v764
          %v769 = vmul.f32 %v727, %v765
          %v770 = vmul.f32 %v728, %v764
          %v771 = vmul.f32 %v729, %v765
          %v772 = vmul.f32 %v730, %v764
          %v773 = vmul.f32 %v731, %v765
          %v774 = vmul.f32 %v732, %v764
          %v775 = vmul.f32 %v733, %v765
          %v776 = vmul.f32 %v734, %v764
          %v777 = vmul.f32 %v735, %v765
          %v778 = vmul.f32 %v736, %v764
          %v779 = vmul.f32 %v737, %v765
          %v780 = vmul.f32 %v738, %v764
          %v781 = vmul.f32 %v739, %v765
          %v782 = vmul.f32 %v740, %v764
          %v783 = vmul.f32 %v741, %v765
          %v784 = vmul.f32 %v742, %v764
          %v785 = vmul.f32 %v743, %v765
          %v786 = vmul.f32 %v744, %v764
          %v787 = vmul.f32 %v745, %v765
          %v788 = vmul.f32 %v746, %v764
          %v789 = vmul.f32 %v747, %v765
          %v790 = vmul.f32 %v748, %v764
          %v791 = vmul.f32 %v749, %v765
          %v792 = vmul.f32 %v750, %v764
          %v793 = vmul.f32 %v751, %v765
          %v794 = vmul.f32 %v752, %v764
          %v795 = vmul.f32 %v753, %v765
          %v796 = vmul.f32 %v754, %v764
          %v797 = vmul.f32 %v755, %v765
          %v798 = vmul.f32 %v756, %v764
          %v799 = vmul.f32 %v757, %v765
          %v800 = vmul.f32 %v758, %v764
          %v801 = vmul.f32 %v759, %v765
          %v802 = vmul.f32 %v760, %v764
          %v803 = vmul.f32 %v761, %v765
          %v804 = vpack.c.bf16 %v769, %v768
          %v805 = vpack.c.bf16 %v771, %v770
          %v806 = vpack.c.bf16 %v773, %v772
          %v807 = vpack.c.bf16 %v775, %v774
          %v808 = vpack.c.bf16 %v777, %v776
          %v809 = vpack.c.bf16 %v779, %v778
          %v810 = vpack.c.bf16 %v781, %v780
          %v811 = vpack.c.bf16 %v783, %v782
          %v812 = vpack.c.bf16 %v785, %v784
          %v813 = vpack.c.bf16 %v787, %v786
          %v814 = vpack.c.bf16 %v789, %v788
          %v815 = vpack.c.bf16 %v791, %v790
          %v816 = vpack.c.bf16 %v793, %v792
          %v817 = vpack.c.bf16 %v795, %v794
          %v818 = vpack.c.bf16 %v797, %v796
          %v819 = vpack.c.bf16 %v799, %v798
          %v820 = vpack.c.bf16 %v801, %v800
          %v821 = vpack.c.bf16 %v803, %v802
          %822 = vst [vmem:[#allocation2] sm:$0xff] %v804
          %823 = vst [vmem:[#allocation2 + $0x8] sm:$0xff] %v805
          %824 = vst [vmem:[#allocation2 + $0x10] sm:$0xff] %v806
          %825 = vst [vmem:[#allocation2 + $0x18] sm:$0xff] %v807
          %826 = vst [vmem:[#allocation2 + $0x20] sm:$0xff] %v808
          %827 = vst [vmem:[#allocation2 + $0x28] sm:$0xff] %v809
          %828 = vst [vmem:[#allocation2 + $0x30] sm:$0xff] %v810
          %829 = vst [vmem:[#allocation2 + $0x38] sm:$0xff] %v811
          %830 = vst [vmem:[#allocation2 + $0x40] sm:$0xff] %v812
          %831 = vst [vmem:[#allocation2 + $0x48] sm:$0xff] %v813
          %832 = vst [vmem:[#allocation2 + $0x50] sm:$0xff] %v814
          %833 = vst [vmem:[#allocation2 + $0x58] sm:$0xff] %v815
          %834 = vst [vmem:[#allocation2 + $0x60] sm:$0xff] %v816
          %835 = vst [vmem:[#allocation2 + $0x68] sm:$0xff] %v817
          %836 = vst [vmem:[#allocation2 + $0x70] sm:$0xff] %v818
          %837 = vst [vmem:[#allocation2 + $0x78] sm:$0xff] %v819
          %838 = vst [vmem:[#allocation2 + $0x80] sm:$0xff] %v820
          %839 = vst [vmem:[#allocation2 + $0x88] sm:$0xff] %v821
          %840 = vst [vmem:[#allocation3] sm:$0xff] 0.0
          %841 = vst [vmem:[#allocation3 + $0x8] sm:$0xff] 0.0
          %842 = vst [vmem:[#allocation3 + $0x10] sm:$0xff] 0.0
          %843 = vst [vmem:[#allocation3 + $0x18] sm:$0xff] 0.0
          %844 = vst [vmem:[#allocation3 + $0x20] sm:$0xff] 0.0
          %845 = vst [vmem:[#allocation3 + $0x28] sm:$0xff] 0.0
          %846 = vst [vmem:[#allocation3 + $0x30] sm:$0xff] 0.0
          %847 = vst [vmem:[#allocation3 + $0x38] sm:$0xff] 0.0
          %848 = vst [vmem:[#allocation3 + $0x40] sm:$0xff] 0.0
          %849 = vst [vmem:[#allocation3 + $0x48] sm:$0xff] 0.0
          %850 = vst [vmem:[#allocation3 + $0x50] sm:$0xff] 0.0
          %851 = vst [vmem:[#allocation3 + $0x58] sm:$0xff] 0.0
          %852 = vst [vmem:[#allocation3 + $0x60] sm:$0xff] 0.0
          %853 = vst [vmem:[#allocation3 + $0x68] sm:$0xff] 0.0
          %854 = vst [vmem:[#allocation3 + $0x70] sm:$0xff] 0.0
          %855 = vst [vmem:[#allocation3 + $0x78] sm:$0xff] 0.0
          %856 = vst [vmem:[#allocation3 + $0x80] sm:$0xff] 0.0
          %857 = vst [vmem:[#allocation3 + $0x88] sm:$0xff] 0.0
          %858 = vst [vmem:[#allocation3 + $0x90] sm:$0xff] 0.0
          %859 = vst [vmem:[#allocation3 + $0x98] sm:$0xff] 0.0
          %860 = vst [vmem:[#allocation3 + $0xa0] sm:$0xff] 0.0
          %861 = vst [vmem:[#allocation3 + $0xa8] sm:$0xff] 0.0
          %862 = vst [vmem:[#allocation3 + $0xb0] sm:$0xff] 0.0
          %863 = vst [vmem:[#allocation3 + $0xb8] sm:$0xff] 0.0
          %864 = vst [vmem:[#allocation3 + $0xc0] sm:$0xff] 0.0
          %865 = vst [vmem:[#allocation3 + $0xc8] sm:$0xff] 0.0
          %866 = vst [vmem:[#allocation3 + $0xd0] sm:$0xff] 0.0
          %867 = vst [vmem:[#allocation3 + $0xd8] sm:$0xff] 0.0
          %868 = vst [vmem:[#allocation3 + $0xe0] sm:$0xff] 0.0
          %869 = vst [vmem:[#allocation3 + $0xe8] sm:$0xff] 0.0
          %870 = vst [vmem:[#allocation3 + $0xf0] sm:$0xff] 0.0
          %871 = vst [vmem:[#allocation3 + $0xf8] sm:$0xff] 0.0
          %872 = vst [vmem:[#allocation3 + $0x100] sm:$0xff] 0.0
          %873 = vst [vmem:[#allocation3 + $0x108] sm:$0xff] 0.0
          %874 = vst [vmem:[#allocation3 + $0x110] sm:$0xff] 0.0
          %875 = vst [vmem:[#allocation3 + $0x118] sm:$0xff] 0.0
        $region64: #{tpu_custom_call.1} parent=39 // pred_fallthru
          _
        %v876 = vld [vmem:[#allocation2] sm:$0xff]
        %v877 = vld [vmem:[#allocation2 + $0x8] sm:$0xff]
        %v878 = vld [vmem:[#allocation2 + $0x10] sm:$0xff]
        %v879 = vld [vmem:[#allocation2 + $0x18] sm:$0xff]
        %v880 = vld [vmem:[#allocation2 + $0x20] sm:$0xff]
        %v881 = vld [vmem:[#allocation2 + $0x28] sm:$0xff]
        %v882 = vld [vmem:[#allocation2 + $0x30] sm:$0xff]
        %v883 = vld [vmem:[#allocation2 + $0x38] sm:$0xff]
        %v884 = vld [vmem:[#allocation2 + $0x40] sm:$0xff]
        %v885 = vld [vmem:[#allocation2 + $0x48] sm:$0xff]
        %v886 = vld [vmem:[#allocation2 + $0x50] sm:$0xff]
        %v887 = vld [vmem:[#allocation2 + $0x58] sm:$0xff]
        %v888 = vld [vmem:[#allocation2 + $0x60] sm:$0xff]
        %v889 = vld [vmem:[#allocation2 + $0x68] sm:$0xff]
        %v890 = vld [vmem:[#allocation2 + $0x70] sm:$0xff]
        %v891 = vld [vmem:[#allocation2 + $0x78] sm:$0xff]
        %v892 = vld [vmem:[#allocation2 + $0x80] sm:$0xff]
        %v893 = vld [vmem:[#allocation2 + $0x88] sm:$0xff]
        %v894 = vld [vmem:[%s315] sm:$0xff]
        %v895 = vld [vmem:[%s315 + $0x8] sm:$0xff]
        %v896 = vld [vmem:[%s315 + $0x10] sm:$0xff]
        %v897 = vld [vmem:[%s315 + $0x18] sm:$0xff]
        %v898 = vld [vmem:[%s315 + $0x20] sm:$0xff]
        %v899 = vld [vmem:[%s315 + $0x28] sm:$0xff]
        %v900 = vld [vmem:[%s315 + $0x30] sm:$0xff]
        %v901 = vld [vmem:[%s315 + $0x38] sm:$0xff]
        %v902 = vld [vmem:[%s315 + $0x40] sm:$0xff]
        %v903 = vld [vmem:[%s315 + $0x48] sm:$0xff]
        %v904 = vld [vmem:[%s315 + $0x50] sm:$0xff]
        %v905 = vld [vmem:[%s315 + $0x58] sm:$0xff]
        %v906 = vld [vmem:[%s315 + $0x60] sm:$0xff]
        %v907 = vld [vmem:[%s315 + $0x68] sm:$0xff]
        %v908 = vld [vmem:[%s315 + $0x70] sm:$0xff]
        %v909 = vld [vmem:[%s315 + $0x78] sm:$0xff]
        %v910 = vld [vmem:[%s315 + $0x80] sm:$0xff]
        %v911 = vld [vmem:[%s315 + $0x88] sm:$0xff]
        %v912 = vld [vmem:[%s315 + $0x90] sm:$0xff]
        %v913 = vld [vmem:[%s315 + $0x98] sm:$0xff]
        %v914 = vld [vmem:[%s315 + $0xa0] sm:$0xff]
        %v915 = vld [vmem:[%s315 + $0xa8] sm:$0xff]
        %v916 = vld [vmem:[%s315 + $0xb0] sm:$0xff]
        %v917 = vld [vmem:[%s315 + $0xb8] sm:$0xff]
        %v918 = vld [vmem:[%s315 + $0xc0] sm:$0xff]
        %v919 = vld [vmem:[%s315 + $0xc8] sm:$0xff]
        %v920 = vld [vmem:[%s315 + $0xd0] sm:$0xff]
        %v921 = vld [vmem:[%s315 + $0xd8] sm:$0xff]
        %v922 = vld [vmem:[%s315 + $0xe0] sm:$0xff]
        %v923 = vld [vmem:[%s315 + $0xe8] sm:$0xff]
        %v924 = vld [vmem:[%s315 + $0xf0] sm:$0xff]
        %v925 = vld [vmem:[%s315 + $0xf8] sm:$0xff]
        %v926 = vld [vmem:[%s315 + $0x100] sm:$0xff]
        %v927 = vld [vmem:[%s315 + $0x108] sm:$0xff]
        %v928 = vld [vmem:[%s315 + $0x110] sm:$0xff]
        %v929 = vld [vmem:[%s315 + $0x118] sm:$0xff]
        %v930 = vld [vmem:[%s315 + $0x120] sm:$0xff]
        %v931 = vld [vmem:[%s315 + $0x128] sm:$0xff]
        %v932 = vld [vmem:[%s315 + $0x130] sm:$0xff]
        %v933 = vld [vmem:[%s315 + $0x138] sm:$0xff]
        %v934 = vld [vmem:[%s315 + $0x140] sm:$0xff]
        %v935 = vld [vmem:[%s315 + $0x148] sm:$0xff]
        %v936 = vld [vmem:[%s315 + $0x150] sm:$0xff]
        %v937 = vld [vmem:[%s315 + $0x158] sm:$0xff]
        %v938 = vld [vmem:[%s315 + $0x160] sm:$0xff]
        %v939 = vld [vmem:[%s315 + $0x168] sm:$0xff]
        %v940 = vld [vmem:[%s315 + $0x170] sm:$0xff]
        %v941 = vld [vmem:[%s315 + $0x178] sm:$0xff]
        %v942 = vld [vmem:[%s315 + $0x180] sm:$0xff]
        %v943 = vld [vmem:[%s315 + $0x188] sm:$0xff]
        %v944 = vld [vmem:[%s315 + $0x190] sm:$0xff]
        %v945 = vld [vmem:[%s315 + $0x198] sm:$0xff]
        %v946 = vld [vmem:[%s315 + $0x1a0] sm:$0xff]
        %v947 = vld [vmem:[%s315 + $0x1a8] sm:$0xff]
        %v948 = vld [vmem:[%s315 + $0x1b0] sm:$0xff]
        %v949 = vld [vmem:[%s315 + $0x1b8] sm:$0xff]
        %v950 = vld [vmem:[%s315 + $0x1c0] sm:$0xff]
        %v951 = vld [vmem:[%s315 + $0x1c8] sm:$0xff]
        %v952 = vld [vmem:[%s315 + $0x1d0] sm:$0xff]
        %v953 = vld [vmem:[%s315 + $0x1d8] sm:$0xff]
        %v954 = vld [vmem:[%s315 + $0x1e0] sm:$0xff]
        %v955 = vld [vmem:[%s315 + $0x1e8] sm:$0xff]
        %v956 = vld [vmem:[%s315 + $0x1f0] sm:$0xff]
        %v957 = vld [vmem:[%s315 + $0x1f8] sm:$0xff]
        %v976 = vunpack.c.l.b16 %v876
        %v977 = vunpack.c.h.b16 %v876
        %v978 = vunpack.c.l.b16 %v877
        %v979 = vunpack.c.h.b16 %v877
        %v980 = vunpack.c.l.b16 %v878
        %v981 = vunpack.c.h.b16 %v878
        %v982 = vunpack.c.l.b16 %v879
        %v983 = vunpack.c.h.b16 %v879
        %v984 = vunpack.c.l.b16 %v880
        %v985 = vunpack.c.h.b16 %v880
        %v986 = vunpack.c.l.b16 %v881
        %v987 = vunpack.c.h.b16 %v881
        %v988 = vunpack.c.l.b16 %v882
        %v989 = vunpack.c.h.b16 %v882
        %v990 = vunpack.c.l.b16 %v883
        %v991 = vunpack.c.h.b16 %v883
        %v992 = vunpack.c.l.b16 %v884
        %v993 = vunpack.c.h.b16 %v884
        %v994 = vunpack.c.l.b16 %v885
        %v995 = vunpack.c.h.b16 %v885
        %v996 = vunpack.c.l.b16 %v886
        %v997 = vunpack.c.h.b16 %v886
        %v998 = vunpack.c.l.b16 %v887
        %v999 = vunpack.c.h.b16 %v887
        %v1000 = vunpack.c.l.b16 %v888
        %v1001 = vunpack.c.h.b16 %v888
        %v1002 = vunpack.c.l.b16 %v889
        %v1003 = vunpack.c.h.b16 %v889
        %v1004 = vunpack.c.l.b16 %v890
        %v1005 = vunpack.c.h.b16 %v890
        %v1006 = vunpack.c.l.b16 %v891
        %v1007 = vunpack.c.h.b16 %v891
        %v1008 = vunpack.c.l.b16 %v892
        %v1009 = vunpack.c.h.b16 %v892
        %v1010 = vunpack.c.l.b16 %v893
        %v1011 = vunpack.c.h.b16 %v893
        %v1012 = vpack.c.b16 %v978, %v976
        %v1013 = vpack.c.b16 %v979, %v977
        %v1014 = vpack.c.b16 %v982, %v980
        %v1015 = vpack.c.b16 %v983, %v981
        %v1016 = vpack.c.b16 %v986, %v984
        %v1017 = vpack.c.b16 %v987, %v985
        %v1018 = vpack.c.b16 %v990, %v988
        %v1019 = vpack.c.b16 %v991, %v989
        %v1020 = vpack.c.b16 %v994, %v992
        %v1021 = vpack.c.b16 %v995, %v993
        %v1022 = vpack.c.b16 %v998, %v996
        %v1023 = vpack.c.b16 %v999, %v997
        %v1024 = vpack.c.b16 %v1002, %v1000
        %v1025 = vpack.c.b16 %v1003, %v1001
        %v1026 = vpack.c.b16 %v1006, %v1004
        %v1027 = vpack.c.b16 %v1007, %v1005
        %v1028 = vpack.c.b16 %v1010, %v1008
        %v1029 = vpack.c.b16 %v1011, %v1009
        %v1112 = vunpack.c.l.b16 %v894
        %v1113 = vunpack.c.h.b16 %v894
        %v1114 = vunpack.c.l.b16 %v895
        %v1115 = vunpack.c.h.b16 %v895
        %v1116 = vunpack.c.l.b16 %v896
        %v1117 = vunpack.c.h.b16 %v896
        %v1118 = vunpack.c.l.b16 %v897
        %v1119 = vunpack.c.h.b16 %v897
        %v1120 = vunpack.c.l.b16 %v898
        %v1121 = vunpack.c.h.b16 %v898
        %v1122 = vunpack.c.l.b16 %v899
        %v1123 = vunpack.c.h.b16 %v899
        %v1124 = vunpack.c.l.b16 %v900
        %v1125 = vunpack.c.h.b16 %v900
        %v1126 = vunpack.c.l.b16 %v901
        %v1127 = vunpack.c.h.b16 %v901
        %v1128 = vunpack.c.l.b16 %v902
        %v1129 = vunpack.c.h.b16 %v902
        %v1130 = vunpack.c.l.b16 %v903
        %v1131 = vunpack.c.h.b16 %v903
        %v1132 = vunpack.c.l.b16 %v904
        %v1133 = vunpack.c.h.b16 %v904
        %v1134 = vunpack.c.l.b16 %v905
        %v1135 = vunpack.c.h.b16 %v905
        %v1136 = vunpack.c.l.b16 %v906
        %v1137 = vunpack.c.h.b16 %v906
        %v1138 = vunpack.c.l.b16 %v907
        %v1139 = vunpack.c.h.b16 %v907
        %v1140 = vunpack.c.l.b16 %v908
        %v1141 = vunpack.c.h.b16 %v908
        %v1142 = vunpack.c.l.b16 %v909
        %v1143 = vunpack.c.h.b16 %v909
        %v1144 = vunpack.c.l.b16 %v910
        %v1145 = vunpack.c.h.b16 %v910
        %v1146 = vunpack.c.l.b16 %v911
        %v1147 = vunpack.c.h.b16 %v911
        %v1148 = vunpack.c.l.b16 %v912
        %v1149 = vunpack.c.h.b16 %v912
        %v1150 = vunpack.c.l.b16 %v913
        %v1151 = vunpack.c.h.b16 %v913
        %v1152 = vunpack.c.l.b16 %v914
        %v1153 = vunpack.c.h.b16 %v914
        %v1154 = vunpack.c.l.b16 %v915
        %v1155 = vunpack.c.h.b16 %v915
        %v1156 = vunpack.c.l.b16 %v916
        %v1157 = vunpack.c.h.b16 %v916
        %v1158 = vunpack.c.l.b16 %v917
        %v1159 = vunpack.c.h.b16 %v917
        %v1160 = vunpack.c.l.b16 %v918
        %v1161 = vunpack.c.h.b16 %v918
        %v1162 = vunpack.c.l.b16 %v919
        %v1163 = vunpack.c.h.b16 %v919
        %v1164 = vunpack.c.l.b16 %v920
        %v1165 = vunpack.c.h.b16 %v920
        %v1166 = vunpack.c.l.b16 %v921
        %v1167 = vunpack.c.h.b16 %v921
        %v1168 = vunpack.c.l.b16 %v922
        %v1169 = vunpack.c.h.b16 %v922
        %v1170 = vunpack.c.l.b16 %v923
        %v1171 = vunpack.c.h.b16 %v923
        %v1172 = vunpack.c.l.b16 %v924
        %v1173 = vunpack.c.h.b16 %v924
        %v1174 = vunpack.c.l.b16 %v925
        %v1175 = vunpack.c.h.b16 %v925
        %v1176 = vunpack.c.l.b16 %v926
        %v1177 = vunpack.c.h.b16 %v926
        %v1178 = vunpack.c.l.b16 %v927
        %v1179 = vunpack.c.h.b16 %v927
        %v1180 = vunpack.c.l.b16 %v928
        %v1181 = vunpack.c.h.b16 %v928
        %v1182 = vunpack.c.l.b16 %v929
        %v1183 = vunpack.c.h.b16 %v929
        %v1184 = vunpack.c.l.b16 %v930
        %v1185 = vunpack.c.h.b16 %v930
        %v1186 = vunpack.c.l.b16 %v931
        %v1187 = vunpack.c.h.b16 %v931
        %v1188 = vunpack.c.l.b16 %v932
        %v1189 = vunpack.c.h.b16 %v932
        %v1190 = vunpack.c.l.b16 %v933
        %v1191 = vunpack.c.h.b16 %v933
        %v1192 = vunpack.c.l.b16 %v934
        %v1193 = vunpack.c.h.b16 %v934
        %v1194 = vunpack.c.l.b16 %v935
        %v1195 = vunpack.c.h.b16 %v935
        %v1196 = vunpack.c.l.b16 %v936
        %v1197 = vunpack.c.h.b16 %v936
        %v1198 = vunpack.c.l.b16 %v937
        %v1199 = vunpack.c.h.b16 %v937
        %v1200 = vunpack.c.l.b16 %v938
        %v1201 = vunpack.c.h.b16 %v938
        %v1202 = vunpack.c.l.b16 %v939
        %v1203 = vunpack.c.h.b16 %v939
        %v1204 = vunpack.c.l.b16 %v940
        %v1205 = vunpack.c.h.b16 %v940
        %v1206 = vunpack.c.l.b16 %v941
        %v1207 = vunpack.c.h.b16 %v941
        %v1208 = vunpack.c.l.b16 %v942
        %v1209 = vunpack.c.h.b16 %v942
        %v1210 = vunpack.c.l.b16 %v943
        %v1211 = vunpack.c.h.b16 %v943
        %v1212 = vunpack.c.l.b16 %v944
        %v1213 = vunpack.c.h.b16 %v944
        %v1214 = vunpack.c.l.b16 %v945
        %v1215 = vunpack.c.h.b16 %v945
        %v1216 = vunpack.c.l.b16 %v946
        %v1217 = vunpack.c.h.b16 %v946
        %v1218 = vunpack.c.l.b16 %v947
        %v1219 = vunpack.c.h.b16 %v947
        %v1220 = vunpack.c.l.b16 %v948
        %v1221 = vunpack.c.h.b16 %v948
        %v1222 = vunpack.c.l.b16 %v949
        %v1223 = vunpack.c.h.b16 %v949
        %v1224 = vunpack.c.l.b16 %v950
        %v1225 = vunpack.c.h.b16 %v950
        %v1226 = vunpack.c.l.b16 %v951
        %v1227 = vunpack.c.h.b16 %v951
        %v1228 = vunpack.c.l.b16 %v952
        %v1229 = vunpack.c.h.b16 %v952
        %v1230 = vunpack.c.l.b16 %v953
        %v1231 = vunpack.c.h.b16 %v953
        %v1232 = vunpack.c.l.b16 %v954
        %v1233 = vunpack.c.h.b16 %v954
        %v1234 = vunpack.c.l.b16 %v955
        %v1235 = vunpack.c.h.b16 %v955
        %v1236 = vunpack.c.l.b16 %v956
        %v1237 = vunpack.c.h.b16 %v956
        %v1238 = vunpack.c.l.b16 %v957
        %v1239 = vunpack.c.h.b16 %v957
        %v1240 = vpack.c.b16 %v1114, %v1112
        %v1241 = vpack.c.b16 %v1115, %v1113
        %v1242 = vpack.c.b16 %v1118, %v1116
        %v1243 = vpack.c.b16 %v1119, %v1117
        %v1244 = vpack.c.b16 %v1122, %v1120
        %v1245 = vpack.c.b16 %v1123, %v1121
        %v1246 = vpack.c.b16 %v1126, %v1124
        %v1247 = vpack.c.b16 %v1127, %v1125
        %v1248 = vpack.c.b16 %v1130, %v1128
        %v1249 = vpack.c.b16 %v1131, %v1129
        %v1250 = vpack.c.b16 %v1134, %v1132
        %v1251 = vpack.c.b16 %v1135, %v1133
        %v1252 = vpack.c.b16 %v1138, %v1136
        %v1253 = vpack.c.b16 %v1139, %v1137
        %v1254 = vpack.c.b16 %v1142, %v1140
        %v1255 = vpack.c.b16 %v1143, %v1141
        %v1256 = vpack.c.b16 %v1146, %v1144
        %v1257 = vpack.c.b16 %v1147, %v1145
        %v1258 = vpack.c.b16 %v1150, %v1148
        %v1259 = vpack.c.b16 %v1151, %v1149
        %v1260 = vpack.c.b16 %v1154, %v1152
        %v1261 = vpack.c.b16 %v1155, %v1153
        %v1262 = vpack.c.b16 %v1158, %v1156
        %v1263 = vpack.c.b16 %v1159, %v1157
        %v1264 = vpack.c.b16 %v1162, %v1160
        %v1265 = vpack.c.b16 %v1163, %v1161
        %v1266 = vpack.c.b16 %v1166, %v1164
        %v1267 = vpack.c.b16 %v1167, %v1165
        %v1268 = vpack.c.b16 %v1170, %v1168
        %v1269 = vpack.c.b16 %v1171, %v1169
        %v1270 = vpack.c.b16 %v1174, %v1172
        %v1271 = vpack.c.b16 %v1175, %v1173
        %v1272 = vpack.c.b16 %v1178, %v1176
        %v1273 = vpack.c.b16 %v1179, %v1177
        %v1274 = vpack.c.b16 %v1182, %v1180
        %v1275 = vpack.c.b16 %v1183, %v1181
        %v1276 = vpack.c.b16 %v1186, %v1184
        %v1277 = vpack.c.b16 %v1187, %v1185
        %v1278 = vpack.c.b16 %v1190, %v1188
        %v1279 = vpack.c.b16 %v1191, %v1189
        %v1280 = vpack.c.b16 %v1194, %v1192
        %v1281 = vpack.c.b16 %v1195, %v1193
        %v1282 = vpack.c.b16 %v1198, %v1196
        %v1283 = vpack.c.b16 %v1199, %v1197
        %v1284 = vpack.c.b16 %v1202, %v1200
        %v1285 = vpack.c.b16 %v1203, %v1201
        %v1286 = vpack.c.b16 %v1206, %v1204
        %v1287 = vpack.c.b16 %v1207, %v1205
        %v1288 = vpack.c.b16 %v1210, %v1208
        %v1289 = vpack.c.b16 %v1211, %v1209
        %v1290 = vpack.c.b16 %v1214, %v1212
        %v1291 = vpack.c.b16 %v1215, %v1213
        %v1292 = vpack.c.b16 %v1218, %v1216
        %v1293 = vpack.c.b16 %v1219, %v1217
        %v1294 = vpack.c.b16 %v1222, %v1220
        %v1295 = vpack.c.b16 %v1223, %v1221
        %v1296 = vpack.c.b16 %v1226, %v1224
        %v1297 = vpack.c.b16 %v1227, %v1225
        %v1298 = vpack.c.b16 %v1230, %v1228
        %v1299 = vpack.c.b16 %v1231, %v1229
        %v1300 = vpack.c.b16 %v1234, %v1232
        %v1301 = vpack.c.b16 %v1235, %v1233
        %v1302 = vpack.c.b16 %v1238, %v1236
        %v1303 = vpack.c.b16 %v1239, %v1237
        %1368 = vmatpush.bf16.xpose.msra.mxu0 %v1254
        %1369 = vmatpush.bf16.xpose.msra.mxu0 %v1252
        %1370 = vmatpush.bf16.xpose.msra.mxu0 %v1250
        %1371 = vmatpush.bf16.xpose.msra.mxu0 %v1248
        %1372 = vmatpush.bf16.xpose.msra.mxu0 %v1246
        %1373 = vmatpush.bf16.xpose.msra.mxu0 %v1244
        %1374 = vmatpush.bf16.xpose.msra.mxu0 %v1242
        %1375 = vmatpush.bf16.xpose.msra.mxu0 %v1240
        %1376 = vmatmul.bf16.gmra.mxu0 %v1012
        %v1377 = vpop.f32.mrf.mxu0
        %v1378 = vadd.f32 0.0, %v1377
        %v1379 = vpop.f32.mrf.mxu0
        %v1380 = vadd.f32 0.0, %v1379
        %1381 = vmatmul.bf16.gmra.mxu0 %v1014
        %v1382 = vpop.f32.mrf.mxu0
        %v1383 = vadd.f32 0.0, %v1382
        %v1384 = vpop.f32.mrf.mxu0
        %v1385 = vadd.f32 0.0, %v1384
        %1386 = vmatmul.bf16.gmra.mxu0 %v1016
        %v1387 = vpop.f32.mrf.mxu0
        %v1388 = vadd.f32 0.0, %v1387
        %v1389 = vpop.f32.mrf.mxu0
        %v1390 = vadd.f32 0.0, %v1389
        %1391 = vmatmul.bf16.gmra.mxu0 %v1018
        %v1392 = vpop.f32.mrf.mxu0
        %v1393 = vadd.f32 0.0, %v1392
        %v1394 = vpop.f32.mrf.mxu0
        %v1395 = vadd.f32 0.0, %v1394
        %1396 = vmatmul.bf16.gmra.mxu0 %v1020
        %v1397 = vpop.f32.mrf.mxu0
        %v1398 = vadd.f32 0.0, %v1397
        %v1399 = vpop.f32.mrf.mxu0
        %v1400 = vadd.f32 0.0, %v1399
        %1401 = vmatmul.bf16.gmra.mxu0 %v1022
        %v1402 = vpop.f32.mrf.mxu0
        %v1403 = vadd.f32 0.0, %v1402
        %v1404 = vpop.f32.mrf.mxu0
        %v1405 = vadd.f32 0.0, %v1404
        %1406 = vmatmul.bf16.gmra.mxu0 %v1024
        %v1407 = vpop.f32.mrf.mxu0
        %v1408 = vadd.f32 0.0, %v1407
        %v1409 = vpop.f32.mrf.mxu0
        %v1410 = vadd.f32 0.0, %v1409
        %1411 = vmatmul.bf16.gmra.mxu0 %v1026
        %v1412 = vpop.f32.mrf.mxu0
        %v1413 = vadd.f32 0.0, %v1412
        %v1414 = vpop.f32.mrf.mxu0
        %v1415 = vadd.f32 0.0, %v1414
        %1416 = vmatmul.bf16.gmra.mxu0 %v1028
        %v1417 = vpop.f32.mrf.mxu0
        %v1418 = vadd.f32 0.0, %v1417
        %v1419 = vpop.f32.mrf.mxu0
        %v1420 = vadd.f32 0.0, %v1419
        %1421 = vdwg.mxu0
        %1422 = vmatpush.bf16.xpose.msra.mxu0 %v1255
        %1423 = vmatpush.bf16.xpose.msra.mxu0 %v1253
        %1424 = vmatpush.bf16.xpose.msra.mxu0 %v1251
        %1425 = vmatpush.bf16.xpose.msra.mxu0 %v1249
        %1426 = vmatpush.bf16.xpose.msra.mxu0 %v1247
        %1427 = vmatpush.bf16.xpose.msra.mxu0 %v1245
        %1428 = vmatpush.bf16.xpose.msra.mxu0 %v1243
        %1429 = vmatpush.bf16.xpose.msra.mxu0 %v1241
        %1430 = vmatmul.bf16.gmra.mxu0 %v1013
        %v1431 = vpop.f32.mrf.mxu0
        %v1432 = vadd.f32 %v1378, %v1431
        %v1433 = vpop.f32.mrf.mxu0
        %v1434 = vadd.f32 %v1380, %v1433
        %1435 = vmatmul.bf16.gmra.mxu0 %v1015
        %v1436 = vpop.f32.mrf.mxu0
        %v1437 = vadd.f32 %v1383, %v1436
        %v1438 = vpop.f32.mrf.mxu0
        %v1439 = vadd.f32 %v1385, %v1438
        %1440 = vmatmul.bf16.gmra.mxu0 %v1017
        %v1441 = vpop.f32.mrf.mxu0
        %v1442 = vadd.f32 %v1388, %v1441
        %v1443 = vpop.f32.mrf.mxu0
        %v1444 = vadd.f32 %v1390, %v1443
        %1445 = vmatmul.bf16.gmra.mxu0 %v1019
        %v1446 = vpop.f32.mrf.mxu0
        %v1447 = vadd.f32 %v1393, %v1446
        %v1448 = vpop.f32.mrf.mxu0
        %v1449 = vadd.f32 %v1395, %v1448
        %1450 = vmatmul.bf16.gmra.mxu0 %v1021
        %v1451 = vpop.f32.mrf.mxu0
        %v1452 = vadd.f32 %v1398, %v1451
        %v1453 = vpop.f32.mrf.mxu0
        %v1454 = vadd.f32 %v1400, %v1453
        %1455 = vmatmul.bf16.gmra.mxu0 %v1023
        %v1456 = vpop.f32.mrf.mxu0
        %v1457 = vadd.f32 %v1403, %v1456
        %v1458 = vpop.f32.mrf.mxu0
        %v1459 = vadd.f32 %v1405, %v1458
        %1460 = vmatmul.bf16.gmra.mxu0 %v1025
        %v1461 = vpop.f32.mrf.mxu0
        %v1462 = vadd.f32 %v1408, %v1461
        %v1463 = vpop.f32.mrf.mxu0
        %v1464 = vadd.f32 %v1410, %v1463
        %1465 = vmatmul.bf16.gmra.mxu0 %v1027
        %v1466 = vpop.f32.mrf.mxu0
        %v1467 = vadd.f32 %v1413, %v1466
        %v1468 = vpop.f32.mrf.mxu0
        %v1469 = vadd.f32 %v1415, %v1468
        %1470 = vmatmul.bf16.gmra.mxu0 %v1029
        %v1471 = vpop.f32.mrf.mxu0
        %v1472 = vadd.f32 %v1418, %v1471
        %v1473 = vpop.f32.mrf.mxu0
        %v1474 = vadd.f32 %v1420, %v1473
        %1475 = vdwg.mxu0
        %1476 = vmatpush.bf16.xpose.msra.mxu0 %v1270
        %1477 = vmatpush.bf16.xpose.msra.mxu0 %v1268
        %1478 = vmatpush.bf16.xpose.msra.mxu0 %v1266
        %1479 = vmatpush.bf16.xpose.msra.mxu0 %v1264
        %1480 = vmatpush.bf16.xpose.msra.mxu0 %v1262
        %1481 = vmatpush.bf16.xpose.msra.mxu0 %v1260
        %1482 = vmatpush.bf16.xpose.msra.mxu0 %v1258
        %1483 = vmatpush.bf16.xpose.msra.mxu0 %v1256
        %1484 = vmatmul.bf16.gmra.mxu0 %v1012
        %v1485 = vpop.f32.mrf.mxu0
        %v1486 = vadd.f32 0.0, %v1485
        %v1487 = vpop.f32.mrf.mxu0
        %v1488 = vadd.f32 0.0, %v1487
        %1489 = vmatmul.bf16.gmra.mxu0 %v1014
        %v1490 = vpop.f32.mrf.mxu0
        %v1491 = vadd.f32 0.0, %v1490
        %v1492 = vpop.f32.mrf.mxu0
        %v1493 = vadd.f32 0.0, %v1492
        %1494 = vmatmul.bf16.gmra.mxu0 %v1016
        %v1495 = vpop.f32.mrf.mxu0
        %v1496 = vadd.f32 0.0, %v1495
        %v1497 = vpop.f32.mrf.mxu0
        %v1498 = vadd.f32 0.0, %v1497
        %1499 = vmatmul.bf16.gmra.mxu0 %v1018
        %v1500 = vpop.f32.mrf.mxu0
        %v1501 = vadd.f32 0.0, %v1500
        %v1502 = vpop.f32.mrf.mxu0
        %v1503 = vadd.f32 0.0, %v1502
        %1504 = vmatmul.bf16.gmra.mxu0 %v1020
        %v1505 = vpop.f32.mrf.mxu0
        %v1506 = vadd.f32 0.0, %v1505
        %v1507 = vpop.f32.mrf.mxu0
        %v1508 = vadd.f32 0.0, %v1507
        %1509 = vmatmul.bf16.gmra.mxu0 %v1022
        %v1510 = vpop.f32.mrf.mxu0
        %v1511 = vadd.f32 0.0, %v1510
        %v1512 = vpop.f32.mrf.mxu0
        %v1513 = vadd.f32 0.0, %v1512
        %1514 = vmatmul.bf16.gmra.mxu0 %v1024
        %v1515 = vpop.f32.mrf.mxu0
        %v1516 = vadd.f32 0.0, %v1515
        %v1517 = vpop.f32.mrf.mxu0
        %v1518 = vadd.f32 0.0, %v1517
        %1519 = vmatmul.bf16.gmra.mxu0 %v1026
        %v1520 = vpop.f32.mrf.mxu0
        %v1521 = vadd.f32 0.0, %v1520
        %v1522 = vpop.f32.mrf.mxu0
        %v1523 = vadd.f32 0.0, %v1522
        %1524 = vmatmul.bf16.gmra.mxu0 %v1028
        %v1525 = vpop.f32.mrf.mxu0
        %v1526 = vadd.f32 0.0, %v1525
        %v1527 = vpop.f32.mrf.mxu0
        %v1528 = vadd.f32 0.0, %v1527
        %1529 = vdwg.mxu0
        %1530 = vmatpush.bf16.xpose.msra.mxu0 %v1271
        %1531 = vmatpush.bf16.xpose.msra.mxu0 %v1269
        %1532 = vmatpush.bf16.xpose.msra.mxu0 %v1267
        %1533 = vmatpush.bf16.xpose.msra.mxu0 %v1265
        %1534 = vmatpush.bf16.xpose.msra.mxu0 %v1263
        %1535 = vmatpush.bf16.xpose.msra.mxu0 %v1261
        %1536 = vmatpush.bf16.xpose.msra.mxu0 %v1259
        %1537 = vmatpush.bf16.xpose.msra.mxu0 %v1257
        %1538 = vmatmul.bf16.gmra.mxu0 %v1013
        %v1539 = vpop.f32.mrf.mxu0
        %v1540 = vadd.f32 %v1486, %v1539
        %v1541 = vpop.f32.mrf.mxu0
        %v1542 = vadd.f32 %v1488, %v1541
        %1543 = vmatmul.bf16.gmra.mxu0 %v1015
        %v1544 = vpop.f32.mrf.mxu0
        %v1545 = vadd.f32 %v1491, %v1544
        %v1546 = vpop.f32.mrf.mxu0
        %v1547 = vadd.f32 %v1493, %v1546
        %1548 = vmatmul.bf16.gmra.mxu0 %v1017
        %v1549 = vpop.f32.mrf.mxu0
        %v1550 = vadd.f32 %v1496, %v1549
        %v1551 = vpop.f32.mrf.mxu0
        %v1552 = vadd.f32 %v1498, %v1551
        %1553 = vmatmul.bf16.gmra.mxu0 %v1019
        %v1554 = vpop.f32.mrf.mxu0
        %v1555 = vadd.f32 %v1501, %v1554
        %v1556 = vpop.f32.mrf.mxu0
        %v1557 = vadd.f32 %v1503, %v1556
        %1558 = vmatmul.bf16.gmra.mxu0 %v1021
        %v1559 = vpop.f32.mrf.mxu0
        %v1560 = vadd.f32 %v1506, %v1559
        %v1561 = vpop.f32.mrf.mxu0
        %v1562 = vadd.f32 %v1508, %v1561
        %1563 = vmatmul.bf16.gmra.mxu0 %v1023
        %v1564 = vpop.f32.mrf.mxu0
        %v1565 = vadd.f32 %v1511, %v1564
        %v1566 = vpop.f32.mrf.mxu0
        %v1567 = vadd.f32 %v1513, %v1566
        %1568 = vmatmul.bf16.gmra.mxu0 %v1025
        %v1569 = vpop.f32.mrf.mxu0
        %v1570 = vadd.f32 %v1516, %v1569
        %v1571 = vpop.f32.mrf.mxu0
        %v1572 = vadd.f32 %v1518, %v1571
        %1573 = vmatmul.bf16.gmra.mxu0 %v1027
        %v1574 = vpop.f32.mrf.mxu0
        %v1575 = vadd.f32 %v1521, %v1574
        %v1576 = vpop.f32.mrf.mxu0
        %v1577 = vadd.f32 %v1523, %v1576
        %1578 = vmatmul.bf16.gmra.mxu0 %v1029
        %v1579 = vpop.f32.mrf.mxu0
        %v1580 = vadd.f32 %v1526, %v1579
        %v1581 = vpop.f32.mrf.mxu0
        %v1582 = vadd.f32 %v1528, %v1581
        %1583 = vdwg.mxu0
        %1584 = vmatpush.bf16.xpose.msra.mxu0 %v1286
        %1585 = vmatpush.bf16.xpose.msra.mxu0 %v1284
        %1586 = vmatpush.bf16.xpose.msra.mxu0 %v1282
        %1587 = vmatpush.bf16.xpose.msra.mxu0 %v1280
        %1588 = vmatpush.bf16.xpose.msra.mxu0 %v1278
        %1589 = vmatpush.bf16.xpose.msra.mxu0 %v1276
        %1590 = vmatpush.bf16.xpose.msra.mxu0 %v1274
        %1591 = vmatpush.bf16.xpose.msra.mxu0 %v1272
        %1592 = vmatmul.bf16.gmra.mxu0 %v1012
        %v1593 = vpop.f32.mrf.mxu0
        %v1594 = vadd.f32 0.0, %v1593
        %v1595 = vpop.f32.mrf.mxu0
        %v1596 = vadd.f32 0.0, %v1595
        %1597 = vmatmul.bf16.gmra.mxu0 %v1014
        %v1598 = vpop.f32.mrf.mxu0
        %v1599 = vadd.f32 0.0, %v1598
        %v1600 = vpop.f32.mrf.mxu0
        %v1601 = vadd.f32 0.0, %v1600
        %1602 = vmatmul.bf16.gmra.mxu0 %v1016
        %v1603 = vpop.f32.mrf.mxu0
        %v1604 = vadd.f32 0.0, %v1603
        %v1605 = vpop.f32.mrf.mxu0
        %v1606 = vadd.f32 0.0, %v1605
        %1607 = vmatmul.bf16.gmra.mxu0 %v1018
        %v1608 = vpop.f32.mrf.mxu0
        %v1609 = vadd.f32 0.0, %v1608
        %v1610 = vpop.f32.mrf.mxu0
        %v1611 = vadd.f32 0.0, %v1610
        %1612 = vmatmul.bf16.gmra.mxu0 %v1020
        %v1613 = vpop.f32.mrf.mxu0
        %v1614 = vadd.f32 0.0, %v1613
        %v1615 = vpop.f32.mrf.mxu0
        %v1616 = vadd.f32 0.0, %v1615
        %1617 = vmatmul.bf16.gmra.mxu0 %v1022
        %v1618 = vpop.f32.mrf.mxu0
        %v1619 = vadd.f32 0.0, %v1618
        %v1620 = vpop.f32.mrf.mxu0
        %v1621 = vadd.f32 0.0, %v1620
        %1622 = vmatmul.bf16.gmra.mxu0 %v1024
        %v1623 = vpop.f32.mrf.mxu0
        %v1624 = vadd.f32 0.0, %v1623
        %v1625 = vpop.f32.mrf.mxu0
        %v1626 = vadd.f32 0.0, %v1625
        %1627 = vmatmul.bf16.gmra.mxu0 %v1026
        %v1628 = vpop.f32.mrf.mxu0
        %v1629 = vadd.f32 0.0, %v1628
        %v1630 = vpop.f32.mrf.mxu0
        %v1631 = vadd.f32 0.0, %v1630
        %1632 = vmatmul.bf16.gmra.mxu0 %v1028
        %v1633 = vpop.f32.mrf.mxu0
        %v1634 = vadd.f32 0.0, %v1633
        %v1635 = vpop.f32.mrf.mxu0
        %v1636 = vadd.f32 0.0, %v1635
        %1637 = vdwg.mxu0
        %1638 = vmatpush.bf16.xpose.msra.mxu0 %v1287
        %1639 = vmatpush.bf16.xpose.msra.mxu0 %v1285
        %1640 = vmatpush.bf16.xpose.msra.mxu0 %v1283
        %1641 = vmatpush.bf16.xpose.msra.mxu0 %v1281
        %1642 = vmatpush.bf16.xpose.msra.mxu0 %v1279
        %1643 = vmatpush.bf16.xpose.msra.mxu0 %v1277
        %1644 = vmatpush.bf16.xpose.msra.mxu0 %v1275
        %1645 = vmatpush.bf16.xpose.msra.mxu0 %v1273
        %1646 = vmatmul.bf16.gmra.mxu0 %v1013
        %v1647 = vpop.f32.mrf.mxu0
        %v1648 = vadd.f32 %v1594, %v1647
        %v1649 = vpop.f32.mrf.mxu0
        %v1650 = vadd.f32 %v1596, %v1649
        %1651 = vmatmul.bf16.gmra.mxu0 %v1015
        %v1652 = vpop.f32.mrf.mxu0
        %v1653 = vadd.f32 %v1599, %v1652
        %v1654 = vpop.f32.mrf.mxu0
        %v1655 = vadd.f32 %v1601, %v1654
        %1656 = vmatmul.bf16.gmra.mxu0 %v1017
        %v1657 = vpop.f32.mrf.mxu0
        %v1658 = vadd.f32 %v1604, %v1657
        %v1659 = vpop.f32.mrf.mxu0
        %v1660 = vadd.f32 %v1606, %v1659
        %1661 = vmatmul.bf16.gmra.mxu0 %v1019
        %v1662 = vpop.f32.mrf.mxu0
        %v1663 = vadd.f32 %v1609, %v1662
        %v1664 = vpop.f32.mrf.mxu0
        %v1665 = vadd.f32 %v1611, %v1664
        %1666 = vmatmul.bf16.gmra.mxu0 %v1021
        %v1667 = vpop.f32.mrf.mxu0
        %v1668 = vadd.f32 %v1614, %v1667
        %v1669 = vpop.f32.mrf.mxu0
        %v1670 = vadd.f32 %v1616, %v1669
        %1671 = vmatmul.bf16.gmra.mxu0 %v1023
        %v1672 = vpop.f32.mrf.mxu0
        %v1673 = vadd.f32 %v1619, %v1672
        %v1674 = vpop.f32.mrf.mxu0
        %v1675 = vadd.f32 %v1621, %v1674
        %1676 = vmatmul.bf16.gmra.mxu0 %v1025
        %v1677 = vpop.f32.mrf.mxu0
        %v1678 = vadd.f32 %v1624, %v1677
        %v1679 = vpop.f32.mrf.mxu0
        %v1680 = vadd.f32 %v1626, %v1679
        %1681 = vmatmul.bf16.gmra.mxu0 %v1027
        %v1682 = vpop.f32.mrf.mxu0
        %v1683 = vadd.f32 %v1629, %v1682
        %v1684 = vpop.f32.mrf.mxu0
        %v1685 = vadd.f32 %v1631, %v1684
        %1686 = vmatmul.bf16.gmra.mxu0 %v1029
        %v1687 = vpop.f32.mrf.mxu0
        %v1688 = vadd.f32 %v1634, %v1687
        %v1689 = vpop.f32.mrf.mxu0
        %v1690 = vadd.f32 %v1636, %v1689
        %1691 = vdwg.mxu0
        %1692 = vmatpush.bf16.xpose.msra.mxu0 %v1302
        %1693 = vmatpush.bf16.xpose.msra.mxu0 %v1300
        %1694 = vmatpush.bf16.xpose.msra.mxu0 %v1298
        %1695 = vmatpush.bf16.xpose.msra.mxu0 %v1296
        %1696 = vmatpush.bf16.xpose.msra.mxu0 %v1294
        %1697 = vmatpush.bf16.xpose.msra.mxu0 %v1292
        %1698 = vmatpush.bf16.xpose.msra.mxu0 %v1290
        %1699 = vmatpush.bf16.xpose.msra.mxu0 %v1288
        %1700 = vmatmul.bf16.gmra.mxu0 %v1012
        %v1701 = vpop.f32.mrf.mxu0
        %v1702 = vadd.f32 0.0, %v1701
        %v1703 = vpop.f32.mrf.mxu0
        %v1704 = vadd.f32 0.0, %v1703
        %1705 = vmatmul.bf16.gmra.mxu0 %v1014
        %v1706 = vpop.f32.mrf.mxu0
        %v1707 = vadd.f32 0.0, %v1706
        %v1708 = vpop.f32.mrf.mxu0
        %v1709 = vadd.f32 0.0, %v1708
        %1710 = vmatmul.bf16.gmra.mxu0 %v1016
        %v1711 = vpop.f32.mrf.mxu0
        %v1712 = vadd.f32 0.0, %v1711
        %v1713 = vpop.f32.mrf.mxu0
        %v1714 = vadd.f32 0.0, %v1713
        %1715 = vmatmul.bf16.gmra.mxu0 %v1018
        %v1716 = vpop.f32.mrf.mxu0
        %v1717 = vadd.f32 0.0, %v1716
        %v1718 = vpop.f32.mrf.mxu0
        %v1719 = vadd.f32 0.0, %v1718
        %1720 = vmatmul.bf16.gmra.mxu0 %v1020
        %v1721 = vpop.f32.mrf.mxu0
        %v1722 = vadd.f32 0.0, %v1721
        %v1723 = vpop.f32.mrf.mxu0
        %v1724 = vadd.f32 0.0, %v1723
        %1725 = vmatmul.bf16.gmra.mxu0 %v1022
        %v1726 = vpop.f32.mrf.mxu0
        %v1727 = vadd.f32 0.0, %v1726
        %v1728 = vpop.f32.mrf.mxu0
        %v1729 = vadd.f32 0.0, %v1728
        %1730 = vmatmul.bf16.gmra.mxu0 %v1024
        %v1731 = vpop.f32.mrf.mxu0
        %v1732 = vadd.f32 0.0, %v1731
        %v1733 = vpop.f32.mrf.mxu0
        %v1734 = vadd.f32 0.0, %v1733
        %1735 = vmatmul.bf16.gmra.mxu0 %v1026
        %v1736 = vpop.f32.mrf.mxu0
        %v1737 = vadd.f32 0.0, %v1736
        %v1738 = vpop.f32.mrf.mxu0
        %v1739 = vadd.f32 0.0, %v1738
        %1740 = vmatmul.bf16.gmra.mxu0 %v1028
        %v1741 = vpop.f32.mrf.mxu0
        %v1742 = vadd.f32 0.0, %v1741
        %v1743 = vpop.f32.mrf.mxu0
        %v1744 = vadd.f32 0.0, %v1743
        %1745 = vdwg.mxu0
        %1746 = vmatpush.bf16.xpose.msra.mxu0 %v1303
        %1747 = vmatpush.bf16.xpose.msra.mxu0 %v1301
        %1748 = vmatpush.bf16.xpose.msra.mxu0 %v1299
        %1749 = vmatpush.bf16.xpose.msra.mxu0 %v1297
        %1750 = vmatpush.bf16.xpose.msra.mxu0 %v1295
        %1751 = vmatpush.bf16.xpose.msra.mxu0 %v1293
        %1752 = vmatpush.bf16.xpose.msra.mxu0 %v1291
        %1753 = vmatpush.bf16.xpose.msra.mxu0 %v1289
        %1754 = vmatmul.bf16.gmra.mxu0 %v1013
        %v1755 = vpop.f32.mrf.mxu0
        %v1756 = vadd.f32 %v1702, %v1755
        %v1757 = vpop.f32.mrf.mxu0
        %v1758 = vadd.f32 %v1704, %v1757
        %1759 = vmatmul.bf16.gmra.mxu0 %v1015
        %v1760 = vpop.f32.mrf.mxu0
        %v1761 = vadd.f32 %v1707, %v1760
        %v1762 = vpop.f32.mrf.mxu0
        %v1763 = vadd.f32 %v1709, %v1762
        %1764 = vmatmul.bf16.gmra.mxu0 %v1017
        %v1765 = vpop.f32.mrf.mxu0
        %v1766 = vadd.f32 %v1712, %v1765
        %v1767 = vpop.f32.mrf.mxu0
        %v1768 = vadd.f32 %v1714, %v1767
        %1769 = vmatmul.bf16.gmra.mxu0 %v1019
        %v1770 = vpop.f32.mrf.mxu0
        %v1771 = vadd.f32 %v1717, %v1770
        %v1772 = vpop.f32.mrf.mxu0
        %v1773 = vadd.f32 %v1719, %v1772
        %1774 = vmatmul.bf16.gmra.mxu0 %v1021
        %v1775 = vpop.f32.mrf.mxu0
        %v1776 = vadd.f32 %v1722, %v1775
        %v1777 = vpop.f32.mrf.mxu0
        %v1778 = vadd.f32 %v1724, %v1777
        %1779 = vmatmul.bf16.gmra.mxu0 %v1023
        %v1780 = vpop.f32.mrf.mxu0
        %v1781 = vadd.f32 %v1727, %v1780
        %v1782 = vpop.f32.mrf.mxu0
        %v1783 = vadd.f32 %v1729, %v1782
        %1784 = vmatmul.bf16.gmra.mxu0 %v1025
        %v1785 = vpop.f32.mrf.mxu0
        %v1786 = vadd.f32 %v1732, %v1785
        %v1787 = vpop.f32.mrf.mxu0
        %v1788 = vadd.f32 %v1734, %v1787
        %1789 = vmatmul.bf16.gmra.mxu0 %v1027
        %v1790 = vpop.f32.mrf.mxu0
        %v1791 = vadd.f32 %v1737, %v1790
        %v1792 = vpop.f32.mrf.mxu0
        %v1793 = vadd.f32 %v1739, %v1792
        %1794 = vmatmul.bf16.gmra.mxu0 %v1029
        %v1795 = vpop.f32.mrf.mxu0
        %v1796 = vadd.f32 %v1742, %v1795
        %v1797 = vpop.f32.mrf.mxu0
        %v1798 = vadd.f32 %v1744, %v1797
        %1799 = vdwg.mxu0
        %v1800 = vld [vmem:[%s325] sm:$0xff]
        %v1801 = vld [vmem:[%s325 + $0x8] sm:$0xff]
        %v1802 = vld [vmem:[%s325 + $0x10] sm:$0xff]
        %v1803 = vld [vmem:[%s325 + $0x18] sm:$0xff]
        %v1804 = vld [vmem:[%s325 + $0x20] sm:$0xff]
        %v1805 = vld [vmem:[%s325 + $0x28] sm:$0xff]
        %v1806 = vld [vmem:[%s325 + $0x30] sm:$0xff]
        %v1807 = vld [vmem:[%s325 + $0x38] sm:$0xff]
        %v1808 = vld [vmem:[%s325 + $0x40] sm:$0xff]
        %v1809 = vld [vmem:[%s325 + $0x48] sm:$0xff]
        %v1810 = vld [vmem:[%s325 + $0x50] sm:$0xff]
        %v1811 = vld [vmem:[%s325 + $0x58] sm:$0xff]
        %v1812 = vld [vmem:[%s325 + $0x60] sm:$0xff]
        %v1813 = vld [vmem:[%s325 + $0x68] sm:$0xff]
        %v1814 = vld [vmem:[%s325 + $0x70] sm:$0xff]
        %v1815 = vld [vmem:[%s325 + $0x78] sm:$0xff]
        %v1816 = vld [vmem:[%s325 + $0x80] sm:$0xff]
        %v1817 = vld [vmem:[%s325 + $0x88] sm:$0xff]
        %v1818 = vld [vmem:[%s325 + $0x90] sm:$0xff]
        %v1819 = vld [vmem:[%s325 + $0x98] sm:$0xff]
        %v1820 = vld [vmem:[%s325 + $0xa0] sm:$0xff]
        %v1821 = vld [vmem:[%s325 + $0xa8] sm:$0xff]
        %v1822 = vld [vmem:[%s325 + $0xb0] sm:$0xff]
        %v1823 = vld [vmem:[%s325 + $0xb8] sm:$0xff]
        %v1824 = vld [vmem:[%s325 + $0xc0] sm:$0xff]
        %v1825 = vld [vmem:[%s325 + $0xc8] sm:$0xff]
        %v1826 = vld [vmem:[%s325 + $0xd0] sm:$0xff]
        %v1827 = vld [vmem:[%s325 + $0xd8] sm:$0xff]
        %v1828 = vld [vmem:[%s325 + $0xe0] sm:$0xff]
        %v1829 = vld [vmem:[%s325 + $0xe8] sm:$0xff]
        %v1830 = vld [vmem:[%s325 + $0xf0] sm:$0xff]
        %v1831 = vld [vmem:[%s325 + $0xf8] sm:$0xff]
        %v1832 = vld [vmem:[%s325 + $0x100] sm:$0xff]
        %v1833 = vld [vmem:[%s325 + $0x108] sm:$0xff]
        %v1834 = vld [vmem:[%s325 + $0x110] sm:$0xff]
        %v1835 = vld [vmem:[%s325 + $0x118] sm:$0xff]
        %v1836 = vld [vmem:[%s325 + $0x120] sm:$0xff]
        %v1837 = vld [vmem:[%s325 + $0x128] sm:$0xff]
        %v1838 = vld [vmem:[%s325 + $0x130] sm:$0xff]
        %v1839 = vld [vmem:[%s325 + $0x138] sm:$0xff]
        %v1840 = vld [vmem:[%s325 + $0x140] sm:$0xff]
        %v1841 = vld [vmem:[%s325 + $0x148] sm:$0xff]
        %v1842 = vld [vmem:[%s325 + $0x150] sm:$0xff]
        %v1843 = vld [vmem:[%s325 + $0x158] sm:$0xff]
        %v1844 = vld [vmem:[%s325 + $0x160] sm:$0xff]
        %v1845 = vld [vmem:[%s325 + $0x168] sm:$0xff]
        %v1846 = vld [vmem:[%s325 + $0x170] sm:$0xff]
        %v1847 = vld [vmem:[%s325 + $0x178] sm:$0xff]
        %v1848 = vld [vmem:[%s325 + $0x180] sm:$0xff]
        %v1849 = vld [vmem:[%s325 + $0x188] sm:$0xff]
        %v1850 = vld [vmem:[%s325 + $0x190] sm:$0xff]
        %v1851 = vld [vmem:[%s325 + $0x198] sm:$0xff]
        %v1852 = vld [vmem:[%s325 + $0x1a0] sm:$0xff]
        %v1853 = vld [vmem:[%s325 + $0x1a8] sm:$0xff]
        %v1854 = vld [vmem:[%s325 + $0x1b0] sm:$0xff]
        %v1855 = vld [vmem:[%s325 + $0x1b8] sm:$0xff]
        %v1856 = vld [vmem:[%s325 + $0x1c0] sm:$0xff]
        %v1857 = vld [vmem:[%s325 + $0x1c8] sm:$0xff]
        %v1858 = vld [vmem:[%s325 + $0x1d0] sm:$0xff]
        %v1859 = vld [vmem:[%s325 + $0x1d8] sm:$0xff]
        %v1860 = vld [vmem:[%s325 + $0x1e0] sm:$0xff]
        %v1861 = vld [vmem:[%s325 + $0x1e8] sm:$0xff]
        %v1862 = vld [vmem:[%s325 + $0x1f0] sm:$0xff]
        %v1863 = vld [vmem:[%s325 + $0x1f8] sm:$0xff]
        %v1928 = vunpack.c.l.b16 %v1800
        %v1929 = vunpack.c.h.b16 %v1800
        %v1930 = vunpack.c.l.b16 %v1801
        %v1931 = vunpack.c.h.b16 %v1801
        %v1932 = vunpack.c.l.b16 %v1802
        %v1933 = vunpack.c.h.b16 %v1802
        %v1934 = vunpack.c.l.b16 %v1803
        %v1935 = vunpack.c.h.b16 %v1803
        %v1936 = vunpack.c.l.b16 %v1804
        %v1937 = vunpack.c.h.b16 %v1804
        %v1938 = vunpack.c.l.b16 %v1805
        %v1939 = vunpack.c.h.b16 %v1805
        %v1940 = vunpack.c.l.b16 %v1806
        %v1941 = vunpack.c.h.b16 %v1806
        %v1942 = vunpack.c.l.b16 %v1807
        %v1943 = vunpack.c.h.b16 %v1807
        %v1944 = vunpack.c.l.b16 %v1808
        %v1945 = vunpack.c.h.b16 %v1808
        %v1946 = vunpack.c.l.b16 %v1809
        %v1947 = vunpack.c.h.b16 %v1809
        %v1948 = vunpack.c.l.b16 %v1810
        %v1949 = vunpack.c.h.b16 %v1810
        %v1950 = vunpack.c.l.b16 %v1811
        %v1951 = vunpack.c.h.b16 %v1811
        %v1952 = vunpack.c.l.b16 %v1812
        %v1953 = vunpack.c.h.b16 %v1812
        %v1954 = vunpack.c.l.b16 %v1813
        %v1955 = vunpack.c.h.b16 %v1813
        %v1956 = vunpack.c.l.b16 %v1814
        %v1957 = vunpack.c.h.b16 %v1814
        %v1958 = vunpack.c.l.b16 %v1815
        %v1959 = vunpack.c.h.b16 %v1815
        %v1960 = vunpack.c.l.b16 %v1816
        %v1961 = vunpack.c.h.b16 %v1816
        %v1962 = vunpack.c.l.b16 %v1817
        %v1963 = vunpack.c.h.b16 %v1817
        %v1964 = vunpack.c.l.b16 %v1818
        %v1965 = vunpack.c.h.b16 %v1818
        %v1966 = vunpack.c.l.b16 %v1819
        %v1967 = vunpack.c.h.b16 %v1819
        %v1968 = vunpack.c.l.b16 %v1820
        %v1969 = vunpack.c.h.b16 %v1820
        %v1970 = vunpack.c.l.b16 %v1821
        %v1971 = vunpack.c.h.b16 %v1821
        %v1972 = vunpack.c.l.b16 %v1822
        %v1973 = vunpack.c.h.b16 %v1822
        %v1974 = vunpack.c.l.b16 %v1823
        %v1975 = vunpack.c.h.b16 %v1823
        %v1976 = vunpack.c.l.b16 %v1824
        %v1977 = vunpack.c.h.b16 %v1824
        %v1978 = vunpack.c.l.b16 %v1825
        %v1979 = vunpack.c.h.b16 %v1825
        %v1980 = vunpack.c.l.b16 %v1826
        %v1981 = vunpack.c.h.b16 %v1826
        %v1982 = vunpack.c.l.b16 %v1827
        %v1983 = vunpack.c.h.b16 %v1827
        %v1984 = vunpack.c.l.b16 %v1828
        %v1985 = vunpack.c.h.b16 %v1828
        %v1986 = vunpack.c.l.b16 %v1829
        %v1987 = vunpack.c.h.b16 %v1829
        %v1988 = vunpack.c.l.b16 %v1830
        %v1989 = vunpack.c.h.b16 %v1830
        %v1990 = vunpack.c.l.b16 %v1831
        %v1991 = vunpack.c.h.b16 %v1831
        %v1992 = vunpack.c.l.b16 %v1832
        %v1993 = vunpack.c.h.b16 %v1832
        %v1994 = vunpack.c.l.b16 %v1833
        %v1995 = vunpack.c.h.b16 %v1833
        %v1996 = vunpack.c.l.b16 %v1834
        %v1997 = vunpack.c.h.b16 %v1834
        %v1998 = vunpack.c.l.b16 %v1835
        %v1999 = vunpack.c.h.b16 %v1835
        %v2000 = vunpack.c.l.b16 %v1836
        %v2001 = vunpack.c.h.b16 %v1836
        %v2002 = vunpack.c.l.b16 %v1837
        %v2003 = vunpack.c.h.b16 %v1837
        %v2004 = vunpack.c.l.b16 %v1838
        %v2005 = vunpack.c.h.b16 %v1838
        %v2006 = vunpack.c.l.b16 %v1839
        %v2007 = vunpack.c.h.b16 %v1839
        %v2008 = vunpack.c.l.b16 %v1840
        %v2009 = vunpack.c.h.b16 %v1840
        %v2010 = vunpack.c.l.b16 %v1841
        %v2011 = vunpack.c.h.b16 %v1841
        %v2012 = vunpack.c.l.b16 %v1842
        %v2013 = vunpack.c.h.b16 %v1842
        %v2014 = vunpack.c.l.b16 %v1843
        %v2015 = vunpack.c.h.b16 %v1843
        %v2016 = vunpack.c.l.b16 %v1844
        %v2017 = vunpack.c.h.b16 %v1844
        %v2018 = vunpack.c.l.b16 %v1845
        %v2019 = vunpack.c.h.b16 %v1845
        %v2020 = vunpack.c.l.b16 %v1846
        %v2021 = vunpack.c.h.b16 %v1846
        %v2022 = vunpack.c.l.b16 %v1847
        %v2023 = vunpack.c.h.b16 %v1847
        %v2024 = vunpack.c.l.b16 %v1848
        %v2025 = vunpack.c.h.b16 %v1848
        %v2026 = vunpack.c.l.b16 %v1849
        %v2027 = vunpack.c.h.b16 %v1849
        %v2028 = vunpack.c.l.b16 %v1850
        %v2029 = vunpack.c.h.b16 %v1850
        %v2030 = vunpack.c.l.b16 %v1851
        %v2031 = vunpack.c.h.b16 %v1851
        %v2032 = vunpack.c.l.b16 %v1852
        %v2033 = vunpack.c.h.b16 %v1852
        %v2034 = vunpack.c.l.b16 %v1853
        %v2035 = vunpack.c.h.b16 %v1853
        %v2036 = vunpack.c.l.b16 %v1854
        %v2037 = vunpack.c.h.b16 %v1854
        %v2038 = vunpack.c.l.b16 %v1855
        %v2039 = vunpack.c.h.b16 %v1855
        %v2040 = vunpack.c.l.b16 %v1856
        %v2041 = vunpack.c.h.b16 %v1856
        %v2042 = vunpack.c.l.b16 %v1857
        %v2043 = vunpack.c.h.b16 %v1857
        %v2044 = vunpack.c.l.b16 %v1858
        %v2045 = vunpack.c.h.b16 %v1858
        %v2046 = vunpack.c.l.b16 %v1859
        %v2047 = vunpack.c.h.b16 %v1859
        %v2048 = vunpack.c.l.b16 %v1860
        %v2049 = vunpack.c.h.b16 %v1860
        %v2050 = vunpack.c.l.b16 %v1861
        %v2051 = vunpack.c.h.b16 %v1861
        %v2052 = vunpack.c.l.b16 %v1862
        %v2053 = vunpack.c.h.b16 %v1862
        %v2054 = vunpack.c.l.b16 %v1863
        %v2055 = vunpack.c.h.b16 %v1863
        %v2056 = vpack.c.b16 %v1930, %v1928
        %v2057 = vpack.c.b16 %v1931, %v1929
        %v2058 = vpack.c.b16 %v1934, %v1932
        %v2059 = vpack.c.b16 %v1935, %v1933
        %v2060 = vpack.c.b16 %v1938, %v1936
        %v2061 = vpack.c.b16 %v1939, %v1937
        %v2062 = vpack.c.b16 %v1942, %v1940
        %v2063 = vpack.c.b16 %v1943, %v1941
        %v2064 = vpack.c.b16 %v1946, %v1944
        %v2065 = vpack.c.b16 %v1947, %v1945
        %v2066 = vpack.c.b16 %v1950, %v1948
        %v2067 = vpack.c.b16 %v1951, %v1949
        %v2068 = vpack.c.b16 %v1954, %v1952
        %v2069 = vpack.c.b16 %v1955, %v1953
        %v2070 = vpack.c.b16 %v1958, %v1956
        %v2071 = vpack.c.b16 %v1959, %v1957
        %v2072 = vpack.c.b16 %v1962, %v1960
        %v2073 = vpack.c.b16 %v1963, %v1961
        %v2074 = vpack.c.b16 %v1966, %v1964
        %v2075 = vpack.c.b16 %v1967, %v1965
        %v2076 = vpack.c.b16 %v1970, %v1968
        %v2077 = vpack.c.b16 %v1971, %v1969
        %v2078 = vpack.c.b16 %v1974, %v1972
        %v2079 = vpack.c.b16 %v1975, %v1973
        %v2080 = vpack.c.b16 %v1978, %v1976
        %v2081 = vpack.c.b16 %v1979, %v1977
        %v2082 = vpack.c.b16 %v1982, %v1980
        %v2083 = vpack.c.b16 %v1983, %v1981
        %v2084 = vpack.c.b16 %v1986, %v1984
        %v2085 = vpack.c.b16 %v1987, %v1985
        %v2086 = vpack.c.b16 %v1990, %v1988
        %v2087 = vpack.c.b16 %v1991, %v1989
        %v2088 = vpack.c.b16 %v1994, %v1992
        %v2089 = vpack.c.b16 %v1995, %v1993
        %v2090 = vpack.c.b16 %v1998, %v1996
        %v2091 = vpack.c.b16 %v1999, %v1997
        %v2092 = vpack.c.b16 %v2002, %v2000
        %v2093 = vpack.c.b16 %v2003, %v2001
        %v2094 = vpack.c.b16 %v2006, %v2004
        %v2095 = vpack.c.b16 %v2007, %v2005
        %v2096 = vpack.c.b16 %v2010, %v2008
        %v2097 = vpack.c.b16 %v2011, %v2009
        %v2098 = vpack.c.b16 %v2014, %v2012
        %v2099 = vpack.c.b16 %v2015, %v2013
        %v2100 = vpack.c.b16 %v2018, %v2016
        %v2101 = vpack.c.b16 %v2019, %v2017
        %v2102 = vpack.c.b16 %v2022, %v2020
        %v2103 = vpack.c.b16 %v2023, %v2021
        %v2104 = vpack.c.b16 %v2026, %v2024
        %v2105 = vpack.c.b16 %v2027, %v2025
        %v2106 = vpack.c.b16 %v2030, %v2028
        %v2107 = vpack.c.b16 %v2031, %v2029
        %v2108 = vpack.c.b16 %v2034, %v2032
        %v2109 = vpack.c.b16 %v2035, %v2033
        %v2110 = vpack.c.b16 %v2038, %v2036
        %v2111 = vpack.c.b16 %v2039, %v2037
        %v2112 = vpack.c.b16 %v2042, %v2040
        %v2113 = vpack.c.b16 %v2043, %v2041
        %v2114 = vpack.c.b16 %v2046, %v2044
        %v2115 = vpack.c.b16 %v2047, %v2045
        %v2116 = vpack.c.b16 %v2050, %v2048
        %v2117 = vpack.c.b16 %v2051, %v2049
        %v2118 = vpack.c.b16 %v2054, %v2052
        %v2119 = vpack.c.b16 %v2055, %v2053
        %2184 = vmatpush.bf16.xpose.msra.mxu0 %v2070
        %2185 = vmatpush.bf16.xpose.msra.mxu0 %v2068
        %2186 = vmatpush.bf16.xpose.msra.mxu0 %v2066
        %2187 = vmatpush.bf16.xpose.msra.mxu0 %v2064
        %2188 = vmatpush.bf16.xpose.msra.mxu0 %v2062
        %2189 = vmatpush.bf16.xpose.msra.mxu0 %v2060
        %2190 = vmatpush.bf16.xpose.msra.mxu0 %v2058
        %2191 = vmatpush.bf16.xpose.msra.mxu0 %v2056
        %2192 = vmatmul.bf16.gmra.mxu0 %v1012
        %v2193 = vpop.f32.mrf.mxu0
        %v2194 = vadd.f32 0.0, %v2193
        %v2195 = vpop.f32.mrf.mxu0
        %v2196 = vadd.f32 0.0, %v2195
        %2197 = vmatmul.bf16.gmra.mxu0 %v1014
        %v2198 = vpop.f32.mrf.mxu0
        %v2199 = vadd.f32 0.0, %v2198
        %v2200 = vpop.f32.mrf.mxu0
        %v2201 = vadd.f32 0.0, %v2200
        %2202 = vmatmul.bf16.gmra.mxu0 %v1016
        %v2203 = vpop.f32.mrf.mxu0
        %v2204 = vadd.f32 0.0, %v2203
        %v2205 = vpop.f32.mrf.mxu0
        %v2206 = vadd.f32 0.0, %v2205
        %2207 = vmatmul.bf16.gmra.mxu0 %v1018
        %v2208 = vpop.f32.mrf.mxu0
        %v2209 = vadd.f32 0.0, %v2208
        %v2210 = vpop.f32.mrf.mxu0
        %v2211 = vadd.f32 0.0, %v2210
        %2212 = vmatmul.bf16.gmra.mxu0 %v1020
        %v2213 = vpop.f32.mrf.mxu0
        %v2214 = vadd.f32 0.0, %v2213
        %v2215 = vpop.f32.mrf.mxu0
        %v2216 = vadd.f32 0.0, %v2215
        %2217 = vmatmul.bf16.gmra.mxu0 %v1022
        %v2218 = vpop.f32.mrf.mxu0
        %v2219 = vadd.f32 0.0, %v2218
        %v2220 = vpop.f32.mrf.mxu0
        %v2221 = vadd.f32 0.0, %v2220
        %2222 = vmatmul.bf16.gmra.mxu0 %v1024
        %v2223 = vpop.f32.mrf.mxu0
        %v2224 = vadd.f32 0.0, %v2223
        %v2225 = vpop.f32.mrf.mxu0
        %v2226 = vadd.f32 0.0, %v2225
        %2227 = vmatmul.bf16.gmra.mxu0 %v1026
        %v2228 = vpop.f32.mrf.mxu0
        %v2229 = vadd.f32 0.0, %v2228
        %v2230 = vpop.f32.mrf.mxu0
        %v2231 = vadd.f32 0.0, %v2230
        %2232 = vmatmul.bf16.gmra.mxu0 %v1028
        %v2233 = vpop.f32.mrf.mxu0
        %v2234 = vadd.f32 0.0, %v2233
        %v2235 = vpop.f32.mrf.mxu0
        %v2236 = vadd.f32 0.0, %v2235
        %2237 = vdwg.mxu0
        %2238 = vmatpush.bf16.xpose.msra.mxu0 %v2071
        %2239 = vmatpush.bf16.xpose.msra.mxu0 %v2069
        %2240 = vmatpush.bf16.xpose.msra.mxu0 %v2067
        %2241 = vmatpush.bf16.xpose.msra.mxu0 %v2065
        %2242 = vmatpush.bf16.xpose.msra.mxu0 %v2063
        %2243 = vmatpush.bf16.xpose.msra.mxu0 %v2061
        %2244 = vmatpush.bf16.xpose.msra.mxu0 %v2059
        %2245 = vmatpush.bf16.xpose.msra.mxu0 %v2057
        %2246 = vmatmul.bf16.gmra.mxu0 %v1013
        %v2247 = vpop.f32.mrf.mxu0
        %v2248 = vadd.f32 %v2194, %v2247
        %v2249 = vpop.f32.mrf.mxu0
        %v2250 = vadd.f32 %v2196, %v2249
        %2251 = vmatmul.bf16.gmra.mxu0 %v1015
        %v2252 = vpop.f32.mrf.mxu0
        %v2253 = vadd.f32 %v2199, %v2252
        %v2254 = vpop.f32.mrf.mxu0
        %v2255 = vadd.f32 %v2201, %v2254
        %2256 = vmatmul.bf16.gmra.mxu0 %v1017
        %v2257 = vpop.f32.mrf.mxu0
        %v2258 = vadd.f32 %v2204, %v2257
        %v2259 = vpop.f32.mrf.mxu0
        %v2260 = vadd.f32 %v2206, %v2259
        %2261 = vmatmul.bf16.gmra.mxu0 %v1019
        %v2262 = vpop.f32.mrf.mxu0
        %v2263 = vadd.f32 %v2209, %v2262
        %v2264 = vpop.f32.mrf.mxu0
        %v2265 = vadd.f32 %v2211, %v2264
        %2266 = vmatmul.bf16.gmra.mxu0 %v1021
        %v2267 = vpop.f32.mrf.mxu0
        %v2268 = vadd.f32 %v2214, %v2267
        %v2269 = vpop.f32.mrf.mxu0
        %v2270 = vadd.f32 %v2216, %v2269
        %2271 = vmatmul.bf16.gmra.mxu0 %v1023
        %v2272 = vpop.f32.mrf.mxu0
        %v2273 = vadd.f32 %v2219, %v2272
        %v2274 = vpop.f32.mrf.mxu0
        %v2275 = vadd.f32 %v2221, %v2274
        %2276 = vmatmul.bf16.gmra.mxu0 %v1025
        %v2277 = vpop.f32.mrf.mxu0
        %v2278 = vadd.f32 %v2224, %v2277
        %v2279 = vpop.f32.mrf.mxu0
        %v2280 = vadd.f32 %v2226, %v2279
        %2281 = vmatmul.bf16.gmra.mxu0 %v1027
        %v2282 = vpop.f32.mrf.mxu0
        %v2283 = vadd.f32 %v2229, %v2282
        %v2284 = vpop.f32.mrf.mxu0
        %v2285 = vadd.f32 %v2231, %v2284
        %2286 = vmatmul.bf16.gmra.mxu0 %v1029
        %v2287 = vpop.f32.mrf.mxu0
        %v2288 = vadd.f32 %v2234, %v2287
        %v2289 = vpop.f32.mrf.mxu0
        %v2290 = vadd.f32 %v2236, %v2289
        %2291 = vdwg.mxu0
        %2292 = vmatpush.bf16.xpose.msra.mxu0 %v2086
        %2293 = vmatpush.bf16.xpose.msra.mxu0 %v2084
        %2294 = vmatpush.bf16.xpose.msra.mxu0 %v2082
        %2295 = vmatpush.bf16.xpose.msra.mxu0 %v2080
        %2296 = vmatpush.bf16.xpose.msra.mxu0 %v2078
        %2297 = vmatpush.bf16.xpose.msra.mxu0 %v2076
        %2298 = vmatpush.bf16.xpose.msra.mxu0 %v2074
        %2299 = vmatpush.bf16.xpose.msra.mxu0 %v2072
        %2300 = vmatmul.bf16.gmra.mxu0 %v1012
        %v2301 = vpop.f32.mrf.mxu0
        %v2302 = vadd.f32 0.0, %v2301
        %v2303 = vpop.f32.mrf.mxu0
        %v2304 = vadd.f32 0.0, %v2303
        %2305 = vmatmul.bf16.gmra.mxu0 %v1014
        %v2306 = vpop.f32.mrf.mxu0
        %v2307 = vadd.f32 0.0, %v2306
        %v2308 = vpop.f32.mrf.mxu0
        %v2309 = vadd.f32 0.0, %v2308
        %2310 = vmatmul.bf16.gmra.mxu0 %v1016
        %v2311 = vpop.f32.mrf.mxu0
        %v2312 = vadd.f32 0.0, %v2311
        %v2313 = vpop.f32.mrf.mxu0
        %v2314 = vadd.f32 0.0, %v2313
        %2315 = vmatmul.bf16.gmra.mxu0 %v1018
        %v2316 = vpop.f32.mrf.mxu0
        %v2317 = vadd.f32 0.0, %v2316
        %v2318 = vpop.f32.mrf.mxu0
        %v2319 = vadd.f32 0.0, %v2318
        %2320 = vmatmul.bf16.gmra.mxu0 %v1020
        %v2321 = vpop.f32.mrf.mxu0
        %v2322 = vadd.f32 0.0, %v2321
        %v2323 = vpop.f32.mrf.mxu0
        %v2324 = vadd.f32 0.0, %v2323
        %2325 = vmatmul.bf16.gmra.mxu0 %v1022
        %v2326 = vpop.f32.mrf.mxu0
        %v2327 = vadd.f32 0.0, %v2326
        %v2328 = vpop.f32.mrf.mxu0
        %v2329 = vadd.f32 0.0, %v2328
        %2330 = vmatmul.bf16.gmra.mxu0 %v1024
        %v2331 = vpop.f32.mrf.mxu0
        %v2332 = vadd.f32 0.0, %v2331
        %v2333 = vpop.f32.mrf.mxu0
        %v2334 = vadd.f32 0.0, %v2333
        %2335 = vmatmul.bf16.gmra.mxu0 %v1026
        %v2336 = vpop.f32.mrf.mxu0
        %v2337 = vadd.f32 0.0, %v2336
        %v2338 = vpop.f32.mrf.mxu0
        %v2339 = vadd.f32 0.0, %v2338
        %2340 = vmatmul.bf16.gmra.mxu0 %v1028
        %v2341 = vpop.f32.mrf.mxu0
        %v2342 = vadd.f32 0.0, %v2341
        %v2343 = vpop.f32.mrf.mxu0
        %v2344 = vadd.f32 0.0, %v2343
        %2345 = vdwg.mxu0
        %2346 = vmatpush.bf16.xpose.msra.mxu0 %v2087
        %2347 = vmatpush.bf16.xpose.msra.mxu0 %v2085
        %2348 = vmatpush.bf16.xpose.msra.mxu0 %v2083
        %2349 = vmatpush.bf16.xpose.msra.mxu0 %v2081
        %2350 = vmatpush.bf16.xpose.msra.mxu0 %v2079
        %2351 = vmatpush.bf16.xpose.msra.mxu0 %v2077
        %2352 = vmatpush.bf16.xpose.msra.mxu0 %v2075
        %2353 = vmatpush.bf16.xpose.msra.mxu0 %v2073
        %2354 = vmatmul.bf16.gmra.mxu0 %v1013
        %v2355 = vpop.f32.mrf.mxu0
        %v2356 = vadd.f32 %v2302, %v2355
        %v2357 = vpop.f32.mrf.mxu0
        %v2358 = vadd.f32 %v2304, %v2357
        %2359 = vmatmul.bf16.gmra.mxu0 %v1015
        %v2360 = vpop.f32.mrf.mxu0
        %v2361 = vadd.f32 %v2307, %v2360
        %v2362 = vpop.f32.mrf.mxu0
        %v2363 = vadd.f32 %v2309, %v2362
        %2364 = vmatmul.bf16.gmra.mxu0 %v1017
        %v2365 = vpop.f32.mrf.mxu0
        %v2366 = vadd.f32 %v2312, %v2365
        %v2367 = vpop.f32.mrf.mxu0
        %v2368 = vadd.f32 %v2314, %v2367
        %2369 = vmatmul.bf16.gmra.mxu0 %v1019
        %v2370 = vpop.f32.mrf.mxu0
        %v2371 = vadd.f32 %v2317, %v2370
        %v2372 = vpop.f32.mrf.mxu0
        %v2373 = vadd.f32 %v2319, %v2372
        %2374 = vmatmul.bf16.gmra.mxu0 %v1021
        %v2375 = vpop.f32.mrf.mxu0
        %v2376 = vadd.f32 %v2322, %v2375
        %v2377 = vpop.f32.mrf.mxu0
        %v2378 = vadd.f32 %v2324, %v2377
        %2379 = vmatmul.bf16.gmra.mxu0 %v1023
        %v2380 = vpop.f32.mrf.mxu0
        %v2381 = vadd.f32 %v2327, %v2380
        %v2382 = vpop.f32.mrf.mxu0
        %v2383 = vadd.f32 %v2329, %v2382
        %2384 = vmatmul.bf16.gmra.mxu0 %v1025
        %v2385 = vpop.f32.mrf.mxu0
        %v2386 = vadd.f32 %v2332, %v2385
        %v2387 = vpop.f32.mrf.mxu0
        %v2388 = vadd.f32 %v2334, %v2387
        %2389 = vmatmul.bf16.gmra.mxu0 %v1027
        %v2390 = vpop.f32.mrf.mxu0
        %v2391 = vadd.f32 %v2337, %v2390
        %v2392 = vpop.f32.mrf.mxu0
        %v2393 = vadd.f32 %v2339, %v2392
        %2394 = vmatmul.bf16.gmra.mxu0 %v1029
        %v2395 = vpop.f32.mrf.mxu0
        %v2396 = vadd.f32 %v2342, %v2395
        %v2397 = vpop.f32.mrf.mxu0
        %v2398 = vadd.f32 %v2344, %v2397
        %2399 = vdwg.mxu0
        %2400 = vmatpush.bf16.xpose.msra.mxu0 %v2102
        %2401 = vmatpush.bf16.xpose.msra.mxu0 %v2100
        %2402 = vmatpush.bf16.xpose.msra.mxu0 %v2098
        %2403 = vmatpush.bf16.xpose.msra.mxu0 %v2096
        %2404 = vmatpush.bf16.xpose.msra.mxu0 %v2094
        %2405 = vmatpush.bf16.xpose.msra.mxu0 %v2092
        %2406 = vmatpush.bf16.xpose.msra.mxu0 %v2090
        %2407 = vmatpush.bf16.xpose.msra.mxu0 %v2088
        %2408 = vmatmul.bf16.gmra.mxu0 %v1012
        %v2409 = vpop.f32.mrf.mxu0
        %v2410 = vadd.f32 0.0, %v2409
        %v2411 = vpop.f32.mrf.mxu0
        %v2412 = vadd.f32 0.0, %v2411
        %2413 = vmatmul.bf16.gmra.mxu0 %v1014
        %v2414 = vpop.f32.mrf.mxu0
        %v2415 = vadd.f32 0.0, %v2414
        %v2416 = vpop.f32.mrf.mxu0
        %v2417 = vadd.f32 0.0, %v2416
        %2418 = vmatmul.bf16.gmra.mxu0 %v1016
        %v2419 = vpop.f32.mrf.mxu0
        %v2420 = vadd.f32 0.0, %v2419
        %v2421 = vpop.f32.mrf.mxu0
        %v2422 = vadd.f32 0.0, %v2421
        %2423 = vmatmul.bf16.gmra.mxu0 %v1018
        %v2424 = vpop.f32.mrf.mxu0
        %v2425 = vadd.f32 0.0, %v2424
        %v2426 = vpop.f32.mrf.mxu0
        %v2427 = vadd.f32 0.0, %v2426
        %2428 = vmatmul.bf16.gmra.mxu0 %v1020
        %v2429 = vpop.f32.mrf.mxu0
        %v2430 = vadd.f32 0.0, %v2429
        %v2431 = vpop.f32.mrf.mxu0
        %v2432 = vadd.f32 0.0, %v2431
        %2433 = vmatmul.bf16.gmra.mxu0 %v1022
        %v2434 = vpop.f32.mrf.mxu0
        %v2435 = vadd.f32 0.0, %v2434
        %v2436 = vpop.f32.mrf.mxu0
        %v2437 = vadd.f32 0.0, %v2436
        %2438 = vmatmul.bf16.gmra.mxu0 %v1024
        %v2439 = vpop.f32.mrf.mxu0
        %v2440 = vadd.f32 0.0, %v2439
        %v2441 = vpop.f32.mrf.mxu0
        %v2442 = vadd.f32 0.0, %v2441
        %2443 = vmatmul.bf16.gmra.mxu0 %v1026
        %v2444 = vpop.f32.mrf.mxu0
        %v2445 = vadd.f32 0.0, %v2444
        %v2446 = vpop.f32.mrf.mxu0
        %v2447 = vadd.f32 0.0, %v2446
        %2448 = vmatmul.bf16.gmra.mxu0 %v1028
        %v2449 = vpop.f32.mrf.mxu0
        %v2450 = vadd.f32 0.0, %v2449
        %v2451 = vpop.f32.mrf.mxu0
        %v2452 = vadd.f32 0.0, %v2451
        %2453 = vdwg.mxu0
        %2454 = vmatpush.bf16.xpose.msra.mxu0 %v2103
        %2455 = vmatpush.bf16.xpose.msra.mxu0 %v2101
        %2456 = vmatpush.bf16.xpose.msra.mxu0 %v2099
        %2457 = vmatpush.bf16.xpose.msra.mxu0 %v2097
        %2458 = vmatpush.bf16.xpose.msra.mxu0 %v2095
        %2459 = vmatpush.bf16.xpose.msra.mxu0 %v2093
        %2460 = vmatpush.bf16.xpose.msra.mxu0 %v2091
        %2461 = vmatpush.bf16.xpose.msra.mxu0 %v2089
        %2462 = vmatmul.bf16.gmra.mxu0 %v1013
        %v2463 = vpop.f32.mrf.mxu0
        %v2464 = vadd.f32 %v2410, %v2463
        %v2465 = vpop.f32.mrf.mxu0
        %v2466 = vadd.f32 %v2412, %v2465
        %2467 = vmatmul.bf16.gmra.mxu0 %v1015
        %v2468 = vpop.f32.mrf.mxu0
        %v2469 = vadd.f32 %v2415, %v2468
        %v2470 = vpop.f32.mrf.mxu0
        %v2471 = vadd.f32 %v2417, %v2470
        %2472 = vmatmul.bf16.gmra.mxu0 %v1017
        %v2473 = vpop.f32.mrf.mxu0
        %v2474 = vadd.f32 %v2420, %v2473
        %v2475 = vpop.f32.mrf.mxu0
        %v2476 = vadd.f32 %v2422, %v2475
        %2477 = vmatmul.bf16.gmra.mxu0 %v1019
        %v2478 = vpop.f32.mrf.mxu0
        %v2479 = vadd.f32 %v2425, %v2478
        %v2480 = vpop.f32.mrf.mxu0
        %v2481 = vadd.f32 %v2427, %v2480
        %2482 = vmatmul.bf16.gmra.mxu0 %v1021
        %v2483 = vpop.f32.mrf.mxu0
        %v2484 = vadd.f32 %v2430, %v2483
        %v2485 = vpop.f32.mrf.mxu0
        %v2486 = vadd.f32 %v2432, %v2485
        %2487 = vmatmul.bf16.gmra.mxu0 %v1023
        %v2488 = vpop.f32.mrf.mxu0
        %v2489 = vadd.f32 %v2435, %v2488
        %v2490 = vpop.f32.mrf.mxu0
        %v2491 = vadd.f32 %v2437, %v2490
        %2492 = vmatmul.bf16.gmra.mxu0 %v1025
        %v2493 = vpop.f32.mrf.mxu0
        %v2494 = vadd.f32 %v2440, %v2493
        %v2495 = vpop.f32.mrf.mxu0
        %v2496 = vadd.f32 %v2442, %v2495
        %2497 = vmatmul.bf16.gmra.mxu0 %v1027
        %v2498 = vpop.f32.mrf.mxu0
        %v2499 = vadd.f32 %v2445, %v2498
        %v2500 = vpop.f32.mrf.mxu0
        %v2501 = vadd.f32 %v2447, %v2500
        %2502 = vmatmul.bf16.gmra.mxu0 %v1029
        %v2503 = vpop.f32.mrf.mxu0
        %v2504 = vadd.f32 %v2450, %v2503
        %v2505 = vpop.f32.mrf.mxu0
        %v2506 = vadd.f32 %v2452, %v2505
        %2507 = vdwg.mxu0
        %2508 = vmatpush.bf16.xpose.msra.mxu0 %v2118
        %2509 = vmatpush.bf16.xpose.msra.mxu0 %v2116
        %2510 = vmatpush.bf16.xpose.msra.mxu0 %v2114
        %2511 = vmatpush.bf16.xpose.msra.mxu0 %v2112
        %2512 = vmatpush.bf16.xpose.msra.mxu0 %v2110
        %2513 = vmatpush.bf16.xpose.msra.mxu0 %v2108
        %2514 = vmatpush.bf16.xpose.msra.mxu0 %v2106
        %2515 = vmatpush.bf16.xpose.msra.mxu0 %v2104
        %2516 = vmatmul.bf16.gmra.mxu0 %v1012
        %v2517 = vpop.f32.mrf.mxu0
        %v2518 = vadd.f32 0.0, %v2517
        %v2519 = vpop.f32.mrf.mxu0
        %v2520 = vadd.f32 0.0, %v2519
        %2521 = vmatmul.bf16.gmra.mxu0 %v1014
        %v2522 = vpop.f32.mrf.mxu0
        %v2523 = vadd.f32 0.0, %v2522
        %v2524 = vpop.f32.mrf.mxu0
        %v2525 = vadd.f32 0.0, %v2524
        %2526 = vmatmul.bf16.gmra.mxu0 %v1016
        %v2527 = vpop.f32.mrf.mxu0
        %v2528 = vadd.f32 0.0, %v2527
        %v2529 = vpop.f32.mrf.mxu0
        %v2530 = vadd.f32 0.0, %v2529
        %2531 = vmatmul.bf16.gmra.mxu0 %v1018
        %v2532 = vpop.f32.mrf.mxu0
        %v2533 = vadd.f32 0.0, %v2532
        %v2534 = vpop.f32.mrf.mxu0
        %v2535 = vadd.f32 0.0, %v2534
        %2536 = vmatmul.bf16.gmra.mxu0 %v1020
        %v2537 = vpop.f32.mrf.mxu0
        %v2538 = vadd.f32 0.0, %v2537
        %v2539 = vpop.f32.mrf.mxu0
        %v2540 = vadd.f32 0.0, %v2539
        %2541 = vmatmul.bf16.gmra.mxu0 %v1022
        %v2542 = vpop.f32.mrf.mxu0
        %v2543 = vadd.f32 0.0, %v2542
        %v2544 = vpop.f32.mrf.mxu0
        %v2545 = vadd.f32 0.0, %v2544
        %2546 = vmatmul.bf16.gmra.mxu0 %v1024
        %v2547 = vpop.f32.mrf.mxu0
        %v2548 = vadd.f32 0.0, %v2547
        %v2549 = vpop.f32.mrf.mxu0
        %v2550 = vadd.f32 0.0, %v2549
        %2551 = vmatmul.bf16.gmra.mxu0 %v1026
        %v2552 = vpop.f32.mrf.mxu0
        %v2553 = vadd.f32 0.0, %v2552
        %v2554 = vpop.f32.mrf.mxu0
        %v2555 = vadd.f32 0.0, %v2554
        %2556 = vmatmul.bf16.gmra.mxu0 %v1028
        %v2557 = vpop.f32.mrf.mxu0
        %v2558 = vadd.f32 0.0, %v2557
        %v2559 = vpop.f32.mrf.mxu0
        %v2560 = vadd.f32 0.0, %v2559
        %2561 = vdwg.mxu0
        %2562 = vmatpush.bf16.xpose.msra.mxu0 %v2119
        %2563 = vmatpush.bf16.xpose.msra.mxu0 %v2117
        %2564 = vmatpush.bf16.xpose.msra.mxu0 %v2115
        %2565 = vmatpush.bf16.xpose.msra.mxu0 %v2113
        %2566 = vmatpush.bf16.xpose.msra.mxu0 %v2111
        %2567 = vmatpush.bf16.xpose.msra.mxu0 %v2109
        %2568 = vmatpush.bf16.xpose.msra.mxu0 %v2107
        %2569 = vmatpush.bf16.xpose.msra.mxu0 %v2105
        %2570 = vmatmul.bf16.gmra.mxu0 %v1013
        %v2571 = vpop.f32.mrf.mxu0
        %v2572 = vadd.f32 %v2518, %v2571
        %v2573 = vpop.f32.mrf.mxu0
        %v2574 = vadd.f32 %v2520, %v2573
        %2575 = vmatmul.bf16.gmra.mxu0 %v1015
        %v2576 = vpop.f32.mrf.mxu0
        %v2577 = vadd.f32 %v2523, %v2576
        %v2578 = vpop.f32.mrf.mxu0
        %v2579 = vadd.f32 %v2525, %v2578
        %2580 = vmatmul.bf16.gmra.mxu0 %v1017
        %v2581 = vpop.f32.mrf.mxu0
        %v2582 = vadd.f32 %v2528, %v2581
        %v2583 = vpop.f32.mrf.mxu0
        %v2584 = vadd.f32 %v2530, %v2583
        %2585 = vmatmul.bf16.gmra.mxu0 %v1019
        %v2586 = vpop.f32.mrf.mxu0
        %v2587 = vadd.f32 %v2533, %v2586
        %v2588 = vpop.f32.mrf.mxu0
        %v2589 = vadd.f32 %v2535, %v2588
        %2590 = vmatmul.bf16.gmra.mxu0 %v1021
        %v2591 = vpop.f32.mrf.mxu0
        %v2592 = vadd.f32 %v2538, %v2591
        %v2593 = vpop.f32.mrf.mxu0
        %v2594 = vadd.f32 %v2540, %v2593
        %2595 = vmatmul.bf16.gmra.mxu0 %v1023
        %v2596 = vpop.f32.mrf.mxu0
        %v2597 = vadd.f32 %v2543, %v2596
        %v2598 = vpop.f32.mrf.mxu0
        %v2599 = vadd.f32 %v2545, %v2598
        %2600 = vmatmul.bf16.gmra.mxu0 %v1025
        %v2601 = vpop.f32.mrf.mxu0
        %v2602 = vadd.f32 %v2548, %v2601
        %v2603 = vpop.f32.mrf.mxu0
        %v2604 = vadd.f32 %v2550, %v2603
        %2605 = vmatmul.bf16.gmra.mxu0 %v1027
        %v2606 = vpop.f32.mrf.mxu0
        %v2607 = vadd.f32 %v2553, %v2606
        %v2608 = vpop.f32.mrf.mxu0
        %v2609 = vadd.f32 %v2555, %v2608
        %2610 = vmatmul.bf16.gmra.mxu0 %v1029
        %v2611 = vpop.f32.mrf.mxu0
        %v2612 = vadd.f32 %v2558, %v2611
        %v2613 = vpop.f32.mrf.mxu0
        %v2614 = vadd.f32 %v2560, %v2613
        %2615 = vdwg.mxu0
        %v2616 = vxor.u32 %v1432, 2147483648
        %v2617 = vxor.u32 %v1540, 2147483648
        %v2618 = vxor.u32 %v1648, 2147483648
        %v2619 = vxor.u32 %v1756, 2147483648
        %v2620 = vxor.u32 %v1434, 2147483648
        %v2621 = vxor.u32 %v1542, 2147483648
        %v2622 = vxor.u32 %v1650, 2147483648
        %v2623 = vxor.u32 %v1758, 2147483648
        %v2624 = vxor.u32 %v1437, 2147483648
        %v2625 = vxor.u32 %v1545, 2147483648
        %v2626 = vxor.u32 %v1653, 2147483648
        %v2627 = vxor.u32 %v1761, 2147483648
        %v2628 = vxor.u32 %v1439, 2147483648
        %v2629 = vxor.u32 %v1547, 2147483648
        %v2630 = vxor.u32 %v1655, 2147483648
        %v2631 = vxor.u32 %v1763, 2147483648
        %v2632 = vxor.u32 %v1442, 2147483648
        %v2633 = vxor.u32 %v1550, 2147483648
        %v2634 = vxor.u32 %v1658, 2147483648
        %v2635 = vxor.u32 %v1766, 2147483648
        %v2636 = vxor.u32 %v1444, 2147483648
        %v2637 = vxor.u32 %v1552, 2147483648
        %v2638 = vxor.u32 %v1660, 2147483648
        %v2639 = vxor.u32 %v1768, 2147483648
        %v2640 = vxor.u32 %v1447, 2147483648
        %v2641 = vxor.u32 %v1555, 2147483648
        %v2642 = vxor.u32 %v1663, 2147483648
        %v2643 = vxor.u32 %v1771, 2147483648
        %v2644 = vxor.u32 %v1449, 2147483648
        %v2645 = vxor.u32 %v1557, 2147483648
        %v2646 = vxor.u32 %v1665, 2147483648
        %v2647 = vxor.u32 %v1773, 2147483648
        %v2648 = vxor.u32 %v1452, 2147483648
        %v2649 = vxor.u32 %v1560, 2147483648
        %v2650 = vxor.u32 %v1668, 2147483648
        %v2651 = vxor.u32 %v1776, 2147483648
        %v2652 = vxor.u32 %v1454, 2147483648
        %v2653 = vxor.u32 %v1562, 2147483648
        %v2654 = vxor.u32 %v1670, 2147483648
        %v2655 = vxor.u32 %v1778, 2147483648
        %v2656 = vxor.u32 %v1457, 2147483648
        %v2657 = vxor.u32 %v1565, 2147483648
        %v2658 = vxor.u32 %v1673, 2147483648
        %v2659 = vxor.u32 %v1781, 2147483648
        %v2660 = vxor.u32 %v1459, 2147483648
        %v2661 = vxor.u32 %v1567, 2147483648
        %v2662 = vxor.u32 %v1675, 2147483648
        %v2663 = vxor.u32 %v1783, 2147483648
        %v2664 = vxor.u32 %v1462, 2147483648
        %v2665 = vxor.u32 %v1570, 2147483648
        %v2666 = vxor.u32 %v1678, 2147483648
        %v2667 = vxor.u32 %v1786, 2147483648
        %v2668 = vxor.u32 %v1464, 2147483648
        %v2669 = vxor.u32 %v1572, 2147483648
        %v2670 = vxor.u32 %v1680, 2147483648
        %v2671 = vxor.u32 %v1788, 2147483648
        %v2672 = vxor.u32 %v1467, 2147483648
        %v2673 = vxor.u32 %v1575, 2147483648
        %v2674 = vxor.u32 %v1683, 2147483648
        %v2675 = vxor.u32 %v1791, 2147483648
        %v2676 = vxor.u32 %v1469, 2147483648
        %v2677 = vxor.u32 %v1577, 2147483648
        %v2678 = vxor.u32 %v1685, 2147483648
        %v2679 = vxor.u32 %v1793, 2147483648
        %v2680 = vxor.u32 %v1472, 2147483648
        %v2681 = vxor.u32 %v1580, 2147483648
        %v2682 = vxor.u32 %v1688, 2147483648
        %v2683 = vxor.u32 %v1796, 2147483648
        %v2684 = vxor.u32 %v1474, 2147483648
        %v2685 = vxor.u32 %v1582, 2147483648
        %v2686 = vxor.u32 %v1690, 2147483648
        %v2687 = vxor.u32 %v1798, 2147483648
        %v2688 = vmul.f32 %v2616, 1.442695
        %v2689 = vpow.pop %v2688
        %v2690 = vmul.f32 %v2617, 1.442695
        %v2691 = vpow.pop %v2690
        %v2692 = vmul.f32 %v2618, 1.442695
        %v2693 = vpow.pop %v2692
        %v2694 = vmul.f32 %v2619, 1.442695
        %v2695 = vpow.pop %v2694
        %v2696 = vmul.f32 %v2620, 1.442695
        %v2697 = vpow.pop %v2696
        %v2698 = vmul.f32 %v2621, 1.442695
        %v2699 = vpow.pop %v2698
        %v2700 = vmul.f32 %v2622, 1.442695
        %v2701 = vpow.pop %v2700
        %v2702 = vmul.f32 %v2623, 1.442695
        %v2703 = vpow.pop %v2702
        %v2704 = vmul.f32 %v2624, 1.442695
        %v2705 = vpow.pop %v2704
        %v2706 = vmul.f32 %v2625, 1.442695
        %v2707 = vpow.pop %v2706
        %v2708 = vmul.f32 %v2626, 1.442695
        %v2709 = vpow.pop %v2708
        %v2710 = vmul.f32 %v2627, 1.442695
        %v2711 = vpow.pop %v2710
        %v2712 = vmul.f32 %v2628, 1.442695
        %v2713 = vpow.pop %v2712
        %v2714 = vmul.f32 %v2629, 1.442695
        %v2715 = vpow.pop %v2714
        %v2716 = vmul.f32 %v2630, 1.442695
        %v2717 = vpow.pop %v2716
        %v2718 = vmul.f32 %v2631, 1.442695
        %v2719 = vpow.pop %v2718
        %v2720 = vmul.f32 %v2632, 1.442695
        %v2721 = vpow.pop %v2720
        %v2722 = vmul.f32 %v2633, 1.442695
        %v2723 = vpow.pop %v2722
        %v2724 = vmul.f32 %v2634, 1.442695
        %v2725 = vpow.pop %v2724
        %v2726 = vmul.f32 %v2635, 1.442695
        %v2727 = vpow.pop %v2726
        %v2728 = vmul.f32 %v2636, 1.442695
        %v2729 = vpow.pop %v2728
        %v2730 = vmul.f32 %v2637, 1.442695
        %v2731 = vpow.pop %v2730
        %v2732 = vmul.f32 %v2638, 1.442695
        %v2733 = vpow.pop %v2732
        %v2734 = vmul.f32 %v2639, 1.442695
        %v2735 = vpow.pop %v2734
        %v2736 = vmul.f32 %v2640, 1.442695
        %v2737 = vpow.pop %v2736
        %v2738 = vmul.f32 %v2641, 1.442695
        %v2739 = vpow.pop %v2738
        %v2740 = vmul.f32 %v2642, 1.442695
        %v2741 = vpow.pop %v2740
        %v2742 = vmul.f32 %v2643, 1.442695
        %v2743 = vpow.pop %v2742
        %v2744 = vmul.f32 %v2644, 1.442695
        %v2745 = vpow.pop %v2744
        %v2746 = vmul.f32 %v2645, 1.442695
        %v2747 = vpow.pop %v2746
        %v2748 = vmul.f32 %v2646, 1.442695
        %v2749 = vpow.pop %v2748
        %v2750 = vmul.f32 %v2647, 1.442695
        %v2751 = vpow.pop %v2750
        %v2752 = vmul.f32 %v2648, 1.442695
        %v2753 = vpow.pop %v2752
        %v2754 = vmul.f32 %v2649, 1.442695
        %v2755 = vpow.pop %v2754
        %v2756 = vmul.f32 %v2650, 1.442695
        %v2757 = vpow.pop %v2756
        %v2758 = vmul.f32 %v2651, 1.442695
        %v2759 = vpow.pop %v2758
        %v2760 = vmul.f32 %v2652, 1.442695
        %v2761 = vpow.pop %v2760
        %v2762 = vmul.f32 %v2653, 1.442695
        %v2763 = vpow.pop %v2762
        %v2764 = vmul.f32 %v2654, 1.442695
        %v2765 = vpow.pop %v2764
        %v2766 = vmul.f32 %v2655, 1.442695
        %v2767 = vpow.pop %v2766
        %v2768 = vmul.f32 %v2656, 1.442695
        %v2769 = vpow.pop %v2768
        %v2770 = vmul.f32 %v2657, 1.442695
        %v2771 = vpow.pop %v2770
        %v2772 = vmul.f32 %v2658, 1.442695
        %v2773 = vpow.pop %v2772
        %v2774 = vmul.f32 %v2659, 1.442695
        %v2775 = vpow.pop %v2774
        %v2776 = vmul.f32 %v2660, 1.442695
        %v2777 = vpow.pop %v2776
        %v2778 = vmul.f32 %v2661, 1.442695
        %v2779 = vpow.pop %v2778
        %v2780 = vmul.f32 %v2662, 1.442695
        %v2781 = vpow.pop %v2780
        %v2782 = vmul.f32 %v2663, 1.442695
        %v2783 = vpow.pop %v2782
        %v2784 = vmul.f32 %v2664, 1.442695
        %v2785 = vpow.pop %v2784
        %v2786 = vmul.f32 %v2665, 1.442695
        %v2787 = vpow.pop %v2786
        %v2788 = vmul.f32 %v2666, 1.442695
        %v2789 = vpow.pop %v2788
        %v2790 = vmul.f32 %v2667, 1.442695
        %v2791 = vpow.pop %v2790
        %v2792 = vmul.f32 %v2668, 1.442695
        %v2793 = vpow.pop %v2792
        %v2794 = vmul.f32 %v2669, 1.442695
        %v2795 = vpow.pop %v2794
        %v2796 = vmul.f32 %v2670, 1.442695
        %v2797 = vpow.pop %v2796
        %v2798 = vmul.f32 %v2671, 1.442695
        %v2799 = vpow.pop %v2798
        %v2800 = vmul.f32 %v2672, 1.442695
        %v2801 = vpow.pop %v2800
        %v2802 = vmul.f32 %v2673, 1.442695
        %v2803 = vpow.pop %v2802
        %v2804 = vmul.f32 %v2674, 1.442695
        %v2805 = vpow.pop %v2804
        %v2806 = vmul.f32 %v2675, 1.442695
        %v2807 = vpow.pop %v2806
        %v2808 = vmul.f32 %v2676, 1.442695
        %v2809 = vpow.pop %v2808
        %v2810 = vmul.f32 %v2677, 1.442695
        %v2811 = vpow.pop %v2810
        %v2812 = vmul.f32 %v2678, 1.442695
        %v2813 = vpow.pop %v2812
        %v2814 = vmul.f32 %v2679, 1.442695
        %v2815 = vpow.pop %v2814
        %v2816 = vmul.f32 %v2680, 1.442695
        %v2817 = vpow.pop %v2816
        %v2818 = vmul.f32 %v2681, 1.442695
        %v2819 = vpow.pop %v2818
        %v2820 = vmul.f32 %v2682, 1.442695
        %v2821 = vpow.pop %v2820
        %v2822 = vmul.f32 %v2683, 1.442695
        %v2823 = vpow.pop %v2822
        %v2824 = vmul.f32 %v2684, 1.442695
        %v2825 = vpow.pop %v2824
        %v2826 = vmul.f32 %v2685, 1.442695
        %v2827 = vpow.pop %v2826
        %v2828 = vmul.f32 %v2686, 1.442695
        %v2829 = vpow.pop %v2828
        %v2830 = vmul.f32 %v2687, 1.442695
        %v2831 = vpow.pop %v2830
        %v2832 = vadd.f32 %v2689, 1.0
        %v2833 = vadd.f32 %v2691, 1.0
        %v2834 = vadd.f32 %v2693, 1.0
        %v2835 = vadd.f32 %v2695, 1.0
        %v2836 = vadd.f32 %v2697, 1.0
        %v2837 = vadd.f32 %v2699, 1.0
        %v2838 = vadd.f32 %v2701, 1.0
        %v2839 = vadd.f32 %v2703, 1.0
        %v2840 = vadd.f32 %v2705, 1.0
        %v2841 = vadd.f32 %v2707, 1.0
        %v2842 = vadd.f32 %v2709, 1.0
        %v2843 = vadd.f32 %v2711, 1.0
        %v2844 = vadd.f32 %v2713, 1.0
        %v2845 = vadd.f32 %v2715, 1.0
        %v2846 = vadd.f32 %v2717, 1.0
        %v2847 = vadd.f32 %v2719, 1.0
        %v2848 = vadd.f32 %v2721, 1.0
        %v2849 = vadd.f32 %v2723, 1.0
        %v2850 = vadd.f32 %v2725, 1.0
        %v2851 = vadd.f32 %v2727, 1.0
        %v2852 = vadd.f32 %v2729, 1.0
        %v2853 = vadd.f32 %v2731, 1.0
        %v2854 = vadd.f32 %v2733, 1.0
        %v2855 = vadd.f32 %v2735, 1.0
        %v2856 = vadd.f32 %v2737, 1.0
        %v2857 = vadd.f32 %v2739, 1.0
        %v2858 = vadd.f32 %v2741, 1.0
        %v2859 = vadd.f32 %v2743, 1.0
        %v2860 = vadd.f32 %v2745, 1.0
        %v2861 = vadd.f32 %v2747, 1.0
        %v2862 = vadd.f32 %v2749, 1.0
        %v2863 = vadd.f32 %v2751, 1.0
        %v2864 = vadd.f32 %v2753, 1.0
        %v2865 = vadd.f32 %v2755, 1.0
        %v2866 = vadd.f32 %v2757, 1.0
        %v2867 = vadd.f32 %v2759, 1.0
        %v2868 = vadd.f32 %v2761, 1.0
        %v2869 = vadd.f32 %v2763, 1.0
        %v2870 = vadd.f32 %v2765, 1.0
        %v2871 = vadd.f32 %v2767, 1.0
        %v2872 = vadd.f32 %v2769, 1.0
        %v2873 = vadd.f32 %v2771, 1.0
        %v2874 = vadd.f32 %v2773, 1.0
        %v2875 = vadd.f32 %v2775, 1.0
        %v2876 = vadd.f32 %v2777, 1.0
        %v2877 = vadd.f32 %v2779, 1.0
        %v2878 = vadd.f32 %v2781, 1.0
        %v2879 = vadd.f32 %v2783, 1.0
        %v2880 = vadd.f32 %v2785, 1.0
        %v2881 = vadd.f32 %v2787, 1.0
        %v2882 = vadd.f32 %v2789, 1.0
        %v2883 = vadd.f32 %v2791, 1.0
        %v2884 = vadd.f32 %v2793, 1.0
        %v2885 = vadd.f32 %v2795, 1.0
        %v2886 = vadd.f32 %v2797, 1.0
        %v2887 = vadd.f32 %v2799, 1.0
        %v2888 = vadd.f32 %v2801, 1.0
        %v2889 = vadd.f32 %v2803, 1.0
        %v2890 = vadd.f32 %v2805, 1.0
        %v2891 = vadd.f32 %v2807, 1.0
        %v2892 = vadd.f32 %v2809, 1.0
        %v2893 = vadd.f32 %v2811, 1.0
        %v2894 = vadd.f32 %v2813, 1.0
        %v2895 = vadd.f32 %v2815, 1.0
        %v2896 = vadd.f32 %v2817, 1.0
        %v2897 = vadd.f32 %v2819, 1.0
        %v2898 = vadd.f32 %v2821, 1.0
        %v2899 = vadd.f32 %v2823, 1.0
        %v2900 = vadd.f32 %v2825, 1.0
        %v2901 = vadd.f32 %v2827, 1.0
        %v2902 = vadd.f32 %v2829, 1.0
        %v2903 = vadd.f32 %v2831, 1.0
        %v2904 = vrcp.pop %v2832
        %v2905 = vmul.f32 %v2832, %v2904
        %v2906 = vsub.f32 1.0, %v2905
        %v2907 = vmul.f32 %v2904, %v2906
        %v2908 = vadd.f32 %v2904, %v2907
        %vm2909 = vweird.f32 %v2832
        %vm2910 = vweird.f32 %v2904
        %vm2911 = vmor %vm2909, %vm2910
        %v2912 = vsel %vm2911, %v2904, %v2908
        %v2913 = vand.u32 2147483647, %v2832
        %vm2914 = vcmp.eq.f32.partialorder %v2913, 8.507059e+37
        %v2915 = vand.u32 %v2832, 2147483648
        %v2916 = vor.u32 1.1754944e-38, %v2915
        %v2917 = vsel %vm2914, %v2916, %v2912
        %v2918 = vmul.f32 1.0, %v2917
        %v2919 = vrcp.pop %v2833
        %v2920 = vmul.f32 %v2833, %v2919
        %v2921 = vsub.f32 1.0, %v2920
        %v2922 = vmul.f32 %v2919, %v2921
        %v2923 = vadd.f32 %v2919, %v2922
        %vm2924 = vweird.f32 %v2833
        %vm2925 = vweird.f32 %v2919
        %vm2926 = vmor %vm2924, %vm2925
        %v2927 = vsel %vm2926, %v2919, %v2923
        %v2928 = vand.u32 2147483647, %v2833
        %vm2929 = vcmp.eq.f32.partialorder %v2928, 8.507059e+37
        %v2930 = vand.u32 %v2833, 2147483648
        %v2931 = vor.u32 1.1754944e-38, %v2930
        %v2932 = vsel %vm2929, %v2931, %v2927
        %v2933 = vmul.f32 1.0, %v2932
        %v2934 = vrcp.pop %v2834
        %v2935 = vmul.f32 %v2834, %v2934
        %v2936 = vsub.f32 1.0, %v2935
        %v2937 = vmul.f32 %v2934, %v2936
        %v2938 = vadd.f32 %v2934, %v2937
        %vm2939 = vweird.f32 %v2834
        %vm2940 = vweird.f32 %v2934
        %vm2941 = vmor %vm2939, %vm2940
        %v2942 = vsel %vm2941, %v2934, %v2938
        %v2943 = vand.u32 2147483647, %v2834
        %vm2944 = vcmp.eq.f32.partialorder %v2943, 8.507059e+37
        %v2945 = vand.u32 %v2834, 2147483648
        %v2946 = vor.u32 1.1754944e-38, %v2945
        %v2947 = vsel %vm2944, %v2946, %v2942
        %v2948 = vmul.f32 1.0, %v2947
        %v2949 = vrcp.pop %v2835
        %v2950 = vmul.f32 %v2835, %v2949
        %v2951 = vsub.f32 1.0, %v2950
        %v2952 = vmul.f32 %v2949, %v2951
        %v2953 = vadd.f32 %v2949, %v2952
        %vm2954 = vweird.f32 %v2835
        %vm2955 = vweird.f32 %v2949
        %vm2956 = vmor %vm2954, %vm2955
        %v2957 = vsel %vm2956, %v2949, %v2953
        %v2958 = vand.u32 2147483647, %v2835
        %vm2959 = vcmp.eq.f32.partialorder %v2958, 8.507059e+37
        %v2960 = vand.u32 %v2835, 2147483648
        %v2961 = vor.u32 1.1754944e-38, %v2960
        %v2962 = vsel %vm2959, %v2961, %v2957
        %v2963 = vmul.f32 1.0, %v2962
        %v2964 = vrcp.pop %v2836
        %v2965 = vmul.f32 %v2836, %v2964
        %v2966 = vsub.f32 1.0, %v2965
        %v2967 = vmul.f32 %v2964, %v2966
        %v2968 = vadd.f32 %v2964, %v2967
        %vm2969 = vweird.f32 %v2836
        %vm2970 = vweird.f32 %v2964
        %vm2971 = vmor %vm2969, %vm2970
        %v2972 = vsel %vm2971, %v2964, %v2968
        %v2973 = vand.u32 2147483647, %v2836
        %vm2974 = vcmp.eq.f32.partialorder %v2973, 8.507059e+37
        %v2975 = vand.u32 %v2836, 2147483648
        %v2976 = vor.u32 1.1754944e-38, %v2975
        %v2977 = vsel %vm2974, %v2976, %v2972
        %v2978 = vmul.f32 1.0, %v2977
        %v2979 = vrcp.pop %v2837
        %v2980 = vmul.f32 %v2837, %v2979
        %v2981 = vsub.f32 1.0, %v2980
        %v2982 = vmul.f32 %v2979, %v2981
        %v2983 = vadd.f32 %v2979, %v2982
        %vm2984 = vweird.f32 %v2837
        %vm2985 = vweird.f32 %v2979
        %vm2986 = vmor %vm2984, %vm2985
        %v2987 = vsel %vm2986, %v2979, %v2983
        %v2988 = vand.u32 2147483647, %v2837
        %vm2989 = vcmp.eq.f32.partialorder %v2988, 8.507059e+37
        %v2990 = vand.u32 %v2837, 2147483648
        %v2991 = vor.u32 1.1754944e-38, %v2990
        %v2992 = vsel %vm2989, %v2991, %v2987
        %v2993 = vmul.f32 1.0, %v2992
        %v2994 = vrcp.pop %v2838
        %v2995 = vmul.f32 %v2838, %v2994
        %v2996 = vsub.f32 1.0, %v2995
        %v2997 = vmul.f32 %v2994, %v2996
        %v2998 = vadd.f32 %v2994, %v2997
        %vm2999 = vweird.f32 %v2838
        %vm3000 = vweird.f32 %v2994
        %vm3001 = vmor %vm2999, %vm3000
        %v3002 = vsel %vm3001, %v2994, %v2998
        %v3003 = vand.u32 2147483647, %v2838
        %vm3004 = vcmp.eq.f32.partialorder %v3003, 8.507059e+37
        %v3005 = vand.u32 %v2838, 2147483648
        %v3006 = vor.u32 1.1754944e-38, %v3005
        %v3007 = vsel %vm3004, %v3006, %v3002
        %v3008 = vmul.f32 1.0, %v3007
        %v3009 = vrcp.pop %v2839
        %v3010 = vmul.f32 %v2839, %v3009
        %v3011 = vsub.f32 1.0, %v3010
        %v3012 = vmul.f32 %v3009, %v3011
        %v3013 = vadd.f32 %v3009, %v3012
        %vm3014 = vweird.f32 %v2839
        %vm3015 = vweird.f32 %v3009
        %vm3016 = vmor %vm3014, %vm3015
        %v3017 = vsel %vm3016, %v3009, %v3013
        %v3018 = vand.u32 2147483647, %v2839
        %vm3019 = vcmp.eq.f32.partialorder %v3018, 8.507059e+37
        %v3020 = vand.u32 %v2839, 2147483648
        %v3021 = vor.u32 1.1754944e-38, %v3020
        %v3022 = vsel %vm3019, %v3021, %v3017
        %v3023 = vmul.f32 1.0, %v3022
        %v3024 = vrcp.pop %v2840
        %v3025 = vmul.f32 %v2840, %v3024
        %v3026 = vsub.f32 1.0, %v3025
        %v3027 = vmul.f32 %v3024, %v3026
        %v3028 = vadd.f32 %v3024, %v3027
        %vm3029 = vweird.f32 %v2840
        %vm3030 = vweird.f32 %v3024
        %vm3031 = vmor %vm3029, %vm3030
        %v3032 = vsel %vm3031, %v3024, %v3028
        %v3033 = vand.u32 2147483647, %v2840
        %vm3034 = vcmp.eq.f32.partialorder %v3033, 8.507059e+37
        %v3035 = vand.u32 %v2840, 2147483648
        %v3036 = vor.u32 1.1754944e-38, %v3035
        %v3037 = vsel %vm3034, %v3036, %v3032
        %v3038 = vmul.f32 1.0, %v3037
        %v3039 = vrcp.pop %v2841
        %v3040 = vmul.f32 %v2841, %v3039
        %v3041 = vsub.f32 1.0, %v3040
        %v3042 = vmul.f32 %v3039, %v3041
        %v3043 = vadd.f32 %v3039, %v3042
        %vm3044 = vweird.f32 %v2841
        %vm3045 = vweird.f32 %v3039
        %vm3046 = vmor %vm3044, %vm3045
        %v3047 = vsel %vm3046, %v3039, %v3043
        %v3048 = vand.u32 2147483647, %v2841
        %vm3049 = vcmp.eq.f32.partialorder %v3048, 8.507059e+37
        %v3050 = vand.u32 %v2841, 2147483648
        %v3051 = vor.u32 1.1754944e-38, %v3050
        %v3052 = vsel %vm3049, %v3051, %v3047
        %v3053 = vmul.f32 1.0, %v3052
        %v3054 = vrcp.pop %v2842
        %v3055 = vmul.f32 %v2842, %v3054
        %v3056 = vsub.f32 1.0, %v3055
        %v3057 = vmul.f32 %v3054, %v3056
        %v3058 = vadd.f32 %v3054, %v3057
        %vm3059 = vweird.f32 %v2842
        %vm3060 = vweird.f32 %v3054
        %vm3061 = vmor %vm3059, %vm3060
        %v3062 = vsel %vm3061, %v3054, %v3058
        %v3063 = vand.u32 2147483647, %v2842
        %vm3064 = vcmp.eq.f32.partialorder %v3063, 8.507059e+37
        %v3065 = vand.u32 %v2842, 2147483648
        %v3066 = vor.u32 1.1754944e-38, %v3065
        %v3067 = vsel %vm3064, %v3066, %v3062
        %v3068 = vmul.f32 1.0, %v3067
        %v3069 = vrcp.pop %v2843
        %v3070 = vmul.f32 %v2843, %v3069
        %v3071 = vsub.f32 1.0, %v3070
        %v3072 = vmul.f32 %v3069, %v3071
        %v3073 = vadd.f32 %v3069, %v3072
        %vm3074 = vweird.f32 %v2843
        %vm3075 = vweird.f32 %v3069
        %vm3076 = vmor %vm3074, %vm3075
        %v3077 = vsel %vm3076, %v3069, %v3073
        %v3078 = vand.u32 2147483647, %v2843
        %vm3079 = vcmp.eq.f32.partialorder %v3078, 8.507059e+37
        %v3080 = vand.u32 %v2843, 2147483648
        %v3081 = vor.u32 1.1754944e-38, %v3080
        %v3082 = vsel %vm3079, %v3081, %v3077
        %v3083 = vmul.f32 1.0, %v3082
        %v3084 = vrcp.pop %v2844
        %v3085 = vmul.f32 %v2844, %v3084
        %v3086 = vsub.f32 1.0, %v3085
        %v3087 = vmul.f32 %v3084, %v3086
        %v3088 = vadd.f32 %v3084, %v3087
        %vm3089 = vweird.f32 %v2844
        %vm3090 = vweird.f32 %v3084
        %vm3091 = vmor %vm3089, %vm3090
        %v3092 = vsel %vm3091, %v3084, %v3088
        %v3093 = vand.u32 2147483647, %v2844
        %vm3094 = vcmp.eq.f32.partialorder %v3093, 8.507059e+37
        %v3095 = vand.u32 %v2844, 2147483648
        %v3096 = vor.u32 1.1754944e-38, %v3095
        %v3097 = vsel %vm3094, %v3096, %v3092
        %v3098 = vmul.f32 1.0, %v3097
        %v3099 = vrcp.pop %v2845
        %v3100 = vmul.f32 %v2845, %v3099
        %v3101 = vsub.f32 1.0, %v3100
        %v3102 = vmul.f32 %v3099, %v3101
        %v3103 = vadd.f32 %v3099, %v3102
        %vm3104 = vweird.f32 %v2845
        %vm3105 = vweird.f32 %v3099
        %vm3106 = vmor %vm3104, %vm3105
        %v3107 = vsel %vm3106, %v3099, %v3103
        %v3108 = vand.u32 2147483647, %v2845
        %vm3109 = vcmp.eq.f32.partialorder %v3108, 8.507059e+37
        %v3110 = vand.u32 %v2845, 2147483648
        %v3111 = vor.u32 1.1754944e-38, %v3110
        %v3112 = vsel %vm3109, %v3111, %v3107
        %v3113 = vmul.f32 1.0, %v3112
        %v3114 = vrcp.pop %v2846
        %v3115 = vmul.f32 %v2846, %v3114
        %v3116 = vsub.f32 1.0, %v3115
        %v3117 = vmul.f32 %v3114, %v3116
        %v3118 = vadd.f32 %v3114, %v3117
        %vm3119 = vweird.f32 %v2846
        %vm3120 = vweird.f32 %v3114
        %vm3121 = vmor %vm3119, %vm3120
        %v3122 = vsel %vm3121, %v3114, %v3118
        %v3123 = vand.u32 2147483647, %v2846
        %vm3124 = vcmp.eq.f32.partialorder %v3123, 8.507059e+37
        %v3125 = vand.u32 %v2846, 2147483648
        %v3126 = vor.u32 1.1754944e-38, %v3125
        %v3127 = vsel %vm3124, %v3126, %v3122
        %v3128 = vmul.f32 1.0, %v3127
        %v3129 = vrcp.pop %v2847
        %v3130 = vmul.f32 %v2847, %v3129
        %v3131 = vsub.f32 1.0, %v3130
        %v3132 = vmul.f32 %v3129, %v3131
        %v3133 = vadd.f32 %v3129, %v3132
        %vm3134 = vweird.f32 %v2847
        %vm3135 = vweird.f32 %v3129
        %vm3136 = vmor %vm3134, %vm3135
        %v3137 = vsel %vm3136, %v3129, %v3133
        %v3138 = vand.u32 2147483647, %v2847
        %vm3139 = vcmp.eq.f32.partialorder %v3138, 8.507059e+37
        %v3140 = vand.u32 %v2847, 2147483648
        %v3141 = vor.u32 1.1754944e-38, %v3140
        %v3142 = vsel %vm3139, %v3141, %v3137
        %v3143 = vmul.f32 1.0, %v3142
        %v3144 = vrcp.pop %v2848
        %v3145 = vmul.f32 %v2848, %v3144
        %v3146 = vsub.f32 1.0, %v3145
        %v3147 = vmul.f32 %v3144, %v3146
        %v3148 = vadd.f32 %v3144, %v3147
        %vm3149 = vweird.f32 %v2848
        %vm3150 = vweird.f32 %v3144
        %vm3151 = vmor %vm3149, %vm3150
        %v3152 = vsel %vm3151, %v3144, %v3148
        %v3153 = vand.u32 2147483647, %v2848
        %vm3154 = vcmp.eq.f32.partialorder %v3153, 8.507059e+37
        %v3155 = vand.u32 %v2848, 2147483648
        %v3156 = vor.u32 1.1754944e-38, %v3155
        %v3157 = vsel %vm3154, %v3156, %v3152
        %v3158 = vmul.f32 1.0, %v3157
        %v3159 = vrcp.pop %v2849
        %v3160 = vmul.f32 %v2849, %v3159
        %v3161 = vsub.f32 1.0, %v3160
        %v3162 = vmul.f32 %v3159, %v3161
        %v3163 = vadd.f32 %v3159, %v3162
        %vm3164 = vweird.f32 %v2849
        %vm3165 = vweird.f32 %v3159
        %vm3166 = vmor %vm3164, %vm3165
        %v3167 = vsel %vm3166, %v3159, %v3163
        %v3168 = vand.u32 2147483647, %v2849
        %vm3169 = vcmp.eq.f32.partialorder %v3168, 8.507059e+37
        %v3170 = vand.u32 %v2849, 2147483648
        %v3171 = vor.u32 1.1754944e-38, %v3170
        %v3172 = vsel %vm3169, %v3171, %v3167
        %v3173 = vmul.f32 1.0, %v3172
        %v3174 = vrcp.pop %v2850
        %v3175 = vmul.f32 %v2850, %v3174
        %v3176 = vsub.f32 1.0, %v3175
        %v3177 = vmul.f32 %v3174, %v3176
        %v3178 = vadd.f32 %v3174, %v3177
        %vm3179 = vweird.f32 %v2850
        %vm3180 = vweird.f32 %v3174
        %vm3181 = vmor %vm3179, %vm3180
        %v3182 = vsel %vm3181, %v3174, %v3178
        %v3183 = vand.u32 2147483647, %v2850
        %vm3184 = vcmp.eq.f32.partialorder %v3183, 8.507059e+37
        %v3185 = vand.u32 %v2850, 2147483648
        %v3186 = vor.u32 1.1754944e-38, %v3185
        %v3187 = vsel %vm3184, %v3186, %v3182
        %v3188 = vmul.f32 1.0, %v3187
        %v3189 = vrcp.pop %v2851
        %v3190 = vmul.f32 %v2851, %v3189
        %v3191 = vsub.f32 1.0, %v3190
        %v3192 = vmul.f32 %v3189, %v3191
        %v3193 = vadd.f32 %v3189, %v3192
        %vm3194 = vweird.f32 %v2851
        %vm3195 = vweird.f32 %v3189
        %vm3196 = vmor %vm3194, %vm3195
        %v3197 = vsel %vm3196, %v3189, %v3193
        %v3198 = vand.u32 2147483647, %v2851
        %vm3199 = vcmp.eq.f32.partialorder %v3198, 8.507059e+37
        %v3200 = vand.u32 %v2851, 2147483648
        %v3201 = vor.u32 1.1754944e-38, %v3200
        %v3202 = vsel %vm3199, %v3201, %v3197
        %v3203 = vmul.f32 1.0, %v3202
        %v3204 = vrcp.pop %v2852
        %v3205 = vmul.f32 %v2852, %v3204
        %v3206 = vsub.f32 1.0, %v3205
        %v3207 = vmul.f32 %v3204, %v3206
        %v3208 = vadd.f32 %v3204, %v3207
        %vm3209 = vweird.f32 %v2852
        %vm3210 = vweird.f32 %v3204
        %vm3211 = vmor %vm3209, %vm3210
        %v3212 = vsel %vm3211, %v3204, %v3208
        %v3213 = vand.u32 2147483647, %v2852
        %vm3214 = vcmp.eq.f32.partialorder %v3213, 8.507059e+37
        %v3215 = vand.u32 %v2852, 2147483648
        %v3216 = vor.u32 1.1754944e-38, %v3215
        %v3217 = vsel %vm3214, %v3216, %v3212
        %v3218 = vmul.f32 1.0, %v3217
        %v3219 = vrcp.pop %v2853
        %v3220 = vmul.f32 %v2853, %v3219
        %v3221 = vsub.f32 1.0, %v3220
        %v3222 = vmul.f32 %v3219, %v3221
        %v3223 = vadd.f32 %v3219, %v3222
        %vm3224 = vweird.f32 %v2853
        %vm3225 = vweird.f32 %v3219
        %vm3226 = vmor %vm3224, %vm3225
        %v3227 = vsel %vm3226, %v3219, %v3223
        %v3228 = vand.u32 2147483647, %v2853
        %vm3229 = vcmp.eq.f32.partialorder %v3228, 8.507059e+37
        %v3230 = vand.u32 %v2853, 2147483648
        %v3231 = vor.u32 1.1754944e-38, %v3230
        %v3232 = vsel %vm3229, %v3231, %v3227
        %v3233 = vmul.f32 1.0, %v3232
        %v3234 = vrcp.pop %v2854
        %v3235 = vmul.f32 %v2854, %v3234
        %v3236 = vsub.f32 1.0, %v3235
        %v3237 = vmul.f32 %v3234, %v3236
        %v3238 = vadd.f32 %v3234, %v3237
        %vm3239 = vweird.f32 %v2854
        %vm3240 = vweird.f32 %v3234
        %vm3241 = vmor %vm3239, %vm3240
        %v3242 = vsel %vm3241, %v3234, %v3238
        %v3243 = vand.u32 2147483647, %v2854
        %vm3244 = vcmp.eq.f32.partialorder %v3243, 8.507059e+37
        %v3245 = vand.u32 %v2854, 2147483648
        %v3246 = vor.u32 1.1754944e-38, %v3245
        %v3247 = vsel %vm3244, %v3246, %v3242
        %v3248 = vmul.f32 1.0, %v3247
        %v3249 = vrcp.pop %v2855
        %v3250 = vmul.f32 %v2855, %v3249
        %v3251 = vsub.f32 1.0, %v3250
        %v3252 = vmul.f32 %v3249, %v3251
        %v3253 = vadd.f32 %v3249, %v3252
        %vm3254 = vweird.f32 %v2855
        %vm3255 = vweird.f32 %v3249
        %vm3256 = vmor %vm3254, %vm3255
        %v3257 = vsel %vm3256, %v3249, %v3253
        %v3258 = vand.u32 2147483647, %v2855
        %vm3259 = vcmp.eq.f32.partialorder %v3258, 8.507059e+37
        %v3260 = vand.u32 %v2855, 2147483648
        %v3261 = vor.u32 1.1754944e-38, %v3260
        %v3262 = vsel %vm3259, %v3261, %v3257
        %v3263 = vmul.f32 1.0, %v3262
        %v3264 = vrcp.pop %v2856
        %v3265 = vmul.f32 %v2856, %v3264
        %v3266 = vsub.f32 1.0, %v3265
        %v3267 = vmul.f32 %v3264, %v3266
        %v3268 = vadd.f32 %v3264, %v3267
        %vm3269 = vweird.f32 %v2856
        %vm3270 = vweird.f32 %v3264
        %vm3271 = vmor %vm3269, %vm3270
        %v3272 = vsel %vm3271, %v3264, %v3268
        %v3273 = vand.u32 2147483647, %v2856
        %vm3274 = vcmp.eq.f32.partialorder %v3273, 8.507059e+37
        %v3275 = vand.u32 %v2856, 2147483648
        %v3276 = vor.u32 1.1754944e-38, %v3275
        %v3277 = vsel %vm3274, %v3276, %v3272
        %v3278 = vmul.f32 1.0, %v3277
        %v3279 = vrcp.pop %v2857
        %v3280 = vmul.f32 %v2857, %v3279
        %v3281 = vsub.f32 1.0, %v3280
        %v3282 = vmul.f32 %v3279, %v3281
        %v3283 = vadd.f32 %v3279, %v3282
        %vm3284 = vweird.f32 %v2857
        %vm3285 = vweird.f32 %v3279
        %vm3286 = vmor %vm3284, %vm3285
        %v3287 = vsel %vm3286, %v3279, %v3283
        %v3288 = vand.u32 2147483647, %v2857
        %vm3289 = vcmp.eq.f32.partialorder %v3288, 8.507059e+37
        %v3290 = vand.u32 %v2857, 2147483648
        %v3291 = vor.u32 1.1754944e-38, %v3290
        %v3292 = vsel %vm3289, %v3291, %v3287
        %v3293 = vmul.f32 1.0, %v3292
        %v3294 = vrcp.pop %v2858
        %v3295 = vmul.f32 %v2858, %v3294
        %v3296 = vsub.f32 1.0, %v3295
        %v3297 = vmul.f32 %v3294, %v3296
        %v3298 = vadd.f32 %v3294, %v3297
        %vm3299 = vweird.f32 %v2858
        %vm3300 = vweird.f32 %v3294
        %vm3301 = vmor %vm3299, %vm3300
        %v3302 = vsel %vm3301, %v3294, %v3298
        %v3303 = vand.u32 2147483647, %v2858
        %vm3304 = vcmp.eq.f32.partialorder %v3303, 8.507059e+37
        %v3305 = vand.u32 %v2858, 2147483648
        %v3306 = vor.u32 1.1754944e-38, %v3305
        %v3307 = vsel %vm3304, %v3306, %v3302
        %v3308 = vmul.f32 1.0, %v3307
        %v3309 = vrcp.pop %v2859
        %v3310 = vmul.f32 %v2859, %v3309
        %v3311 = vsub.f32 1.0, %v3310
        %v3312 = vmul.f32 %v3309, %v3311
        %v3313 = vadd.f32 %v3309, %v3312
        %vm3314 = vweird.f32 %v2859
        %vm3315 = vweird.f32 %v3309
        %vm3316 = vmor %vm3314, %vm3315
        %v3317 = vsel %vm3316, %v3309, %v3313
        %v3318 = vand.u32 2147483647, %v2859
        %vm3319 = vcmp.eq.f32.partialorder %v3318, 8.507059e+37
        %v3320 = vand.u32 %v2859, 2147483648
        %v3321 = vor.u32 1.1754944e-38, %v3320
        %v3322 = vsel %vm3319, %v3321, %v3317
        %v3323 = vmul.f32 1.0, %v3322
        %v3324 = vrcp.pop %v2860
        %v3325 = vmul.f32 %v2860, %v3324
        %v3326 = vsub.f32 1.0, %v3325
        %v3327 = vmul.f32 %v3324, %v3326
        %v3328 = vadd.f32 %v3324, %v3327
        %vm3329 = vweird.f32 %v2860
        %vm3330 = vweird.f32 %v3324
        %vm3331 = vmor %vm3329, %vm3330
        %v3332 = vsel %vm3331, %v3324, %v3328
        %v3333 = vand.u32 2147483647, %v2860
        %vm3334 = vcmp.eq.f32.partialorder %v3333, 8.507059e+37
        %v3335 = vand.u32 %v2860, 2147483648
        %v3336 = vor.u32 1.1754944e-38, %v3335
        %v3337 = vsel %vm3334, %v3336, %v3332
        %v3338 = vmul.f32 1.0, %v3337
        %v3339 = vrcp.pop %v2861
        %v3340 = vmul.f32 %v2861, %v3339
        %v3341 = vsub.f32 1.0, %v3340
        %v3342 = vmul.f32 %v3339, %v3341
        %v3343 = vadd.f32 %v3339, %v3342
        %vm3344 = vweird.f32 %v2861
        %vm3345 = vweird.f32 %v3339
        %vm3346 = vmor %vm3344, %vm3345
        %v3347 = vsel %vm3346, %v3339, %v3343
        %v3348 = vand.u32 2147483647, %v2861
        %vm3349 = vcmp.eq.f32.partialorder %v3348, 8.507059e+37
        %v3350 = vand.u32 %v2861, 2147483648
        %v3351 = vor.u32 1.1754944e-38, %v3350
        %v3352 = vsel %vm3349, %v3351, %v3347
        %v3353 = vmul.f32 1.0, %v3352
        %v3354 = vrcp.pop %v2862
        %v3355 = vmul.f32 %v2862, %v3354
        %v3356 = vsub.f32 1.0, %v3355
        %v3357 = vmul.f32 %v3354, %v3356
        %v3358 = vadd.f32 %v3354, %v3357
        %vm3359 = vweird.f32 %v2862
        %vm3360 = vweird.f32 %v3354
        %vm3361 = vmor %vm3359, %vm3360
        %v3362 = vsel %vm3361, %v3354, %v3358
        %v3363 = vand.u32 2147483647, %v2862
        %vm3364 = vcmp.eq.f32.partialorder %v3363, 8.507059e+37
        %v3365 = vand.u32 %v2862, 2147483648
        %v3366 = vor.u32 1.1754944e-38, %v3365
        %v3367 = vsel %vm3364, %v3366, %v3362
        %v3368 = vmul.f32 1.0, %v3367
        %v3369 = vrcp.pop %v2863
        %v3370 = vmul.f32 %v2863, %v3369
        %v3371 = vsub.f32 1.0, %v3370
        %v3372 = vmul.f32 %v3369, %v3371
        %v3373 = vadd.f32 %v3369, %v3372
        %vm3374 = vweird.f32 %v2863
        %vm3375 = vweird.f32 %v3369
        %vm3376 = vmor %vm3374, %vm3375
        %v3377 = vsel %vm3376, %v3369, %v3373
        %v3378 = vand.u32 2147483647, %v2863
        %vm3379 = vcmp.eq.f32.partialorder %v3378, 8.507059e+37
        %v3380 = vand.u32 %v2863, 2147483648
        %v3381 = vor.u32 1.1754944e-38, %v3380
        %v3382 = vsel %vm3379, %v3381, %v3377
        %v3383 = vmul.f32 1.0, %v3382
        %v3384 = vrcp.pop %v2864
        %v3385 = vmul.f32 %v2864, %v3384
        %v3386 = vsub.f32 1.0, %v3385
        %v3387 = vmul.f32 %v3384, %v3386
        %v3388 = vadd.f32 %v3384, %v3387
        %vm3389 = vweird.f32 %v2864
        %vm3390 = vweird.f32 %v3384
        %vm3391 = vmor %vm3389, %vm3390
        %v3392 = vsel %vm3391, %v3384, %v3388
        %v3393 = vand.u32 2147483647, %v2864
        %vm3394 = vcmp.eq.f32.partialorder %v3393, 8.507059e+37
        %v3395 = vand.u32 %v2864, 2147483648
        %v3396 = vor.u32 1.1754944e-38, %v3395
        %v3397 = vsel %vm3394, %v3396, %v3392
        %v3398 = vmul.f32 1.0, %v3397
        %v3399 = vrcp.pop %v2865
        %v3400 = vmul.f32 %v2865, %v3399
        %v3401 = vsub.f32 1.0, %v3400
        %v3402 = vmul.f32 %v3399, %v3401
        %v3403 = vadd.f32 %v3399, %v3402
        %vm3404 = vweird.f32 %v2865
        %vm3405 = vweird.f32 %v3399
        %vm3406 = vmor %vm3404, %vm3405
        %v3407 = vsel %vm3406, %v3399, %v3403
        %v3408 = vand.u32 2147483647, %v2865
        %vm3409 = vcmp.eq.f32.partialorder %v3408, 8.507059e+37
        %v3410 = vand.u32 %v2865, 2147483648
        %v3411 = vor.u32 1.1754944e-38, %v3410
        %v3412 = vsel %vm3409, %v3411, %v3407
        %v3413 = vmul.f32 1.0, %v3412
        %v3414 = vrcp.pop %v2866
        %v3415 = vmul.f32 %v2866, %v3414
        %v3416 = vsub.f32 1.0, %v3415
        %v3417 = vmul.f32 %v3414, %v3416
        %v3418 = vadd.f32 %v3414, %v3417
        %vm3419 = vweird.f32 %v2866
        %vm3420 = vweird.f32 %v3414
        %vm3421 = vmor %vm3419, %vm3420
        %v3422 = vsel %vm3421, %v3414, %v3418
        %v3423 = vand.u32 2147483647, %v2866
        %vm3424 = vcmp.eq.f32.partialorder %v3423, 8.507059e+37
        %v3425 = vand.u32 %v2866, 2147483648
        %v3426 = vor.u32 1.1754944e-38, %v3425
        %v3427 = vsel %vm3424, %v3426, %v3422
        %v3428 = vmul.f32 1.0, %v3427
        %v3429 = vrcp.pop %v2867
        %v3430 = vmul.f32 %v2867, %v3429
        %v3431 = vsub.f32 1.0, %v3430
        %v3432 = vmul.f32 %v3429, %v3431
        %v3433 = vadd.f32 %v3429, %v3432
        %vm3434 = vweird.f32 %v2867
        %vm3435 = vweird.f32 %v3429
        %vm3436 = vmor %vm3434, %vm3435
        %v3437 = vsel %vm3436, %v3429, %v3433
        %v3438 = vand.u32 2147483647, %v2867
        %vm3439 = vcmp.eq.f32.partialorder %v3438, 8.507059e+37
        %v3440 = vand.u32 %v2867, 2147483648
        %v3441 = vor.u32 1.1754944e-38, %v3440
        %v3442 = vsel %vm3439, %v3441, %v3437
        %v3443 = vmul.f32 1.0, %v3442
        %v3444 = vrcp.pop %v2868
        %v3445 = vmul.f32 %v2868, %v3444
        %v3446 = vsub.f32 1.0, %v3445
        %v3447 = vmul.f32 %v3444, %v3446
        %v3448 = vadd.f32 %v3444, %v3447
        %vm3449 = vweird.f32 %v2868
        %vm3450 = vweird.f32 %v3444
        %vm3451 = vmor %vm3449, %vm3450
        %v3452 = vsel %vm3451, %v3444, %v3448
        %v3453 = vand.u32 2147483647, %v2868
        %vm3454 = vcmp.eq.f32.partialorder %v3453, 8.507059e+37
        %v3455 = vand.u32 %v2868, 2147483648
        %v3456 = vor.u32 1.1754944e-38, %v3455
        %v3457 = vsel %vm3454, %v3456, %v3452
        %v3458 = vmul.f32 1.0, %v3457
        %v3459 = vrcp.pop %v2869
        %v3460 = vmul.f32 %v2869, %v3459
        %v3461 = vsub.f32 1.0, %v3460
        %v3462 = vmul.f32 %v3459, %v3461
        %v3463 = vadd.f32 %v3459, %v3462
        %vm3464 = vweird.f32 %v2869
        %vm3465 = vweird.f32 %v3459
        %vm3466 = vmor %vm3464, %vm3465
        %v3467 = vsel %vm3466, %v3459, %v3463
        %v3468 = vand.u32 2147483647, %v2869
        %vm3469 = vcmp.eq.f32.partialorder %v3468, 8.507059e+37
        %v3470 = vand.u32 %v2869, 2147483648
        %v3471 = vor.u32 1.1754944e-38, %v3470
        %v3472 = vsel %vm3469, %v3471, %v3467
        %v3473 = vmul.f32 1.0, %v3472
        %v3474 = vrcp.pop %v2870
        %v3475 = vmul.f32 %v2870, %v3474
        %v3476 = vsub.f32 1.0, %v3475
        %v3477 = vmul.f32 %v3474, %v3476
        %v3478 = vadd.f32 %v3474, %v3477
        %vm3479 = vweird.f32 %v2870
        %vm3480 = vweird.f32 %v3474
        %vm3481 = vmor %vm3479, %vm3480
        %v3482 = vsel %vm3481, %v3474, %v3478
        %v3483 = vand.u32 2147483647, %v2870
        %vm3484 = vcmp.eq.f32.partialorder %v3483, 8.507059e+37
        %v3485 = vand.u32 %v2870, 2147483648
        %v3486 = vor.u32 1.1754944e-38, %v3485
        %v3487 = vsel %vm3484, %v3486, %v3482
        %v3488 = vmul.f32 1.0, %v3487
        %v3489 = vrcp.pop %v2871
        %v3490 = vmul.f32 %v2871, %v3489
        %v3491 = vsub.f32 1.0, %v3490
        %v3492 = vmul.f32 %v3489, %v3491
        %v3493 = vadd.f32 %v3489, %v3492
        %vm3494 = vweird.f32 %v2871
        %vm3495 = vweird.f32 %v3489
        %vm3496 = vmor %vm3494, %vm3495
        %v3497 = vsel %vm3496, %v3489, %v3493
        %v3498 = vand.u32 2147483647, %v2871
        %vm3499 = vcmp.eq.f32.partialorder %v3498, 8.507059e+37
        %v3500 = vand.u32 %v2871, 2147483648
        %v3501 = vor.u32 1.1754944e-38, %v3500
        %v3502 = vsel %vm3499, %v3501, %v3497
        %v3503 = vmul.f32 1.0, %v3502
        %v3504 = vrcp.pop %v2872
        %v3505 = vmul.f32 %v2872, %v3504
        %v3506 = vsub.f32 1.0, %v3505
        %v3507 = vmul.f32 %v3504, %v3506
        %v3508 = vadd.f32 %v3504, %v3507
        %vm3509 = vweird.f32 %v2872
        %vm3510 = vweird.f32 %v3504
        %vm3511 = vmor %vm3509, %vm3510
        %v3512 = vsel %vm3511, %v3504, %v3508
        %v3513 = vand.u32 2147483647, %v2872
        %vm3514 = vcmp.eq.f32.partialorder %v3513, 8.507059e+37
        %v3515 = vand.u32 %v2872, 2147483648
        %v3516 = vor.u32 1.1754944e-38, %v3515
        %v3517 = vsel %vm3514, %v3516, %v3512
        %v3518 = vmul.f32 1.0, %v3517
        %v3519 = vrcp.pop %v2873
        %v3520 = vmul.f32 %v2873, %v3519
        %v3521 = vsub.f32 1.0, %v3520
        %v3522 = vmul.f32 %v3519, %v3521
        %v3523 = vadd.f32 %v3519, %v3522
        %vm3524 = vweird.f32 %v2873
        %vm3525 = vweird.f32 %v3519
        %vm3526 = vmor %vm3524, %vm3525
        %v3527 = vsel %vm3526, %v3519, %v3523
        %v3528 = vand.u32 2147483647, %v2873
        %vm3529 = vcmp.eq.f32.partialorder %v3528, 8.507059e+37
        %v3530 = vand.u32 %v2873, 2147483648
        %v3531 = vor.u32 1.1754944e-38, %v3530
        %v3532 = vsel %vm3529, %v3531, %v3527
        %v3533 = vmul.f32 1.0, %v3532
        %v3534 = vrcp.pop %v2874
        %v3535 = vmul.f32 %v2874, %v3534
        %v3536 = vsub.f32 1.0, %v3535
        %v3537 = vmul.f32 %v3534, %v3536
        %v3538 = vadd.f32 %v3534, %v3537
        %vm3539 = vweird.f32 %v2874
        %vm3540 = vweird.f32 %v3534
        %vm3541 = vmor %vm3539, %vm3540
        %v3542 = vsel %vm3541, %v3534, %v3538
        %v3543 = vand.u32 2147483647, %v2874
        %vm3544 = vcmp.eq.f32.partialorder %v3543, 8.507059e+37
        %v3545 = vand.u32 %v2874, 2147483648
        %v3546 = vor.u32 1.1754944e-38, %v3545
        %v3547 = vsel %vm3544, %v3546, %v3542
        %v3548 = vmul.f32 1.0, %v3547
        %v3549 = vrcp.pop %v2875
        %v3550 = vmul.f32 %v2875, %v3549
        %v3551 = vsub.f32 1.0, %v3550
        %v3552 = vmul.f32 %v3549, %v3551
        %v3553 = vadd.f32 %v3549, %v3552
        %vm3554 = vweird.f32 %v2875
        %vm3555 = vweird.f32 %v3549
        %vm3556 = vmor %vm3554, %vm3555
        %v3557 = vsel %vm3556, %v3549, %v3553
        %v3558 = vand.u32 2147483647, %v2875
        %vm3559 = vcmp.eq.f32.partialorder %v3558, 8.507059e+37
        %v3560 = vand.u32 %v2875, 2147483648
        %v3561 = vor.u32 1.1754944e-38, %v3560
        %v3562 = vsel %vm3559, %v3561, %v3557
        %v3563 = vmul.f32 1.0, %v3562
        %v3564 = vrcp.pop %v2876
        %v3565 = vmul.f32 %v2876, %v3564
        %v3566 = vsub.f32 1.0, %v3565
        %v3567 = vmul.f32 %v3564, %v3566
        %v3568 = vadd.f32 %v3564, %v3567
        %vm3569 = vweird.f32 %v2876
        %vm3570 = vweird.f32 %v3564
        %vm3571 = vmor %vm3569, %vm3570
        %v3572 = vsel %vm3571, %v3564, %v3568
        %v3573 = vand.u32 2147483647, %v2876
        %vm3574 = vcmp.eq.f32.partialorder %v3573, 8.507059e+37
        %v3575 = vand.u32 %v2876, 2147483648
        %v3576 = vor.u32 1.1754944e-38, %v3575
        %v3577 = vsel %vm3574, %v3576, %v3572
        %v3578 = vmul.f32 1.0, %v3577
        %v3579 = vrcp.pop %v2877
        %v3580 = vmul.f32 %v2877, %v3579
        %v3581 = vsub.f32 1.0, %v3580
        %v3582 = vmul.f32 %v3579, %v3581
        %v3583 = vadd.f32 %v3579, %v3582
        %vm3584 = vweird.f32 %v2877
        %vm3585 = vweird.f32 %v3579
        %vm3586 = vmor %vm3584, %vm3585
        %v3587 = vsel %vm3586, %v3579, %v3583
        %v3588 = vand.u32 2147483647, %v2877
        %vm3589 = vcmp.eq.f32.partialorder %v3588, 8.507059e+37
        %v3590 = vand.u32 %v2877, 2147483648
        %v3591 = vor.u32 1.1754944e-38, %v3590
        %v3592 = vsel %vm3589, %v3591, %v3587
        %v3593 = vmul.f32 1.0, %v3592
        %v3594 = vrcp.pop %v2878
        %v3595 = vmul.f32 %v2878, %v3594
        %v3596 = vsub.f32 1.0, %v3595
        %v3597 = vmul.f32 %v3594, %v3596
        %v3598 = vadd.f32 %v3594, %v3597
        %vm3599 = vweird.f32 %v2878
        %vm3600 = vweird.f32 %v3594
        %vm3601 = vmor %vm3599, %vm3600
        %v3602 = vsel %vm3601, %v3594, %v3598
        %v3603 = vand.u32 2147483647, %v2878
        %vm3604 = vcmp.eq.f32.partialorder %v3603, 8.507059e+37
        %v3605 = vand.u32 %v2878, 2147483648
        %v3606 = vor.u32 1.1754944e-38, %v3605
        %v3607 = vsel %vm3604, %v3606, %v3602
        %v3608 = vmul.f32 1.0, %v3607
        %v3609 = vrcp.pop %v2879
        %v3610 = vmul.f32 %v2879, %v3609
        %v3611 = vsub.f32 1.0, %v3610
        %v3612 = vmul.f32 %v3609, %v3611
        %v3613 = vadd.f32 %v3609, %v3612
        %vm3614 = vweird.f32 %v2879
        %vm3615 = vweird.f32 %v3609
        %vm3616 = vmor %vm3614, %vm3615
        %v3617 = vsel %vm3616, %v3609, %v3613
        %v3618 = vand.u32 2147483647, %v2879
        %vm3619 = vcmp.eq.f32.partialorder %v3618, 8.507059e+37
        %v3620 = vand.u32 %v2879, 2147483648
        %v3621 = vor.u32 1.1754944e-38, %v3620
        %v3622 = vsel %vm3619, %v3621, %v3617
        %v3623 = vmul.f32 1.0, %v3622
        %v3624 = vrcp.pop %v2880
        %v3625 = vmul.f32 %v2880, %v3624
        %v3626 = vsub.f32 1.0, %v3625
        %v3627 = vmul.f32 %v3624, %v3626
        %v3628 = vadd.f32 %v3624, %v3627
        %vm3629 = vweird.f32 %v2880
        %vm3630 = vweird.f32 %v3624
        %vm3631 = vmor %vm3629, %vm3630
        %v3632 = vsel %vm3631, %v3624, %v3628
        %v3633 = vand.u32 2147483647, %v2880
        %vm3634 = vcmp.eq.f32.partialorder %v3633, 8.507059e+37
        %v3635 = vand.u32 %v2880, 2147483648
        %v3636 = vor.u32 1.1754944e-38, %v3635
        %v3637 = vsel %vm3634, %v3636, %v3632
        %v3638 = vmul.f32 1.0, %v3637
        %v3639 = vrcp.pop %v2881
        %v3640 = vmul.f32 %v2881, %v3639
        %v3641 = vsub.f32 1.0, %v3640
        %v3642 = vmul.f32 %v3639, %v3641
        %v3643 = vadd.f32 %v3639, %v3642
        %vm3644 = vweird.f32 %v2881
        %vm3645 = vweird.f32 %v3639
        %vm3646 = vmor %vm3644, %vm3645
        %v3647 = vsel %vm3646, %v3639, %v3643
        %v3648 = vand.u32 2147483647, %v2881
        %vm3649 = vcmp.eq.f32.partialorder %v3648, 8.507059e+37
        %v3650 = vand.u32 %v2881, 2147483648
        %v3651 = vor.u32 1.1754944e-38, %v3650
        %v3652 = vsel %vm3649, %v3651, %v3647
        %v3653 = vmul.f32 1.0, %v3652
        %v3654 = vrcp.pop %v2882
        %v3655 = vmul.f32 %v2882, %v3654
        %v3656 = vsub.f32 1.0, %v3655
        %v3657 = vmul.f32 %v3654, %v3656
        %v3658 = vadd.f32 %v3654, %v3657
        %vm3659 = vweird.f32 %v2882
        %vm3660 = vweird.f32 %v3654
        %vm3661 = vmor %vm3659, %vm3660
        %v3662 = vsel %vm3661, %v3654, %v3658
        %v3663 = vand.u32 2147483647, %v2882
        %vm3664 = vcmp.eq.f32.partialorder %v3663, 8.507059e+37
        %v3665 = vand.u32 %v2882, 2147483648
        %v3666 = vor.u32 1.1754944e-38, %v3665
        %v3667 = vsel %vm3664, %v3666, %v3662
        %v3668 = vmul.f32 1.0, %v3667
        %v3669 = vrcp.pop %v2883
        %v3670 = vmul.f32 %v2883, %v3669
        %v3671 = vsub.f32 1.0, %v3670
        %v3672 = vmul.f32 %v3669, %v3671
        %v3673 = vadd.f32 %v3669, %v3672
        %vm3674 = vweird.f32 %v2883
        %vm3675 = vweird.f32 %v3669
        %vm3676 = vmor %vm3674, %vm3675
        %v3677 = vsel %vm3676, %v3669, %v3673
        %v3678 = vand.u32 2147483647, %v2883
        %vm3679 = vcmp.eq.f32.partialorder %v3678, 8.507059e+37
        %v3680 = vand.u32 %v2883, 2147483648
        %v3681 = vor.u32 1.1754944e-38, %v3680
        %v3682 = vsel %vm3679, %v3681, %v3677
        %v3683 = vmul.f32 1.0, %v3682
        %v3684 = vrcp.pop %v2884
        %v3685 = vmul.f32 %v2884, %v3684
        %v3686 = vsub.f32 1.0, %v3685
        %v3687 = vmul.f32 %v3684, %v3686
        %v3688 = vadd.f32 %v3684, %v3687
        %vm3689 = vweird.f32 %v2884
        %vm3690 = vweird.f32 %v3684
        %vm3691 = vmor %vm3689, %vm3690
        %v3692 = vsel %vm3691, %v3684, %v3688
        %v3693 = vand.u32 2147483647, %v2884
        %vm3694 = vcmp.eq.f32.partialorder %v3693, 8.507059e+37
        %v3695 = vand.u32 %v2884, 2147483648
        %v3696 = vor.u32 1.1754944e-38, %v3695
        %v3697 = vsel %vm3694, %v3696, %v3692
        %v3698 = vmul.f32 1.0, %v3697
        %v3699 = vrcp.pop %v2885
        %v3700 = vmul.f32 %v2885, %v3699
        %v3701 = vsub.f32 1.0, %v3700
        %v3702 = vmul.f32 %v3699, %v3701
        %v3703 = vadd.f32 %v3699, %v3702
        %vm3704 = vweird.f32 %v2885
        %vm3705 = vweird.f32 %v3699
        %vm3706 = vmor %vm3704, %vm3705
        %v3707 = vsel %vm3706, %v3699, %v3703
        %v3708 = vand.u32 2147483647, %v2885
        %vm3709 = vcmp.eq.f32.partialorder %v3708, 8.507059e+37
        %v3710 = vand.u32 %v2885, 2147483648
        %v3711 = vor.u32 1.1754944e-38, %v3710
        %v3712 = vsel %vm3709, %v3711, %v3707
        %v3713 = vmul.f32 1.0, %v3712
        %v3714 = vrcp.pop %v2886
        %v3715 = vmul.f32 %v2886, %v3714
        %v3716 = vsub.f32 1.0, %v3715
        %v3717 = vmul.f32 %v3714, %v3716
        %v3718 = vadd.f32 %v3714, %v3717
        %vm3719 = vweird.f32 %v2886
        %vm3720 = vweird.f32 %v3714
        %vm3721 = vmor %vm3719, %vm3720
        %v3722 = vsel %vm3721, %v3714, %v3718
        %v3723 = vand.u32 2147483647, %v2886
        %vm3724 = vcmp.eq.f32.partialorder %v3723, 8.507059e+37
        %v3725 = vand.u32 %v2886, 2147483648
        %v3726 = vor.u32 1.1754944e-38, %v3725
        %v3727 = vsel %vm3724, %v3726, %v3722
        %v3728 = vmul.f32 1.0, %v3727
        %v3729 = vrcp.pop %v2887
        %v3730 = vmul.f32 %v2887, %v3729
        %v3731 = vsub.f32 1.0, %v3730
        %v3732 = vmul.f32 %v3729, %v3731
        %v3733 = vadd.f32 %v3729, %v3732
        %vm3734 = vweird.f32 %v2887
        %vm3735 = vweird.f32 %v3729
        %vm3736 = vmor %vm3734, %vm3735
        %v3737 = vsel %vm3736, %v3729, %v3733
        %v3738 = vand.u32 2147483647, %v2887
        %vm3739 = vcmp.eq.f32.partialorder %v3738, 8.507059e+37
        %v3740 = vand.u32 %v2887, 2147483648
        %v3741 = vor.u32 1.1754944e-38, %v3740
        %v3742 = vsel %vm3739, %v3741, %v3737
        %v3743 = vmul.f32 1.0, %v3742
        %v3744 = vrcp.pop %v2888
        %v3745 = vmul.f32 %v2888, %v3744
        %v3746 = vsub.f32 1.0, %v3745
        %v3747 = vmul.f32 %v3744, %v3746
        %v3748 = vadd.f32 %v3744, %v3747
        %vm3749 = vweird.f32 %v2888
        %vm3750 = vweird.f32 %v3744
        %vm3751 = vmor %vm3749, %vm3750
        %v3752 = vsel %vm3751, %v3744, %v3748
        %v3753 = vand.u32 2147483647, %v2888
        %vm3754 = vcmp.eq.f32.partialorder %v3753, 8.507059e+37
        %v3755 = vand.u32 %v2888, 2147483648
        %v3756 = vor.u32 1.1754944e-38, %v3755
        %v3757 = vsel %vm3754, %v3756, %v3752
        %v3758 = vmul.f32 1.0, %v3757
        %v3759 = vrcp.pop %v2889
        %v3760 = vmul.f32 %v2889, %v3759
        %v3761 = vsub.f32 1.0, %v3760
        %v3762 = vmul.f32 %v3759, %v3761
        %v3763 = vadd.f32 %v3759, %v3762
        %vm3764 = vweird.f32 %v2889
        %vm3765 = vweird.f32 %v3759
        %vm3766 = vmor %vm3764, %vm3765
        %v3767 = vsel %vm3766, %v3759, %v3763
        %v3768 = vand.u32 2147483647, %v2889
        %vm3769 = vcmp.eq.f32.partialorder %v3768, 8.507059e+37
        %v3770 = vand.u32 %v2889, 2147483648
        %v3771 = vor.u32 1.1754944e-38, %v3770
        %v3772 = vsel %vm3769, %v3771, %v3767
        %v3773 = vmul.f32 1.0, %v3772
        %v3774 = vrcp.pop %v2890
        %v3775 = vmul.f32 %v2890, %v3774
        %v3776 = vsub.f32 1.0, %v3775
        %v3777 = vmul.f32 %v3774, %v3776
        %v3778 = vadd.f32 %v3774, %v3777
        %vm3779 = vweird.f32 %v2890
        %vm3780 = vweird.f32 %v3774
        %vm3781 = vmor %vm3779, %vm3780
        %v3782 = vsel %vm3781, %v3774, %v3778
        %v3783 = vand.u32 2147483647, %v2890
        %vm3784 = vcmp.eq.f32.partialorder %v3783, 8.507059e+37
        %v3785 = vand.u32 %v2890, 2147483648
        %v3786 = vor.u32 1.1754944e-38, %v3785
        %v3787 = vsel %vm3784, %v3786, %v3782
        %v3788 = vmul.f32 1.0, %v3787
        %v3789 = vrcp.pop %v2891
        %v3790 = vmul.f32 %v2891, %v3789
        %v3791 = vsub.f32 1.0, %v3790
        %v3792 = vmul.f32 %v3789, %v3791
        %v3793 = vadd.f32 %v3789, %v3792
        %vm3794 = vweird.f32 %v2891
        %vm3795 = vweird.f32 %v3789
        %vm3796 = vmor %vm3794, %vm3795
        %v3797 = vsel %vm3796, %v3789, %v3793
        %v3798 = vand.u32 2147483647, %v2891
        %vm3799 = vcmp.eq.f32.partialorder %v3798, 8.507059e+37
        %v3800 = vand.u32 %v2891, 2147483648
        %v3801 = vor.u32 1.1754944e-38, %v3800
        %v3802 = vsel %vm3799, %v3801, %v3797
        %v3803 = vmul.f32 1.0, %v3802
        %v3804 = vrcp.pop %v2892
        %v3805 = vmul.f32 %v2892, %v3804
        %v3806 = vsub.f32 1.0, %v3805
        %v3807 = vmul.f32 %v3804, %v3806
        %v3808 = vadd.f32 %v3804, %v3807
        %vm3809 = vweird.f32 %v2892
        %vm3810 = vweird.f32 %v3804
        %vm3811 = vmor %vm3809, %vm3810
        %v3812 = vsel %vm3811, %v3804, %v3808
        %v3813 = vand.u32 2147483647, %v2892
        %vm3814 = vcmp.eq.f32.partialorder %v3813, 8.507059e+37
        %v3815 = vand.u32 %v2892, 2147483648
        %v3816 = vor.u32 1.1754944e-38, %v3815
        %v3817 = vsel %vm3814, %v3816, %v3812
        %v3818 = vmul.f32 1.0, %v3817
        %v3819 = vrcp.pop %v2893
        %v3820 = vmul.f32 %v2893, %v3819
        %v3821 = vsub.f32 1.0, %v3820
        %v3822 = vmul.f32 %v3819, %v3821
        %v3823 = vadd.f32 %v3819, %v3822
        %vm3824 = vweird.f32 %v2893
        %vm3825 = vweird.f32 %v3819
        %vm3826 = vmor %vm3824, %vm3825
        %v3827 = vsel %vm3826, %v3819, %v3823
        %v3828 = vand.u32 2147483647, %v2893
        %vm3829 = vcmp.eq.f32.partialorder %v3828, 8.507059e+37
        %v3830 = vand.u32 %v2893, 2147483648
        %v3831 = vor.u32 1.1754944e-38, %v3830
        %v3832 = vsel %vm3829, %v3831, %v3827
        %v3833 = vmul.f32 1.0, %v3832
        %v3834 = vrcp.pop %v2894
        %v3835 = vmul.f32 %v2894, %v3834
        %v3836 = vsub.f32 1.0, %v3835
        %v3837 = vmul.f32 %v3834, %v3836
        %v3838 = vadd.f32 %v3834, %v3837
        %vm3839 = vweird.f32 %v2894
        %vm3840 = vweird.f32 %v3834
        %vm3841 = vmor %vm3839, %vm3840
        %v3842 = vsel %vm3841, %v3834, %v3838
        %v3843 = vand.u32 2147483647, %v2894
        %vm3844 = vcmp.eq.f32.partialorder %v3843, 8.507059e+37
        %v3845 = vand.u32 %v2894, 2147483648
        %v3846 = vor.u32 1.1754944e-38, %v3845
        %v3847 = vsel %vm3844, %v3846, %v3842
        %v3848 = vmul.f32 1.0, %v3847
        %v3849 = vrcp.pop %v2895
        %v3850 = vmul.f32 %v2895, %v3849
        %v3851 = vsub.f32 1.0, %v3850
        %v3852 = vmul.f32 %v3849, %v3851
        %v3853 = vadd.f32 %v3849, %v3852
        %vm3854 = vweird.f32 %v2895
        %vm3855 = vweird.f32 %v3849
        %vm3856 = vmor %vm3854, %vm3855
        %v3857 = vsel %vm3856, %v3849, %v3853
        %v3858 = vand.u32 2147483647, %v2895
        %vm3859 = vcmp.eq.f32.partialorder %v3858, 8.507059e+37
        %v3860 = vand.u32 %v2895, 2147483648
        %v3861 = vor.u32 1.1754944e-38, %v3860
        %v3862 = vsel %vm3859, %v3861, %v3857
        %v3863 = vmul.f32 1.0, %v3862
        %v3864 = vrcp.pop %v2896
        %v3865 = vmul.f32 %v2896, %v3864
        %v3866 = vsub.f32 1.0, %v3865
        %v3867 = vmul.f32 %v3864, %v3866
        %v3868 = vadd.f32 %v3864, %v3867
        %vm3869 = vweird.f32 %v2896
        %vm3870 = vweird.f32 %v3864
        %vm3871 = vmor %vm3869, %vm3870
        %v3872 = vsel %vm3871, %v3864, %v3868
        %v3873 = vand.u32 2147483647, %v2896
        %vm3874 = vcmp.eq.f32.partialorder %v3873, 8.507059e+37
        %v3875 = vand.u32 %v2896, 2147483648
        %v3876 = vor.u32 1.1754944e-38, %v3875
        %v3877 = vsel %vm3874, %v3876, %v3872
        %v3878 = vmul.f32 1.0, %v3877
        %v3879 = vrcp.pop %v2897
        %v3880 = vmul.f32 %v2897, %v3879
        %v3881 = vsub.f32 1.0, %v3880
        %v3882 = vmul.f32 %v3879, %v3881
        %v3883 = vadd.f32 %v3879, %v3882
        %vm3884 = vweird.f32 %v2897
        %vm3885 = vweird.f32 %v3879
        %vm3886 = vmor %vm3884, %vm3885
        %v3887 = vsel %vm3886, %v3879, %v3883
        %v3888 = vand.u32 2147483647, %v2897
        %vm3889 = vcmp.eq.f32.partialorder %v3888, 8.507059e+37
        %v3890 = vand.u32 %v2897, 2147483648
        %v3891 = vor.u32 1.1754944e-38, %v3890
        %v3892 = vsel %vm3889, %v3891, %v3887
        %v3893 = vmul.f32 1.0, %v3892
        %v3894 = vrcp.pop %v2898
        %v3895 = vmul.f32 %v2898, %v3894
        %v3896 = vsub.f32 1.0, %v3895
        %v3897 = vmul.f32 %v3894, %v3896
        %v3898 = vadd.f32 %v3894, %v3897
        %vm3899 = vweird.f32 %v2898
        %vm3900 = vweird.f32 %v3894
        %vm3901 = vmor %vm3899, %vm3900
        %v3902 = vsel %vm3901, %v3894, %v3898
        %v3903 = vand.u32 2147483647, %v2898
        %vm3904 = vcmp.eq.f32.partialorder %v3903, 8.507059e+37
        %v3905 = vand.u32 %v2898, 2147483648
        %v3906 = vor.u32 1.1754944e-38, %v3905
        %v3907 = vsel %vm3904, %v3906, %v3902
        %v3908 = vmul.f32 1.0, %v3907
        %v3909 = vrcp.pop %v2899
        %v3910 = vmul.f32 %v2899, %v3909
        %v3911 = vsub.f32 1.0, %v3910
        %v3912 = vmul.f32 %v3909, %v3911
        %v3913 = vadd.f32 %v3909, %v3912
        %vm3914 = vweird.f32 %v2899
        %vm3915 = vweird.f32 %v3909
        %vm3916 = vmor %vm3914, %vm3915
        %v3917 = vsel %vm3916, %v3909, %v3913
        %v3918 = vand.u32 2147483647, %v2899
        %vm3919 = vcmp.eq.f32.partialorder %v3918, 8.507059e+37
        %v3920 = vand.u32 %v2899, 2147483648
        %v3921 = vor.u32 1.1754944e-38, %v3920
        %v3922 = vsel %vm3919, %v3921, %v3917
        %v3923 = vmul.f32 1.0, %v3922
        %v3924 = vrcp.pop %v2900
        %v3925 = vmul.f32 %v2900, %v3924
        %v3926 = vsub.f32 1.0, %v3925
        %v3927 = vmul.f32 %v3924, %v3926
        %v3928 = vadd.f32 %v3924, %v3927
        %vm3929 = vweird.f32 %v2900
        %vm3930 = vweird.f32 %v3924
        %vm3931 = vmor %vm3929, %vm3930
        %v3932 = vsel %vm3931, %v3924, %v3928
        %v3933 = vand.u32 2147483647, %v2900
        %vm3934 = vcmp.eq.f32.partialorder %v3933, 8.507059e+37
        %v3935 = vand.u32 %v2900, 2147483648
        %v3936 = vor.u32 1.1754944e-38, %v3935
        %v3937 = vsel %vm3934, %v3936, %v3932
        %v3938 = vmul.f32 1.0, %v3937
        %v3939 = vrcp.pop %v2901
        %v3940 = vmul.f32 %v2901, %v3939
        %v3941 = vsub.f32 1.0, %v3940
        %v3942 = vmul.f32 %v3939, %v3941
        %v3943 = vadd.f32 %v3939, %v3942
        %vm3944 = vweird.f32 %v2901
        %vm3945 = vweird.f32 %v3939
        %vm3946 = vmor %vm3944, %vm3945
        %v3947 = vsel %vm3946, %v3939, %v3943
        %v3948 = vand.u32 2147483647, %v2901
        %vm3949 = vcmp.eq.f32.partialorder %v3948, 8.507059e+37
        %v3950 = vand.u32 %v2901, 2147483648
        %v3951 = vor.u32 1.1754944e-38, %v3950
        %v3952 = vsel %vm3949, %v3951, %v3947
        %v3953 = vmul.f32 1.0, %v3952
        %v3954 = vrcp.pop %v2902
        %v3955 = vmul.f32 %v2902, %v3954
        %v3956 = vsub.f32 1.0, %v3955
        %v3957 = vmul.f32 %v3954, %v3956
        %v3958 = vadd.f32 %v3954, %v3957
        %vm3959 = vweird.f32 %v2902
        %vm3960 = vweird.f32 %v3954
        %vm3961 = vmor %vm3959, %vm3960
        %v3962 = vsel %vm3961, %v3954, %v3958
        %v3963 = vand.u32 2147483647, %v2902
        %vm3964 = vcmp.eq.f32.partialorder %v3963, 8.507059e+37
        %v3965 = vand.u32 %v2902, 2147483648
        %v3966 = vor.u32 1.1754944e-38, %v3965
        %v3967 = vsel %vm3964, %v3966, %v3962
        %v3968 = vmul.f32 1.0, %v3967
        %v3969 = vrcp.pop %v2903
        %v3970 = vmul.f32 %v2903, %v3969
        %v3971 = vsub.f32 1.0, %v3970
        %v3972 = vmul.f32 %v3969, %v3971
        %v3973 = vadd.f32 %v3969, %v3972
        %vm3974 = vweird.f32 %v2903
        %vm3975 = vweird.f32 %v3969
        %vm3976 = vmor %vm3974, %vm3975
        %v3977 = vsel %vm3976, %v3969, %v3973
        %v3978 = vand.u32 2147483647, %v2903
        %vm3979 = vcmp.eq.f32.partialorder %v3978, 8.507059e+37
        %v3980 = vand.u32 %v2903, 2147483648
        %v3981 = vor.u32 1.1754944e-38, %v3980
        %v3982 = vsel %vm3979, %v3981, %v3977
        %v3983 = vmul.f32 1.0, %v3982
        %v3984 = vmul.f32 %v1432, %v2918
        %v3985 = vmul.f32 %v1540, %v2933
        %v3986 = vmul.f32 %v1648, %v2948
        %v3987 = vmul.f32 %v1756, %v2963
        %v3988 = vmul.f32 %v1434, %v2978
        %v3989 = vmul.f32 %v1542, %v2993
        %v3990 = vmul.f32 %v1650, %v3008
        %v3991 = vmul.f32 %v1758, %v3023
        %v3992 = vmul.f32 %v1437, %v3038
        %v3993 = vmul.f32 %v1545, %v3053
        %v3994 = vmul.f32 %v1653, %v3068
        %v3995 = vmul.f32 %v1761, %v3083
        %v3996 = vmul.f32 %v1439, %v3098
        %v3997 = vmul.f32 %v1547, %v3113
        %v3998 = vmul.f32 %v1655, %v3128
        %v3999 = vmul.f32 %v1763, %v3143
        %v4000 = vmul.f32 %v1442, %v3158
        %v4001 = vmul.f32 %v1550, %v3173
        %v4002 = vmul.f32 %v1658, %v3188
        %v4003 = vmul.f32 %v1766, %v3203
        %v4004 = vmul.f32 %v1444, %v3218
        %v4005 = vmul.f32 %v1552, %v3233
        %v4006 = vmul.f32 %v1660, %v3248
        %v4007 = vmul.f32 %v1768, %v3263
        %v4008 = vmul.f32 %v1447, %v3278
        %v4009 = vmul.f32 %v1555, %v3293
        %v4010 = vmul.f32 %v1663, %v3308
        %v4011 = vmul.f32 %v1771, %v3323
        %v4012 = vmul.f32 %v1449, %v3338
        %v4013 = vmul.f32 %v1557, %v3353
        %v4014 = vmul.f32 %v1665, %v3368
        %v4015 = vmul.f32 %v1773, %v3383
        %v4016 = vmul.f32 %v1452, %v3398
        %v4017 = vmul.f32 %v1560, %v3413
        %v4018 = vmul.f32 %v1668, %v3428
        %v4019 = vmul.f32 %v1776, %v3443
        %v4020 = vmul.f32 %v1454, %v3458
        %v4021 = vmul.f32 %v1562, %v3473
        %v4022 = vmul.f32 %v1670, %v3488
        %v4023 = vmul.f32 %v1778, %v3503
        %v4024 = vmul.f32 %v1457, %v3518
        %v4025 = vmul.f32 %v1565, %v3533
        %v4026 = vmul.f32 %v1673, %v3548
        %v4027 = vmul.f32 %v1781, %v3563
        %v4028 = vmul.f32 %v1459, %v3578
        %v4029 = vmul.f32 %v1567, %v3593
        %v4030 = vmul.f32 %v1675, %v3608
        %v4031 = vmul.f32 %v1783, %v3623
        %v4032 = vmul.f32 %v1462, %v3638
        %v4033 = vmul.f32 %v1570, %v3653
        %v4034 = vmul.f32 %v1678, %v3668
        %v4035 = vmul.f32 %v1786, %v3683
        %v4036 = vmul.f32 %v1464, %v3698
        %v4037 = vmul.f32 %v1572, %v3713
        %v4038 = vmul.f32 %v1680, %v3728
        %v4039 = vmul.f32 %v1788, %v3743
        %v4040 = vmul.f32 %v1467, %v3758
        %v4041 = vmul.f32 %v1575, %v3773
        %v4042 = vmul.f32 %v1683, %v3788
        %v4043 = vmul.f32 %v1791, %v3803
        %v4044 = vmul.f32 %v1469, %v3818
        %v4045 = vmul.f32 %v1577, %v3833
        %v4046 = vmul.f32 %v1685, %v3848
        %v4047 = vmul.f32 %v1793, %v3863
        %v4048 = vmul.f32 %v1472, %v3878
        %v4049 = vmul.f32 %v1580, %v3893
        %v4050 = vmul.f32 %v1688, %v3908
        %v4051 = vmul.f32 %v1796, %v3923
        %v4052 = vmul.f32 %v1474, %v3938
        %v4053 = vmul.f32 %v1582, %v3953
        %v4054 = vmul.f32 %v1690, %v3968
        %v4055 = vmul.f32 %v1798, %v3983
        %v4056 = vmul.f32 %v3984, %v2248
        %v4057 = vmul.f32 %v3985, %v2356
        %v4058 = vmul.f32 %v3986, %v2464
        %v4059 = vmul.f32 %v3987, %v2572
        %v4060 = vmul.f32 %v3988, %v2250
        %v4061 = vmul.f32 %v3989, %v2358
        %v4062 = vmul.f32 %v3990, %v2466
        %v4063 = vmul.f32 %v3991, %v2574
        %v4064 = vmul.f32 %v3992, %v2253
        %v4065 = vmul.f32 %v3993, %v2361
        %v4066 = vmul.f32 %v3994, %v2469
        %v4067 = vmul.f32 %v3995, %v2577
        %v4068 = vmul.f32 %v3996, %v2255
        %v4069 = vmul.f32 %v3997, %v2363
        %v4070 = vmul.f32 %v3998, %v2471
        %v4071 = vmul.f32 %v3999, %v2579
        %v4072 = vmul.f32 %v4000, %v2258
        %v4073 = vmul.f32 %v4001, %v2366
        %v4074 = vmul.f32 %v4002, %v2474
        %v4075 = vmul.f32 %v4003, %v2582
        %v4076 = vmul.f32 %v4004, %v2260
        %v4077 = vmul.f32 %v4005, %v2368
        %v4078 = vmul.f32 %v4006, %v2476
        %v4079 = vmul.f32 %v4007, %v2584
        %v4080 = vmul.f32 %v4008, %v2263
        %v4081 = vmul.f32 %v4009, %v2371
        %v4082 = vmul.f32 %v4010, %v2479
        %v4083 = vmul.f32 %v4011, %v2587
        %v4084 = vmul.f32 %v4012, %v2265
        %v4085 = vmul.f32 %v4013, %v2373
        %v4086 = vmul.f32 %v4014, %v2481
        %v4087 = vmul.f32 %v4015, %v2589
        %v4088 = vmul.f32 %v4016, %v2268
        %v4089 = vmul.f32 %v4017, %v2376
        %v4090 = vmul.f32 %v4018, %v2484
        %v4091 = vmul.f32 %v4019, %v2592
        %v4092 = vmul.f32 %v4020, %v2270
        %v4093 = vmul.f32 %v4021, %v2378
        %v4094 = vmul.f32 %v4022, %v2486
        %v4095 = vmul.f32 %v4023, %v2594
        %v4096 = vmul.f32 %v4024, %v2273
        %v4097 = vmul.f32 %v4025, %v2381
        %v4098 = vmul.f32 %v4026, %v2489
        %v4099 = vmul.f32 %v4027, %v2597
        %v4100 = vmul.f32 %v4028, %v2275
        %v4101 = vmul.f32 %v4029, %v2383
        %v4102 = vmul.f32 %v4030, %v2491
        %v4103 = vmul.f32 %v4031, %v2599
        %v4104 = vmul.f32 %v4032, %v2278
        %v4105 = vmul.f32 %v4033, %v2386
        %v4106 = vmul.f32 %v4034, %v2494
        %v4107 = vmul.f32 %v4035, %v2602
        %v4108 = vmul.f32 %v4036, %v2280
        %v4109 = vmul.f32 %v4037, %v2388
        %v4110 = vmul.f32 %v4038, %v2496
        %v4111 = vmul.f32 %v4039, %v2604
        %v4112 = vmul.f32 %v4040, %v2283
        %v4113 = vmul.f32 %v4041, %v2391
        %v4114 = vmul.f32 %v4042, %v2499
        %v4115 = vmul.f32 %v4043, %v2607
        %v4116 = vmul.f32 %v4044, %v2285
        %v4117 = vmul.f32 %v4045, %v2393
        %v4118 = vmul.f32 %v4046, %v2501
        %v4119 = vmul.f32 %v4047, %v2609
        %v4120 = vmul.f32 %v4048, %v2288
        %v4121 = vmul.f32 %v4049, %v2396
        %v4122 = vmul.f32 %v4050, %v2504
        %v4123 = vmul.f32 %v4051, %v2612
        %v4124 = vmul.f32 %v4052, %v2290
        %v4125 = vmul.f32 %v4053, %v2398
        %v4126 = vmul.f32 %v4054, %v2506
        %v4127 = vmul.f32 %v4055, %v2614
        %v4128 = vpack.c.bf16 %v4060, %v4056
        %v4129 = vpack.c.bf16 %v4061, %v4057
        %v4130 = vpack.c.bf16 %v4062, %v4058
        %v4131 = vpack.c.bf16 %v4063, %v4059
        %v4132 = vpack.c.bf16 %v4068, %v4064
        %v4133 = vpack.c.bf16 %v4069, %v4065
        %v4134 = vpack.c.bf16 %v4070, %v4066
        %v4135 = vpack.c.bf16 %v4071, %v4067
        %v4136 = vpack.c.bf16 %v4076, %v4072
        %v4137 = vpack.c.bf16 %v4077, %v4073
        %v4138 = vpack.c.bf16 %v4078, %v4074
        %v4139 = vpack.c.bf16 %v4079, %v4075
        %v4140 = vpack.c.bf16 %v4084, %v4080
        %v4141 = vpack.c.bf16 %v4085, %v4081
        %v4142 = vpack.c.bf16 %v4086, %v4082
        %v4143 = vpack.c.bf16 %v4087, %v4083
        %v4144 = vpack.c.bf16 %v4092, %v4088
        %v4145 = vpack.c.bf16 %v4093, %v4089
        %v4146 = vpack.c.bf16 %v4094, %v4090
        %v4147 = vpack.c.bf16 %v4095, %v4091
        %v4148 = vpack.c.bf16 %v4100, %v4096
        %v4149 = vpack.c.bf16 %v4101, %v4097
        %v4150 = vpack.c.bf16 %v4102, %v4098
        %v4151 = vpack.c.bf16 %v4103, %v4099
        %v4152 = vpack.c.bf16 %v4108, %v4104
        %v4153 = vpack.c.bf16 %v4109, %v4105
        %v4154 = vpack.c.bf16 %v4110, %v4106
        %v4155 = vpack.c.bf16 %v4111, %v4107
        %v4156 = vpack.c.bf16 %v4116, %v4112
        %v4157 = vpack.c.bf16 %v4117, %v4113
        %v4158 = vpack.c.bf16 %v4118, %v4114
        %v4159 = vpack.c.bf16 %v4119, %v4115
        %v4160 = vpack.c.bf16 %v4124, %v4120
        %v4161 = vpack.c.bf16 %v4125, %v4121
        %v4162 = vpack.c.bf16 %v4126, %v4122
        %v4163 = vpack.c.bf16 %v4127, %v4123
        %v4164 = vld [vmem:[#allocation3] sm:$0xff]
        %v4165 = vld [vmem:[#allocation3 + $0x8] sm:$0xff]
        %v4166 = vld [vmem:[#allocation3 + $0x10] sm:$0xff]
        %v4167 = vld [vmem:[#allocation3 + $0x18] sm:$0xff]
        %v4168 = vld [vmem:[#allocation3 + $0x20] sm:$0xff]
        %v4169 = vld [vmem:[#allocation3 + $0x28] sm:$0xff]
        %v4170 = vld [vmem:[#allocation3 + $0x30] sm:$0xff]
        %v4171 = vld [vmem:[#allocation3 + $0x38] sm:$0xff]
        %v4172 = vld [vmem:[#allocation3 + $0x40] sm:$0xff]
        %v4173 = vld [vmem:[#allocation3 + $0x48] sm:$0xff]
        %v4174 = vld [vmem:[#allocation3 + $0x50] sm:$0xff]
        %v4175 = vld [vmem:[#allocation3 + $0x58] sm:$0xff]
        %v4176 = vld [vmem:[#allocation3 + $0x60] sm:$0xff]
        %v4177 = vld [vmem:[#allocation3 + $0x68] sm:$0xff]
        %v4178 = vld [vmem:[#allocation3 + $0x70] sm:$0xff]
        %v4179 = vld [vmem:[#allocation3 + $0x78] sm:$0xff]
        %v4180 = vld [vmem:[#allocation3 + $0x80] sm:$0xff]
        %v4181 = vld [vmem:[#allocation3 + $0x88] sm:$0xff]
        %v4182 = vld [vmem:[#allocation3 + $0x90] sm:$0xff]
        %v4183 = vld [vmem:[#allocation3 + $0x98] sm:$0xff]
        %v4184 = vld [vmem:[#allocation3 + $0xa0] sm:$0xff]
        %v4185 = vld [vmem:[#allocation3 + $0xa8] sm:$0xff]
        %v4186 = vld [vmem:[#allocation3 + $0xb0] sm:$0xff]
        %v4187 = vld [vmem:[#allocation3 + $0xb8] sm:$0xff]
        %v4188 = vld [vmem:[#allocation3 + $0xc0] sm:$0xff]
        %v4189 = vld [vmem:[#allocation3 + $0xc8] sm:$0xff]
        %v4190 = vld [vmem:[#allocation3 + $0xd0] sm:$0xff]
        %v4191 = vld [vmem:[#allocation3 + $0xd8] sm:$0xff]
        %v4192 = vld [vmem:[#allocation3 + $0xe0] sm:$0xff]
        %v4193 = vld [vmem:[#allocation3 + $0xe8] sm:$0xff]
        %v4194 = vld [vmem:[#allocation3 + $0xf0] sm:$0xff]
        %v4195 = vld [vmem:[#allocation3 + $0xf8] sm:$0xff]
        %v4196 = vld [vmem:[#allocation3 + $0x100] sm:$0xff]
        %v4197 = vld [vmem:[#allocation3 + $0x108] sm:$0xff]
        %v4198 = vld [vmem:[#allocation3 + $0x110] sm:$0xff]
        %v4199 = vld [vmem:[#allocation3 + $0x118] sm:$0xff]
        %v4200 = vld [vmem:[%s335] sm:$0xff]
        %v4201 = vld [vmem:[%s335 + $0x8] sm:$0xff]
        %v4202 = vld [vmem:[%s335 + $0x10] sm:$0xff]
        %v4203 = vld [vmem:[%s335 + $0x18] sm:$0xff]
        %v4204 = vld [vmem:[%s335 + $0x20] sm:$0xff]
        %v4205 = vld [vmem:[%s335 + $0x28] sm:$0xff]
        %v4206 = vld [vmem:[%s335 + $0x30] sm:$0xff]
        %v4207 = vld [vmem:[%s335 + $0x38] sm:$0xff]
        %v4208 = vld [vmem:[%s335 + $0x40] sm:$0xff]
        %v4209 = vld [vmem:[%s335 + $0x48] sm:$0xff]
        %v4210 = vld [vmem:[%s335 + $0x50] sm:$0xff]
        %v4211 = vld [vmem:[%s335 + $0x58] sm:$0xff]
        %v4212 = vld [vmem:[%s335 + $0x60] sm:$0xff]
        %v4213 = vld [vmem:[%s335 + $0x68] sm:$0xff]
        %v4214 = vld [vmem:[%s335 + $0x70] sm:$0xff]
        %v4215 = vld [vmem:[%s335 + $0x78] sm:$0xff]
        %v4216 = vld [vmem:[%s335 + $0x80] sm:$0xff]
        %v4217 = vld [vmem:[%s335 + $0x88] sm:$0xff]
        %v4218 = vld [vmem:[%s335 + $0x90] sm:$0xff]
        %v4219 = vld [vmem:[%s335 + $0x98] sm:$0xff]
        %v4220 = vld [vmem:[%s335 + $0xa0] sm:$0xff]
        %v4221 = vld [vmem:[%s335 + $0xa8] sm:$0xff]
        %v4222 = vld [vmem:[%s335 + $0xb0] sm:$0xff]
        %v4223 = vld [vmem:[%s335 + $0xb8] sm:$0xff]
        %v4224 = vld [vmem:[%s335 + $0xc0] sm:$0xff]
        %v4225 = vld [vmem:[%s335 + $0xc8] sm:$0xff]
        %v4226 = vld [vmem:[%s335 + $0xd0] sm:$0xff]
        %v4227 = vld [vmem:[%s335 + $0xd8] sm:$0xff]
        %v4228 = vld [vmem:[%s335 + $0xe0] sm:$0xff]
        %v4229 = vld [vmem:[%s335 + $0xe8] sm:$0xff]
        %v4230 = vld [vmem:[%s335 + $0xf0] sm:$0xff]
        %v4231 = vld [vmem:[%s335 + $0xf8] sm:$0xff]
        %v4232 = vld [vmem:[%s335 + $0x100] sm:$0xff]
        %v4233 = vld [vmem:[%s335 + $0x108] sm:$0xff]
        %v4234 = vld [vmem:[%s335 + $0x110] sm:$0xff]
        %v4235 = vld [vmem:[%s335 + $0x118] sm:$0xff]
        %v4236 = vld [vmem:[%s335 + $0x120] sm:$0xff]
        %v4237 = vld [vmem:[%s335 + $0x128] sm:$0xff]
        %v4238 = vld [vmem:[%s335 + $0x130] sm:$0xff]
        %v4239 = vld [vmem:[%s335 + $0x138] sm:$0xff]
        %v4240 = vld [vmem:[%s335 + $0x140] sm:$0xff]
        %v4241 = vld [vmem:[%s335 + $0x148] sm:$0xff]
        %v4242 = vld [vmem:[%s335 + $0x150] sm:$0xff]
        %v4243 = vld [vmem:[%s335 + $0x158] sm:$0xff]
        %v4244 = vld [vmem:[%s335 + $0x160] sm:$0xff]
        %v4245 = vld [vmem:[%s335 + $0x168] sm:$0xff]
        %v4246 = vld [vmem:[%s335 + $0x170] sm:$0xff]
        %v4247 = vld [vmem:[%s335 + $0x178] sm:$0xff]
        %v4248 = vld [vmem:[%s335 + $0x180] sm:$0xff]
        %v4249 = vld [vmem:[%s335 + $0x188] sm:$0xff]
        %v4250 = vld [vmem:[%s335 + $0x190] sm:$0xff]
        %v4251 = vld [vmem:[%s335 + $0x198] sm:$0xff]
        %v4252 = vld [vmem:[%s335 + $0x1a0] sm:$0xff]
        %v4253 = vld [vmem:[%s335 + $0x1a8] sm:$0xff]
        %v4254 = vld [vmem:[%s335 + $0x1b0] sm:$0xff]
        %v4255 = vld [vmem:[%s335 + $0x1b8] sm:$0xff]
        %v4256 = vld [vmem:[%s335 + $0x1c0] sm:$0xff]
        %v4257 = vld [vmem:[%s335 + $0x1c8] sm:$0xff]
        %v4258 = vld [vmem:[%s335 + $0x1d0] sm:$0xff]
        %v4259 = vld [vmem:[%s335 + $0x1d8] sm:$0xff]
        %v4260 = vld [vmem:[%s335 + $0x1e0] sm:$0xff]
        %v4261 = vld [vmem:[%s335 + $0x1e8] sm:$0xff]
        %v4262 = vld [vmem:[%s335 + $0x1f0] sm:$0xff]
        %v4263 = vld [vmem:[%s335 + $0x1f8] sm:$0xff]
        %v4328 = vunpack.c.l.b16 %v4200
        %v4329 = vunpack.c.h.b16 %v4200
        %v4330 = vunpack.c.l.b16 %v4201
        %v4331 = vunpack.c.h.b16 %v4201
        %v4332 = vunpack.c.l.b16 %v4202
        %v4333 = vunpack.c.h.b16 %v4202
        %v4334 = vunpack.c.l.b16 %v4203
        %v4335 = vunpack.c.h.b16 %v4203
        %v4336 = vunpack.c.l.b16 %v4204
        %v4337 = vunpack.c.h.b16 %v4204
        %v4338 = vunpack.c.l.b16 %v4205
        %v4339 = vunpack.c.h.b16 %v4205
        %v4340 = vunpack.c.l.b16 %v4206
        %v4341 = vunpack.c.h.b16 %v4206
        %v4342 = vunpack.c.l.b16 %v4207
        %v4343 = vunpack.c.h.b16 %v4207
        %v4344 = vunpack.c.l.b16 %v4208
        %v4345 = vunpack.c.h.b16 %v4208
        %v4346 = vunpack.c.l.b16 %v4209
        %v4347 = vunpack.c.h.b16 %v4209
        %v4348 = vunpack.c.l.b16 %v4210
        %v4349 = vunpack.c.h.b16 %v4210
        %v4350 = vunpack.c.l.b16 %v4211
        %v4351 = vunpack.c.h.b16 %v4211
        %v4352 = vunpack.c.l.b16 %v4212
        %v4353 = vunpack.c.h.b16 %v4212
        %v4354 = vunpack.c.l.b16 %v4213
        %v4355 = vunpack.c.h.b16 %v4213
        %v4356 = vunpack.c.l.b16 %v4214
        %v4357 = vunpack.c.h.b16 %v4214
        %v4358 = vunpack.c.l.b16 %v4215
        %v4359 = vunpack.c.h.b16 %v4215
        %v4360 = vunpack.c.l.b16 %v4216
        %v4361 = vunpack.c.h.b16 %v4216
        %v4362 = vunpack.c.l.b16 %v4217
        %v4363 = vunpack.c.h.b16 %v4217
        %v4364 = vunpack.c.l.b16 %v4218
        %v4365 = vunpack.c.h.b16 %v4218
        %v4366 = vunpack.c.l.b16 %v4219
        %v4367 = vunpack.c.h.b16 %v4219
        %v4368 = vunpack.c.l.b16 %v4220
        %v4369 = vunpack.c.h.b16 %v4220
        %v4370 = vunpack.c.l.b16 %v4221
        %v4371 = vunpack.c.h.b16 %v4221
        %v4372 = vunpack.c.l.b16 %v4222
        %v4373 = vunpack.c.h.b16 %v4222
        %v4374 = vunpack.c.l.b16 %v4223
        %v4375 = vunpack.c.h.b16 %v4223
        %v4376 = vunpack.c.l.b16 %v4224
        %v4377 = vunpack.c.h.b16 %v4224
        %v4378 = vunpack.c.l.b16 %v4225
        %v4379 = vunpack.c.h.b16 %v4225
        %v4380 = vunpack.c.l.b16 %v4226
        %v4381 = vunpack.c.h.b16 %v4226
        %v4382 = vunpack.c.l.b16 %v4227
        %v4383 = vunpack.c.h.b16 %v4227
        %v4384 = vunpack.c.l.b16 %v4228
        %v4385 = vunpack.c.h.b16 %v4228
        %v4386 = vunpack.c.l.b16 %v4229
        %v4387 = vunpack.c.h.b16 %v4229
        %v4388 = vunpack.c.l.b16 %v4230
        %v4389 = vunpack.c.h.b16 %v4230
        %v4390 = vunpack.c.l.b16 %v4231
        %v4391 = vunpack.c.h.b16 %v4231
        %v4392 = vunpack.c.l.b16 %v4232
        %v4393 = vunpack.c.h.b16 %v4232
        %v4394 = vunpack.c.l.b16 %v4233
        %v4395 = vunpack.c.h.b16 %v4233
        %v4396 = vunpack.c.l.b16 %v4234
        %v4397 = vunpack.c.h.b16 %v4234
        %v4398 = vunpack.c.l.b16 %v4235
        %v4399 = vunpack.c.h.b16 %v4235
        %v4400 = vunpack.c.l.b16 %v4236
        %v4401 = vunpack.c.h.b16 %v4236
        %v4402 = vunpack.c.l.b16 %v4237
        %v4403 = vunpack.c.h.b16 %v4237
        %v4404 = vunpack.c.l.b16 %v4238
        %v4405 = vunpack.c.h.b16 %v4238
        %v4406 = vunpack.c.l.b16 %v4239
        %v4407 = vunpack.c.h.b16 %v4239
        %v4408 = vunpack.c.l.b16 %v4240
        %v4409 = vunpack.c.h.b16 %v4240
        %v4410 = vunpack.c.l.b16 %v4241
        %v4411 = vunpack.c.h.b16 %v4241
        %v4412 = vunpack.c.l.b16 %v4242
        %v4413 = vunpack.c.h.b16 %v4242
        %v4414 = vunpack.c.l.b16 %v4243
        %v4415 = vunpack.c.h.b16 %v4243
        %v4416 = vunpack.c.l.b16 %v4244
        %v4417 = vunpack.c.h.b16 %v4244
        %v4418 = vunpack.c.l.b16 %v4245
        %v4419 = vunpack.c.h.b16 %v4245
        %v4420 = vunpack.c.l.b16 %v4246
        %v4421 = vunpack.c.h.b16 %v4246
        %v4422 = vunpack.c.l.b16 %v4247
        %v4423 = vunpack.c.h.b16 %v4247
        %v4424 = vunpack.c.l.b16 %v4248
        %v4425 = vunpack.c.h.b16 %v4248
        %v4426 = vunpack.c.l.b16 %v4249
        %v4427 = vunpack.c.h.b16 %v4249
        %v4428 = vunpack.c.l.b16 %v4250
        %v4429 = vunpack.c.h.b16 %v4250
        %v4430 = vunpack.c.l.b16 %v4251
        %v4431 = vunpack.c.h.b16 %v4251
        %v4432 = vunpack.c.l.b16 %v4252
        %v4433 = vunpack.c.h.b16 %v4252
        %v4434 = vunpack.c.l.b16 %v4253
        %v4435 = vunpack.c.h.b16 %v4253
        %v4436 = vunpack.c.l.b16 %v4254
        %v4437 = vunpack.c.h.b16 %v4254
        %v4438 = vunpack.c.l.b16 %v4255
        %v4439 = vunpack.c.h.b16 %v4255
        %v4440 = vunpack.c.l.b16 %v4256
        %v4441 = vunpack.c.h.b16 %v4256
        %v4442 = vunpack.c.l.b16 %v4257
        %v4443 = vunpack.c.h.b16 %v4257
        %v4444 = vunpack.c.l.b16 %v4258
        %v4445 = vunpack.c.h.b16 %v4258
        %v4446 = vunpack.c.l.b16 %v4259
        %v4447 = vunpack.c.h.b16 %v4259
        %v4448 = vunpack.c.l.b16 %v4260
        %v4449 = vunpack.c.h.b16 %v4260
        %v4450 = vunpack.c.l.b16 %v4261
        %v4451 = vunpack.c.h.b16 %v4261
        %v4452 = vunpack.c.l.b16 %v4262
        %v4453 = vunpack.c.h.b16 %v4262
        %v4454 = vunpack.c.l.b16 %v4263
        %v4455 = vunpack.c.h.b16 %v4263
        %v4456 = vpack.c.b16 %v4332, %v4328
        %v4457 = vpack.c.b16 %v4333, %v4329
        %v4458 = vpack.c.b16 %v4334, %v4330
        %v4459 = vpack.c.b16 %v4335, %v4331
        %v4460 = vpack.c.b16 %v4340, %v4336
        %v4461 = vpack.c.b16 %v4341, %v4337
        %v4462 = vpack.c.b16 %v4342, %v4338
        %v4463 = vpack.c.b16 %v4343, %v4339
        %v4464 = vpack.c.b16 %v4348, %v4344
        %v4465 = vpack.c.b16 %v4349, %v4345
        %v4466 = vpack.c.b16 %v4350, %v4346
        %v4467 = vpack.c.b16 %v4351, %v4347
        %v4468 = vpack.c.b16 %v4356, %v4352
        %v4469 = vpack.c.b16 %v4357, %v4353
        %v4470 = vpack.c.b16 %v4358, %v4354
        %v4471 = vpack.c.b16 %v4359, %v4355
        %v4472 = vpack.c.b16 %v4364, %v4360
        %v4473 = vpack.c.b16 %v4365, %v4361
        %v4474 = vpack.c.b16 %v4366, %v4362
        %v4475 = vpack.c.b16 %v4367, %v4363
        %v4476 = vpack.c.b16 %v4372, %v4368
        %v4477 = vpack.c.b16 %v4373, %v4369
        %v4478 = vpack.c.b16 %v4374, %v4370
        %v4479 = vpack.c.b16 %v4375, %v4371
        %v4480 = vpack.c.b16 %v4380, %v4376
        %v4481 = vpack.c.b16 %v4381, %v4377
        %v4482 = vpack.c.b16 %v4382, %v4378
        %v4483 = vpack.c.b16 %v4383, %v4379
        %v4484 = vpack.c.b16 %v4388, %v4384
        %v4485 = vpack.c.b16 %v4389, %v4385
        %v4486 = vpack.c.b16 %v4390, %v4386
        %v4487 = vpack.c.b16 %v4391, %v4387
        %v4488 = vpack.c.b16 %v4396, %v4392
        %v4489 = vpack.c.b16 %v4397, %v4393
        %v4490 = vpack.c.b16 %v4398, %v4394
        %v4491 = vpack.c.b16 %v4399, %v4395
        %v4492 = vpack.c.b16 %v4404, %v4400
        %v4493 = vpack.c.b16 %v4405, %v4401
        %v4494 = vpack.c.b16 %v4406, %v4402
        %v4495 = vpack.c.b16 %v4407, %v4403
        %v4496 = vpack.c.b16 %v4412, %v4408
        %v4497 = vpack.c.b16 %v4413, %v4409
        %v4498 = vpack.c.b16 %v4414, %v4410
        %v4499 = vpack.c.b16 %v4415, %v4411
        %v4500 = vpack.c.b16 %v4420, %v4416
        %v4501 = vpack.c.b16 %v4421, %v4417
        %v4502 = vpack.c.b16 %v4422, %v4418
        %v4503 = vpack.c.b16 %v4423, %v4419
        %v4504 = vpack.c.b16 %v4428, %v4424
        %v4505 = vpack.c.b16 %v4429, %v4425
        %v4506 = vpack.c.b16 %v4430, %v4426
        %v4507 = vpack.c.b16 %v4431, %v4427
        %v4508 = vpack.c.b16 %v4436, %v4432
        %v4509 = vpack.c.b16 %v4437, %v4433
        %v4510 = vpack.c.b16 %v4438, %v4434
        %v4511 = vpack.c.b16 %v4439, %v4435
        %v4512 = vpack.c.b16 %v4444, %v4440
        %v4513 = vpack.c.b16 %v4445, %v4441
        %v4514 = vpack.c.b16 %v4446, %v4442
        %v4515 = vpack.c.b16 %v4447, %v4443
        %v4516 = vpack.c.b16 %v4452, %v4448
        %v4517 = vpack.c.b16 %v4453, %v4449
        %v4518 = vpack.c.b16 %v4454, %v4450
        %v4519 = vpack.c.b16 %v4455, %v4451
        %4584 = vmatpush.bf16.xpose.msra.mxu0 %v4484
        %4585 = vmatpush.bf16.xpose.msra.mxu0 %v4480
        %4586 = vmatpush.bf16.xpose.msra.mxu0 %v4476
        %4587 = vmatpush.bf16.xpose.msra.mxu0 %v4472
        %4588 = vmatpush.bf16.xpose.msra.mxu0 %v4468
        %4589 = vmatpush.bf16.xpose.msra.mxu0 %v4464
        %4590 = vmatpush.bf16.xpose.msra.mxu0 %v4460
        %4591 = vmatpush.bf16.xpose.msra.mxu0 %v4456
        %4592 = vmatmul.bf16.gmra.mxu0 %v4128
        %v4593 = vpop.f32.mrf.mxu0
        %v4594 = vadd.f32 0.0, %v4593
        %v4595 = vpop.f32.mrf.mxu0
        %v4596 = vadd.f32 0.0, %v4595
        %4597 = vmatmul.bf16.gmra.mxu0 %v4132
        %v4598 = vpop.f32.mrf.mxu0
        %v4599 = vadd.f32 0.0, %v4598
        %v4600 = vpop.f32.mrf.mxu0
        %v4601 = vadd.f32 0.0, %v4600
        %4602 = vmatmul.bf16.gmra.mxu0 %v4136
        %v4603 = vpop.f32.mrf.mxu0
        %v4604 = vadd.f32 0.0, %v4603
        %v4605 = vpop.f32.mrf.mxu0
        %v4606 = vadd.f32 0.0, %v4605
        %4607 = vmatmul.bf16.gmra.mxu0 %v4140
        %v4608 = vpop.f32.mrf.mxu0
        %v4609 = vadd.f32 0.0, %v4608
        %v4610 = vpop.f32.mrf.mxu0
        %v4611 = vadd.f32 0.0, %v4610
        %4612 = vmatmul.bf16.gmra.mxu0 %v4144
        %v4613 = vpop.f32.mrf.mxu0
        %v4614 = vadd.f32 0.0, %v4613
        %v4615 = vpop.f32.mrf.mxu0
        %v4616 = vadd.f32 0.0, %v4615
        %4617 = vmatmul.bf16.gmra.mxu0 %v4148
        %v4618 = vpop.f32.mrf.mxu0
        %v4619 = vadd.f32 0.0, %v4618
        %v4620 = vpop.f32.mrf.mxu0
        %v4621 = vadd.f32 0.0, %v4620
        %4622 = vmatmul.bf16.gmra.mxu0 %v4152
        %v4623 = vpop.f32.mrf.mxu0
        %v4624 = vadd.f32 0.0, %v4623
        %v4625 = vpop.f32.mrf.mxu0
        %v4626 = vadd.f32 0.0, %v4625
        %4627 = vmatmul.bf16.gmra.mxu0 %v4156
        %v4628 = vpop.f32.mrf.mxu0
        %v4629 = vadd.f32 0.0, %v4628
        %v4630 = vpop.f32.mrf.mxu0
        %v4631 = vadd.f32 0.0, %v4630
        %4632 = vmatmul.bf16.gmra.mxu0 %v4160
        %v4633 = vpop.f32.mrf.mxu0
        %v4634 = vadd.f32 0.0, %v4633
        %v4635 = vpop.f32.mrf.mxu0
        %v4636 = vadd.f32 0.0, %v4635
        %4637 = vdwg.mxu0
        %4638 = vmatpush.bf16.xpose.msra.mxu0 %v4485
        %4639 = vmatpush.bf16.xpose.msra.mxu0 %v4481
        %4640 = vmatpush.bf16.xpose.msra.mxu0 %v4477
        %4641 = vmatpush.bf16.xpose.msra.mxu0 %v4473
        %4642 = vmatpush.bf16.xpose.msra.mxu0 %v4469
        %4643 = vmatpush.bf16.xpose.msra.mxu0 %v4465
        %4644 = vmatpush.bf16.xpose.msra.mxu0 %v4461
        %4645 = vmatpush.bf16.xpose.msra.mxu0 %v4457
        %4646 = vmatmul.bf16.gmra.mxu0 %v4129
        %v4647 = vpop.f32.mrf.mxu0
        %v4648 = vadd.f32 %v4594, %v4647
        %v4649 = vpop.f32.mrf.mxu0
        %v4650 = vadd.f32 %v4596, %v4649
        %4651 = vmatmul.bf16.gmra.mxu0 %v4133
        %v4652 = vpop.f32.mrf.mxu0
        %v4653 = vadd.f32 %v4599, %v4652
        %v4654 = vpop.f32.mrf.mxu0
        %v4655 = vadd.f32 %v4601, %v4654
        %4656 = vmatmul.bf16.gmra.mxu0 %v4137
        %v4657 = vpop.f32.mrf.mxu0
        %v4658 = vadd.f32 %v4604, %v4657
        %v4659 = vpop.f32.mrf.mxu0
        %v4660 = vadd.f32 %v4606, %v4659
        %4661 = vmatmul.bf16.gmra.mxu0 %v4141
        %v4662 = vpop.f32.mrf.mxu0
        %v4663 = vadd.f32 %v4609, %v4662
        %v4664 = vpop.f32.mrf.mxu0
        %v4665 = vadd.f32 %v4611, %v4664
        %4666 = vmatmul.bf16.gmra.mxu0 %v4145
        %v4667 = vpop.f32.mrf.mxu0
        %v4668 = vadd.f32 %v4614, %v4667
        %v4669 = vpop.f32.mrf.mxu0
        %v4670 = vadd.f32 %v4616, %v4669
        %4671 = vmatmul.bf16.gmra.mxu0 %v4149
        %v4672 = vpop.f32.mrf.mxu0
        %v4673 = vadd.f32 %v4619, %v4672
        %v4674 = vpop.f32.mrf.mxu0
        %v4675 = vadd.f32 %v4621, %v4674
        %4676 = vmatmul.bf16.gmra.mxu0 %v4153
        %v4677 = vpop.f32.mrf.mxu0
        %v4678 = vadd.f32 %v4624, %v4677
        %v4679 = vpop.f32.mrf.mxu0
        %v4680 = vadd.f32 %v4626, %v4679
        %4681 = vmatmul.bf16.gmra.mxu0 %v4157
        %v4682 = vpop.f32.mrf.mxu0
        %v4683 = vadd.f32 %v4629, %v4682
        %v4684 = vpop.f32.mrf.mxu0
        %v4685 = vadd.f32 %v4631, %v4684
        %4686 = vmatmul.bf16.gmra.mxu0 %v4161
        %v4687 = vpop.f32.mrf.mxu0
        %v4688 = vadd.f32 %v4634, %v4687
        %v4689 = vpop.f32.mrf.mxu0
        %v4690 = vadd.f32 %v4636, %v4689
        %4691 = vdwg.mxu0
        %4692 = vmatpush.bf16.xpose.msra.mxu0 %v4486
        %4693 = vmatpush.bf16.xpose.msra.mxu0 %v4482
        %4694 = vmatpush.bf16.xpose.msra.mxu0 %v4478
        %4695 = vmatpush.bf16.xpose.msra.mxu0 %v4474
        %4696 = vmatpush.bf16.xpose.msra.mxu0 %v4470
        %4697 = vmatpush.bf16.xpose.msra.mxu0 %v4466
        %4698 = vmatpush.bf16.xpose.msra.mxu0 %v4462
        %4699 = vmatpush.bf16.xpose.msra.mxu0 %v4458
        %4700 = vmatmul.bf16.gmra.mxu0 %v4130
        %v4701 = vpop.f32.mrf.mxu0
        %v4702 = vadd.f32 %v4648, %v4701
        %v4703 = vpop.f32.mrf.mxu0
        %v4704 = vadd.f32 %v4650, %v4703
        %4705 = vmatmul.bf16.gmra.mxu0 %v4134
        %v4706 = vpop.f32.mrf.mxu0
        %v4707 = vadd.f32 %v4653, %v4706
        %v4708 = vpop.f32.mrf.mxu0
        %v4709 = vadd.f32 %v4655, %v4708
        %4710 = vmatmul.bf16.gmra.mxu0 %v4138
        %v4711 = vpop.f32.mrf.mxu0
        %v4712 = vadd.f32 %v4658, %v4711
        %v4713 = vpop.f32.mrf.mxu0
        %v4714 = vadd.f32 %v4660, %v4713
        %4715 = vmatmul.bf16.gmra.mxu0 %v4142
        %v4716 = vpop.f32.mrf.mxu0
        %v4717 = vadd.f32 %v4663, %v4716
        %v4718 = vpop.f32.mrf.mxu0
        %v4719 = vadd.f32 %v4665, %v4718
        %4720 = vmatmul.bf16.gmra.mxu0 %v4146
        %v4721 = vpop.f32.mrf.mxu0
        %v4722 = vadd.f32 %v4668, %v4721
        %v4723 = vpop.f32.mrf.mxu0
        %v4724 = vadd.f32 %v4670, %v4723
        %4725 = vmatmul.bf16.gmra.mxu0 %v4150
        %v4726 = vpop.f32.mrf.mxu0
        %v4727 = vadd.f32 %v4673, %v4726
        %v4728 = vpop.f32.mrf.mxu0
        %v4729 = vadd.f32 %v4675, %v4728
        %4730 = vmatmul.bf16.gmra.mxu0 %v4154
        %v4731 = vpop.f32.mrf.mxu0
        %v4732 = vadd.f32 %v4678, %v4731
        %v4733 = vpop.f32.mrf.mxu0
        %v4734 = vadd.f32 %v4680, %v4733
        %4735 = vmatmul.bf16.gmra.mxu0 %v4158
        %v4736 = vpop.f32.mrf.mxu0
        %v4737 = vadd.f32 %v4683, %v4736
        %v4738 = vpop.f32.mrf.mxu0
        %v4739 = vadd.f32 %v4685, %v4738
        %4740 = vmatmul.bf16.gmra.mxu0 %v4162
        %v4741 = vpop.f32.mrf.mxu0
        %v4742 = vadd.f32 %v4688, %v4741
        %v4743 = vpop.f32.mrf.mxu0
        %v4744 = vadd.f32 %v4690, %v4743
        %4745 = vdwg.mxu0
        %4746 = vmatpush.bf16.xpose.msra.mxu0 %v4487
        %4747 = vmatpush.bf16.xpose.msra.mxu0 %v4483
        %4748 = vmatpush.bf16.xpose.msra.mxu0 %v4479
        %4749 = vmatpush.bf16.xpose.msra.mxu0 %v4475
        %4750 = vmatpush.bf16.xpose.msra.mxu0 %v4471
        %4751 = vmatpush.bf16.xpose.msra.mxu0 %v4467
        %4752 = vmatpush.bf16.xpose.msra.mxu0 %v4463
        %4753 = vmatpush.bf16.xpose.msra.mxu0 %v4459
        %4754 = vmatmul.bf16.gmra.mxu0 %v4131
        %v4755 = vpop.f32.mrf.mxu0
        %v4756 = vadd.f32 %v4702, %v4755
        %v4757 = vpop.f32.mrf.mxu0
        %v4758 = vadd.f32 %v4704, %v4757
        %4759 = vmatmul.bf16.gmra.mxu0 %v4135
        %v4760 = vpop.f32.mrf.mxu0
        %v4761 = vadd.f32 %v4707, %v4760
        %v4762 = vpop.f32.mrf.mxu0
        %v4763 = vadd.f32 %v4709, %v4762
        %4764 = vmatmul.bf16.gmra.mxu0 %v4139
        %v4765 = vpop.f32.mrf.mxu0
        %v4766 = vadd.f32 %v4712, %v4765
        %v4767 = vpop.f32.mrf.mxu0
        %v4768 = vadd.f32 %v4714, %v4767
        %4769 = vmatmul.bf16.gmra.mxu0 %v4143
        %v4770 = vpop.f32.mrf.mxu0
        %v4771 = vadd.f32 %v4717, %v4770
        %v4772 = vpop.f32.mrf.mxu0
        %v4773 = vadd.f32 %v4719, %v4772
        %4774 = vmatmul.bf16.gmra.mxu0 %v4147
        %v4775 = vpop.f32.mrf.mxu0
        %v4776 = vadd.f32 %v4722, %v4775
        %v4777 = vpop.f32.mrf.mxu0
        %v4778 = vadd.f32 %v4724, %v4777
        %4779 = vmatmul.bf16.gmra.mxu0 %v4151
        %v4780 = vpop.f32.mrf.mxu0
        %v4781 = vadd.f32 %v4727, %v4780
        %v4782 = vpop.f32.mrf.mxu0
        %v4783 = vadd.f32 %v4729, %v4782
        %4784 = vmatmul.bf16.gmra.mxu0 %v4155
        %v4785 = vpop.f32.mrf.mxu0
        %v4786 = vadd.f32 %v4732, %v4785
        %v4787 = vpop.f32.mrf.mxu0
        %v4788 = vadd.f32 %v4734, %v4787
        %4789 = vmatmul.bf16.gmra.mxu0 %v4159
        %v4790 = vpop.f32.mrf.mxu0
        %v4791 = vadd.f32 %v4737, %v4790
        %v4792 = vpop.f32.mrf.mxu0
        %v4793 = vadd.f32 %v4739, %v4792
        %4794 = vmatmul.bf16.gmra.mxu0 %v4163
        %v4795 = vpop.f32.mrf.mxu0
        %v4796 = vadd.f32 %v4742, %v4795
        %v4797 = vpop.f32.mrf.mxu0
        %v4798 = vadd.f32 %v4744, %v4797
        %4799 = vdwg.mxu0
        %4800 = vmatpush.bf16.xpose.msra.mxu0 %v4516
        %4801 = vmatpush.bf16.xpose.msra.mxu0 %v4512
        %4802 = vmatpush.bf16.xpose.msra.mxu0 %v4508
        %4803 = vmatpush.bf16.xpose.msra.mxu0 %v4504
        %4804 = vmatpush.bf16.xpose.msra.mxu0 %v4500
        %4805 = vmatpush.bf16.xpose.msra.mxu0 %v4496
        %4806 = vmatpush.bf16.xpose.msra.mxu0 %v4492
        %4807 = vmatpush.bf16.xpose.msra.mxu0 %v4488
        %4808 = vmatmul.bf16.gmra.mxu0 %v4128
        %v4809 = vpop.f32.mrf.mxu0
        %v4810 = vadd.f32 0.0, %v4809
        %v4811 = vpop.f32.mrf.mxu0
        %v4812 = vadd.f32 0.0, %v4811
        %4813 = vmatmul.bf16.gmra.mxu0 %v4132
        %v4814 = vpop.f32.mrf.mxu0
        %v4815 = vadd.f32 0.0, %v4814
        %v4816 = vpop.f32.mrf.mxu0
        %v4817 = vadd.f32 0.0, %v4816
        %4818 = vmatmul.bf16.gmra.mxu0 %v4136
        %v4819 = vpop.f32.mrf.mxu0
        %v4820 = vadd.f32 0.0, %v4819
        %v4821 = vpop.f32.mrf.mxu0
        %v4822 = vadd.f32 0.0, %v4821
        %4823 = vmatmul.bf16.gmra.mxu0 %v4140
        %v4824 = vpop.f32.mrf.mxu0
        %v4825 = vadd.f32 0.0, %v4824
        %v4826 = vpop.f32.mrf.mxu0
        %v4827 = vadd.f32 0.0, %v4826
        %4828 = vmatmul.bf16.gmra.mxu0 %v4144
        %v4829 = vpop.f32.mrf.mxu0
        %v4830 = vadd.f32 0.0, %v4829
        %v4831 = vpop.f32.mrf.mxu0
        %v4832 = vadd.f32 0.0, %v4831
        %4833 = vmatmul.bf16.gmra.mxu0 %v4148
        %v4834 = vpop.f32.mrf.mxu0
        %v4835 = vadd.f32 0.0, %v4834
        %v4836 = vpop.f32.mrf.mxu0
        %v4837 = vadd.f32 0.0, %v4836
        %4838 = vmatmul.bf16.gmra.mxu0 %v4152
        %v4839 = vpop.f32.mrf.mxu0
        %v4840 = vadd.f32 0.0, %v4839
        %v4841 = vpop.f32.mrf.mxu0
        %v4842 = vadd.f32 0.0, %v4841
        %4843 = vmatmul.bf16.gmra.mxu0 %v4156
        %v4844 = vpop.f32.mrf.mxu0
        %v4845 = vadd.f32 0.0, %v4844
        %v4846 = vpop.f32.mrf.mxu0
        %v4847 = vadd.f32 0.0, %v4846
        %4848 = vmatmul.bf16.gmra.mxu0 %v4160
        %v4849 = vpop.f32.mrf.mxu0
        %v4850 = vadd.f32 0.0, %v4849
        %v4851 = vpop.f32.mrf.mxu0
        %v4852 = vadd.f32 0.0, %v4851
        %4853 = vdwg.mxu0
        %4854 = vmatpush.bf16.xpose.msra.mxu0 %v4517
        %4855 = vmatpush.bf16.xpose.msra.mxu0 %v4513
        %4856 = vmatpush.bf16.xpose.msra.mxu0 %v4509
        %4857 = vmatpush.bf16.xpose.msra.mxu0 %v4505
        %4858 = vmatpush.bf16.xpose.msra.mxu0 %v4501
        %4859 = vmatpush.bf16.xpose.msra.mxu0 %v4497
        %4860 = vmatpush.bf16.xpose.msra.mxu0 %v4493
        %4861 = vmatpush.bf16.xpose.msra.mxu0 %v4489
        %4862 = vmatmul.bf16.gmra.mxu0 %v4129
        %v4863 = vpop.f32.mrf.mxu0
        %v4864 = vadd.f32 %v4810, %v4863
        %v4865 = vpop.f32.mrf.mxu0
        %v4866 = vadd.f32 %v4812, %v4865
        %4867 = vmatmul.bf16.gmra.mxu0 %v4133
        %v4868 = vpop.f32.mrf.mxu0
        %v4869 = vadd.f32 %v4815, %v4868
        %v4870 = vpop.f32.mrf.mxu0
        %v4871 = vadd.f32 %v4817, %v4870
        %4872 = vmatmul.bf16.gmra.mxu0 %v4137
        %v4873 = vpop.f32.mrf.mxu0
        %v4874 = vadd.f32 %v4820, %v4873
        %v4875 = vpop.f32.mrf.mxu0
        %v4876 = vadd.f32 %v4822, %v4875
        %4877 = vmatmul.bf16.gmra.mxu0 %v4141
        %v4878 = vpop.f32.mrf.mxu0
        %v4879 = vadd.f32 %v4825, %v4878
        %v4880 = vpop.f32.mrf.mxu0
        %v4881 = vadd.f32 %v4827, %v4880
        %4882 = vmatmul.bf16.gmra.mxu0 %v4145
        %v4883 = vpop.f32.mrf.mxu0
        %v4884 = vadd.f32 %v4830, %v4883
        %v4885 = vpop.f32.mrf.mxu0
        %v4886 = vadd.f32 %v4832, %v4885
        %4887 = vmatmul.bf16.gmra.mxu0 %v4149
        %v4888 = vpop.f32.mrf.mxu0
        %v4889 = vadd.f32 %v4835, %v4888
        %v4890 = vpop.f32.mrf.mxu0
        %v4891 = vadd.f32 %v4837, %v4890
        %4892 = vmatmul.bf16.gmra.mxu0 %v4153
        %v4893 = vpop.f32.mrf.mxu0
        %v4894 = vadd.f32 %v4840, %v4893
        %v4895 = vpop.f32.mrf.mxu0
        %v4896 = vadd.f32 %v4842, %v4895
        %4897 = vmatmul.bf16.gmra.mxu0 %v4157
        %v4898 = vpop.f32.mrf.mxu0
        %v4899 = vadd.f32 %v4845, %v4898
        %v4900 = vpop.f32.mrf.mxu0
        %v4901 = vadd.f32 %v4847, %v4900
        %4902 = vmatmul.bf16.gmra.mxu0 %v4161
        %v4903 = vpop.f32.mrf.mxu0
        %v4904 = vadd.f32 %v4850, %v4903
        %v4905 = vpop.f32.mrf.mxu0
        %v4906 = vadd.f32 %v4852, %v4905
        %4907 = vdwg.mxu0
        %4908 = vmatpush.bf16.xpose.msra.mxu0 %v4518
        %4909 = vmatpush.bf16.xpose.msra.mxu0 %v4514
        %4910 = vmatpush.bf16.xpose.msra.mxu0 %v4510
        %4911 = vmatpush.bf16.xpose.msra.mxu0 %v4506
        %4912 = vmatpush.bf16.xpose.msra.mxu0 %v4502
        %4913 = vmatpush.bf16.xpose.msra.mxu0 %v4498
        %4914 = vmatpush.bf16.xpose.msra.mxu0 %v4494
        %4915 = vmatpush.bf16.xpose.msra.mxu0 %v4490
        %4916 = vmatmul.bf16.gmra.mxu0 %v4130
        %v4917 = vpop.f32.mrf.mxu0
        %v4918 = vadd.f32 %v4864, %v4917
        %v4919 = vpop.f32.mrf.mxu0
        %v4920 = vadd.f32 %v4866, %v4919
        %4921 = vmatmul.bf16.gmra.mxu0 %v4134
        %v4922 = vpop.f32.mrf.mxu0
        %v4923 = vadd.f32 %v4869, %v4922
        %v4924 = vpop.f32.mrf.mxu0
        %v4925 = vadd.f32 %v4871, %v4924
        %4926 = vmatmul.bf16.gmra.mxu0 %v4138
        %v4927 = vpop.f32.mrf.mxu0
        %v4928 = vadd.f32 %v4874, %v4927
        %v4929 = vpop.f32.mrf.mxu0
        %v4930 = vadd.f32 %v4876, %v4929
        %4931 = vmatmul.bf16.gmra.mxu0 %v4142
        %v4932 = vpop.f32.mrf.mxu0
        %v4933 = vadd.f32 %v4879, %v4932
        %v4934 = vpop.f32.mrf.mxu0
        %v4935 = vadd.f32 %v4881, %v4934
        %4936 = vmatmul.bf16.gmra.mxu0 %v4146
        %v4937 = vpop.f32.mrf.mxu0
        %v4938 = vadd.f32 %v4884, %v4937
        %v4939 = vpop.f32.mrf.mxu0
        %v4940 = vadd.f32 %v4886, %v4939
        %4941 = vmatmul.bf16.gmra.mxu0 %v4150
        %v4942 = vpop.f32.mrf.mxu0
        %v4943 = vadd.f32 %v4889, %v4942
        %v4944 = vpop.f32.mrf.mxu0
        %v4945 = vadd.f32 %v4891, %v4944
        %4946 = vmatmul.bf16.gmra.mxu0 %v4154
        %v4947 = vpop.f32.mrf.mxu0
        %v4948 = vadd.f32 %v4894, %v4947
        %v4949 = vpop.f32.mrf.mxu0
        %v4950 = vadd.f32 %v4896, %v4949
        %4951 = vmatmul.bf16.gmra.mxu0 %v4158
        %v4952 = vpop.f32.mrf.mxu0
        %v4953 = vadd.f32 %v4899, %v4952
        %v4954 = vpop.f32.mrf.mxu0
        %v4955 = vadd.f32 %v4901, %v4954
        %4956 = vmatmul.bf16.gmra.mxu0 %v4162
        %v4957 = vpop.f32.mrf.mxu0
        %v4958 = vadd.f32 %v4904, %v4957
        %v4959 = vpop.f32.mrf.mxu0
        %v4960 = vadd.f32 %v4906, %v4959
        %4961 = vdwg.mxu0
        %4962 = vmatpush.bf16.xpose.msra.mxu0 %v4519
        %4963 = vmatpush.bf16.xpose.msra.mxu0 %v4515
        %4964 = vmatpush.bf16.xpose.msra.mxu0 %v4511
        %4965 = vmatpush.bf16.xpose.msra.mxu0 %v4507
        %4966 = vmatpush.bf16.xpose.msra.mxu0 %v4503
        %4967 = vmatpush.bf16.xpose.msra.mxu0 %v4499
        %4968 = vmatpush.bf16.xpose.msra.mxu0 %v4495
        %4969 = vmatpush.bf16.xpose.msra.mxu0 %v4491
        %4970 = vmatmul.bf16.gmra.mxu0 %v4131
        %v4971 = vpop.f32.mrf.mxu0
        %v4972 = vadd.f32 %v4918, %v4971
        %v4973 = vpop.f32.mrf.mxu0
        %v4974 = vadd.f32 %v4920, %v4973
        %4975 = vmatmul.bf16.gmra.mxu0 %v4135
        %v4976 = vpop.f32.mrf.mxu0
        %v4977 = vadd.f32 %v4923, %v4976
        %v4978 = vpop.f32.mrf.mxu0
        %v4979 = vadd.f32 %v4925, %v4978
        %4980 = vmatmul.bf16.gmra.mxu0 %v4139
        %v4981 = vpop.f32.mrf.mxu0
        %v4982 = vadd.f32 %v4928, %v4981
        %v4983 = vpop.f32.mrf.mxu0
        %v4984 = vadd.f32 %v4930, %v4983
        %4985 = vmatmul.bf16.gmra.mxu0 %v4143
        %v4986 = vpop.f32.mrf.mxu0
        %v4987 = vadd.f32 %v4933, %v4986
        %v4988 = vpop.f32.mrf.mxu0
        %v4989 = vadd.f32 %v4935, %v4988
        %4990 = vmatmul.bf16.gmra.mxu0 %v4147
        %v4991 = vpop.f32.mrf.mxu0
        %v4992 = vadd.f32 %v4938, %v4991
        %v4993 = vpop.f32.mrf.mxu0
        %v4994 = vadd.f32 %v4940, %v4993
        %4995 = vmatmul.bf16.gmra.mxu0 %v4151
        %v4996 = vpop.f32.mrf.mxu0
        %v4997 = vadd.f32 %v4943, %v4996
        %v4998 = vpop.f32.mrf.mxu0
        %v4999 = vadd.f32 %v4945, %v4998
        %5000 = vmatmul.bf16.gmra.mxu0 %v4155
        %v5001 = vpop.f32.mrf.mxu0
        %v5002 = vadd.f32 %v4948, %v5001
        %v5003 = vpop.f32.mrf.mxu0
        %v5004 = vadd.f32 %v4950, %v5003
        %5005 = vmatmul.bf16.gmra.mxu0 %v4159
        %v5006 = vpop.f32.mrf.mxu0
        %v5007 = vadd.f32 %v4953, %v5006
        %v5008 = vpop.f32.mrf.mxu0
        %v5009 = vadd.f32 %v4955, %v5008
        %5010 = vmatmul.bf16.gmra.mxu0 %v4163
        %v5011 = vpop.f32.mrf.mxu0
        %v5012 = vadd.f32 %v4958, %v5011
        %v5013 = vpop.f32.mrf.mxu0
        %v5014 = vadd.f32 %v4960, %v5013
        %5015 = vdwg.mxu0
        %v5016 = vadd.f32 %v4164, %v4756
        %v5017 = vadd.f32 %v4165, %v4972
        %v5018 = vadd.f32 %v4166, %v4758
        %v5019 = vadd.f32 %v4167, %v4974
        %v5020 = vadd.f32 %v4168, %v4761
        %v5021 = vadd.f32 %v4169, %v4977
        %v5022 = vadd.f32 %v4170, %v4763
        %v5023 = vadd.f32 %v4171, %v4979
        %v5024 = vadd.f32 %v4172, %v4766
        %v5025 = vadd.f32 %v4173, %v4982
        %v5026 = vadd.f32 %v4174, %v4768
        %v5027 = vadd.f32 %v4175, %v4984
        %v5028 = vadd.f32 %v4176, %v4771
        %v5029 = vadd.f32 %v4177, %v4987
        %v5030 = vadd.f32 %v4178, %v4773
        %v5031 = vadd.f32 %v4179, %v4989
        %v5032 = vadd.f32 %v4180, %v4776
        %v5033 = vadd.f32 %v4181, %v4992
        %v5034 = vadd.f32 %v4182, %v4778
        %v5035 = vadd.f32 %v4183, %v4994
        %v5036 = vadd.f32 %v4184, %v4781
        %v5037 = vadd.f32 %v4185, %v4997
        %v5038 = vadd.f32 %v4186, %v4783
        %v5039 = vadd.f32 %v4187, %v4999
        %v5040 = vadd.f32 %v4188, %v4786
        %v5041 = vadd.f32 %v4189, %v5002
        %v5042 = vadd.f32 %v4190, %v4788
        %v5043 = vadd.f32 %v4191, %v5004
        %v5044 = vadd.f32 %v4192, %v4791
        %v5045 = vadd.f32 %v4193, %v5007
        %v5046 = vadd.f32 %v4194, %v4793
        %v5047 = vadd.f32 %v4195, %v5009
        %v5048 = vadd.f32 %v4196, %v4796
        %v5049 = vadd.f32 %v4197, %v5012
        %v5050 = vadd.f32 %v4198, %v4798
        %v5051 = vadd.f32 %v4199, %v5014
        %5052 = vst [vmem:[#allocation3] sm:$0xff] %v5016
        %5053 = vst [vmem:[#allocation3 + $0x8] sm:$0xff] %v5017
        %5054 = vst [vmem:[#allocation3 + $0x10] sm:$0xff] %v5018
        %5055 = vst [vmem:[#allocation3 + $0x18] sm:$0xff] %v5019
        %5056 = vst [vmem:[#allocation3 + $0x20] sm:$0xff] %v5020
        %5057 = vst [vmem:[#allocation3 + $0x28] sm:$0xff] %v5021
        %5058 = vst [vmem:[#allocation3 + $0x30] sm:$0xff] %v5022
        %5059 = vst [vmem:[#allocation3 + $0x38] sm:$0xff] %v5023
        %5060 = vst [vmem:[#allocation3 + $0x40] sm:$0xff] %v5024
        %5061 = vst [vmem:[#allocation3 + $0x48] sm:$0xff] %v5025
        %5062 = vst [vmem:[#allocation3 + $0x50] sm:$0xff] %v5026
        %5063 = vst [vmem:[#allocation3 + $0x58] sm:$0xff] %v5027
        %5064 = vst [vmem:[#allocation3 + $0x60] sm:$0xff] %v5028
        %5065 = vst [vmem:[#allocation3 + $0x68] sm:$0xff] %v5029
        %5066 = vst [vmem:[#allocation3 + $0x70] sm:$0xff] %v5030
        %5067 = vst [vmem:[#allocation3 + $0x78] sm:$0xff] %v5031
        %5068 = vst [vmem:[#allocation3 + $0x80] sm:$0xff] %v5032
        %5069 = vst [vmem:[#allocation3 + $0x88] sm:$0xff] %v5033
        %5070 = vst [vmem:[#allocation3 + $0x90] sm:$0xff] %v5034
        %5071 = vst [vmem:[#allocation3 + $0x98] sm:$0xff] %v5035
        %5072 = vst [vmem:[#allocation3 + $0xa0] sm:$0xff] %v5036
        %5073 = vst [vmem:[#allocation3 + $0xa8] sm:$0xff] %v5037
        %5074 = vst [vmem:[#allocation3 + $0xb0] sm:$0xff] %v5038
        %5075 = vst [vmem:[#allocation3 + $0xb8] sm:$0xff] %v5039
        %5076 = vst [vmem:[#allocation3 + $0xc0] sm:$0xff] %v5040
        %5077 = vst [vmem:[#allocation3 + $0xc8] sm:$0xff] %v5041
        %5078 = vst [vmem:[#allocation3 + $0xd0] sm:$0xff] %v5042
        %5079 = vst [vmem:[#allocation3 + $0xd8] sm:$0xff] %v5043
        %5080 = vst [vmem:[#allocation3 + $0xe0] sm:$0xff] %v5044
        %5081 = vst [vmem:[#allocation3 + $0xe8] sm:$0xff] %v5045
        %5082 = vst [vmem:[#allocation3 + $0xf0] sm:$0xff] %v5046
        %5083 = vst [vmem:[#allocation3 + $0xf8] sm:$0xff] %v5047
        %5084 = vst [vmem:[#allocation3 + $0x100] sm:$0xff] %v5048
        %5085 = vst [vmem:[#allocation3 + $0x108] sm:$0xff] %v5049
        %5086 = vst [vmem:[#allocation3 + $0x110] sm:$0xff] %v5050
        %5087 = vst [vmem:[#allocation3 + $0x118] sm:$0xff] %v5051
        %p5088 = scmp.eq.s32.totalorder %s24, 1
        // Predicated region
        $region65: #{tpu_custom_call.1} parent=39 // pred_check
          %p5089 = pneg %p5088
        $region66: #{tpu_custom_call.1} parent=39 // pred_check_branch
          %5091 = sbr.rel (%p5089) target = $region68
        $region67: #{tpu_custom_call.1} parent=39 // pred_region
          %v5092 = vld [vmem:[#allocation4] sm:$0xff]
          %v5093 = vld [vmem:[#allocation4 + $0x8] sm:$0xff]
          %v5094 = vld [vmem:[#allocation4 + $0x10] sm:$0xff]
          %v5095 = vld [vmem:[#allocation4 + $0x18] sm:$0xff]
          %v5096 = vld [vmem:[#allocation4 + $0x20] sm:$0xff]
          %v5097 = vld [vmem:[#allocation4 + $0x28] sm:$0xff]
          %v5098 = vld [vmem:[#allocation4 + $0x30] sm:$0xff]
          %v5099 = vld [vmem:[#allocation4 + $0x38] sm:$0xff]
          %v5100 = vld [vmem:[#allocation4 + $0x40] sm:$0xff]
          %v5101 = vld [vmem:[#allocation4 + $0x48] sm:$0xff]
          %v5102 = vld [vmem:[#allocation4 + $0x50] sm:$0xff]
          %v5103 = vld [vmem:[#allocation4 + $0x58] sm:$0xff]
          %v5104 = vld [vmem:[#allocation4 + $0x60] sm:$0xff]
          %v5105 = vld [vmem:[#allocation4 + $0x68] sm:$0xff]
          %v5106 = vld [vmem:[#allocation4 + $0x70] sm:$0xff]
          %v5107 = vld [vmem:[#allocation4 + $0x78] sm:$0xff]
          %v5108 = vld [vmem:[#allocation4 + $0x80] sm:$0xff]
          %v5109 = vld [vmem:[#allocation4 + $0x88] sm:$0xff]
          %v5110 = vld [vmem:[#allocation4 + $0x90] sm:$0xff]
          %v5111 = vld [vmem:[#allocation4 + $0x98] sm:$0xff]
          %v5112 = vld [vmem:[#allocation4 + $0xa0] sm:$0xff]
          %v5113 = vld [vmem:[#allocation4 + $0xa8] sm:$0xff]
          %v5114 = vld [vmem:[#allocation4 + $0xb0] sm:$0xff]
          %v5115 = vld [vmem:[#allocation4 + $0xb8] sm:$0xff]
          %v5116 = vld [vmem:[#allocation4 + $0xc0] sm:$0xff]
          %v5117 = vld [vmem:[#allocation4 + $0xc8] sm:$0xff]
          %v5118 = vld [vmem:[#allocation4 + $0xd0] sm:$0xff]
          %v5119 = vld [vmem:[#allocation4 + $0xd8] sm:$0xff]
          %v5120 = vld [vmem:[#allocation4 + $0xe0] sm:$0xff]
          %v5121 = vld [vmem:[#allocation4 + $0xe8] sm:$0xff]
          %v5122 = vld [vmem:[#allocation4 + $0xf0] sm:$0xff]
          %v5123 = vld [vmem:[#allocation4 + $0xf8] sm:$0xff]
          %v5124 = vld [vmem:[#allocation4 + $0x100] sm:$0xff]
          %v5125 = vld [vmem:[#allocation4 + $0x108] sm:$0xff]
          %v5126 = vld [vmem:[#allocation4 + $0x110] sm:$0xff]
          %v5127 = vld [vmem:[#allocation4 + $0x118] sm:$0xff]
          %v5128 = vld [vmem:[#allocation3] sm:$0xff]
          %v5129 = vld [vmem:[#allocation3 + $0x8] sm:$0xff]
          %v5130 = vld [vmem:[#allocation3 + $0x10] sm:$0xff]
          %v5131 = vld [vmem:[#allocation3 + $0x18] sm:$0xff]
          %v5132 = vld [vmem:[#allocation3 + $0x20] sm:$0xff]
          %v5133 = vld [vmem:[#allocation3 + $0x28] sm:$0xff]
          %v5134 = vld [vmem:[#allocation3 + $0x30] sm:$0xff]
          %v5135 = vld [vmem:[#allocation3 + $0x38] sm:$0xff]
          %v5136 = vld [vmem:[#allocation3 + $0x40] sm:$0xff]
          %v5137 = vld [vmem:[#allocation3 + $0x48] sm:$0xff]
          %v5138 = vld [vmem:[#allocation3 + $0x50] sm:$0xff]
          %v5139 = vld [vmem:[#allocation3 + $0x58] sm:$0xff]
          %v5140 = vld [vmem:[#allocation3 + $0x60] sm:$0xff]
          %v5141 = vld [vmem:[#allocation3 + $0x68] sm:$0xff]
          %v5142 = vld [vmem:[#allocation3 + $0x70] sm:$0xff]
          %v5143 = vld [vmem:[#allocation3 + $0x78] sm:$0xff]
          %v5144 = vld [vmem:[#allocation3 + $0x80] sm:$0xff]
          %v5145 = vld [vmem:[#allocation3 + $0x88] sm:$0xff]
          %v5146 = vld [vmem:[#allocation3 + $0x90] sm:$0xff]
          %v5147 = vld [vmem:[#allocation3 + $0x98] sm:$0xff]
          %v5148 = vld [vmem:[#allocation3 + $0xa0] sm:$0xff]
          %v5149 = vld [vmem:[#allocation3 + $0xa8] sm:$0xff]
          %v5150 = vld [vmem:[#allocation3 + $0xb0] sm:$0xff]
          %v5151 = vld [vmem:[#allocation3 + $0xb8] sm:$0xff]
          %v5152 = vld [vmem:[#allocation3 + $0xc0] sm:$0xff]
          %v5153 = vld [vmem:[#allocation3 + $0xc8] sm:$0xff]
          %v5154 = vld [vmem:[#allocation3 + $0xd0] sm:$0xff]
          %v5155 = vld [vmem:[#allocation3 + $0xd8] sm:$0xff]
          %v5156 = vld [vmem:[#allocation3 + $0xe0] sm:$0xff]
          %v5157 = vld [vmem:[#allocation3 + $0xe8] sm:$0xff]
          %v5158 = vld [vmem:[#allocation3 + $0xf0] sm:$0xff]
          %v5159 = vld [vmem:[#allocation3 + $0xf8] sm:$0xff]
          %v5160 = vld [vmem:[#allocation3 + $0x100] sm:$0xff]
          %v5161 = vld [vmem:[#allocation3 + $0x108] sm:$0xff]
          %v5162 = vld [vmem:[#allocation3 + $0x110] sm:$0xff]
          %v5163 = vld [vmem:[#allocation3 + $0x118] sm:$0xff]
          %v5164 = vadd.f32 %v5092, %v5128
          %v5165 = vadd.f32 %v5093, %v5129
          %v5166 = vadd.f32 %v5094, %v5130
          %v5167 = vadd.f32 %v5095, %v5131
          %v5168 = vadd.f32 %v5096, %v5132
          %v5169 = vadd.f32 %v5097, %v5133
          %v5170 = vadd.f32 %v5098, %v5134
          %v5171 = vadd.f32 %v5099, %v5135
          %v5172 = vadd.f32 %v5100, %v5136
          %v5173 = vadd.f32 %v5101, %v5137
          %v5174 = vadd.f32 %v5102, %v5138
          %v5175 = vadd.f32 %v5103, %v5139
          %v5176 = vadd.f32 %v5104, %v5140
          %v5177 = vadd.f32 %v5105, %v5141
          %v5178 = vadd.f32 %v5106, %v5142
          %v5179 = vadd.f32 %v5107, %v5143
          %v5180 = vadd.f32 %v5108, %v5144
          %v5181 = vadd.f32 %v5109, %v5145
          %v5182 = vadd.f32 %v5110, %v5146
          %v5183 = vadd.f32 %v5111, %v5147
          %v5184 = vadd.f32 %v5112, %v5148
          %v5185 = vadd.f32 %v5113, %v5149
          %v5186 = vadd.f32 %v5114, %v5150
          %v5187 = vadd.f32 %v5115, %v5151
          %v5188 = vadd.f32 %v5116, %v5152
          %v5189 = vadd.f32 %v5117, %v5153
          %v5190 = vadd.f32 %v5118, %v5154
          %v5191 = vadd.f32 %v5119, %v5155
          %v5192 = vadd.f32 %v5120, %v5156
          %v5193 = vadd.f32 %v5121, %v5157
          %v5194 = vadd.f32 %v5122, %v5158
          %v5195 = vadd.f32 %v5123, %v5159
          %v5196 = vadd.f32 %v5124, %v5160
          %v5197 = vadd.f32 %v5125, %v5161
          %v5198 = vadd.f32 %v5126, %v5162
          %v5199 = vadd.f32 %v5127, %v5163
          %5200 = vst [vmem:[#allocation12] sm:$0xff] %v5164
          %5201 = vst [vmem:[#allocation12 + $0x8] sm:$0xff] %v5165
          %5202 = vst [vmem:[#allocation12 + $0x10] sm:$0xff] %v5166
          %5203 = vst [vmem:[#allocation12 + $0x18] sm:$0xff] %v5167
          %5204 = vst [vmem:[#allocation12 + $0x20] sm:$0xff] %v5168
          %5205 = vst [vmem:[#allocation12 + $0x28] sm:$0xff] %v5169
          %5206 = vst [vmem:[#allocation12 + $0x30] sm:$0xff] %v5170
          %5207 = vst [vmem:[#allocation12 + $0x38] sm:$0xff] %v5171
          %5208 = vst [vmem:[#allocation12 + $0x40] sm:$0xff] %v5172
          %5209 = vst [vmem:[#allocation12 + $0x48] sm:$0xff] %v5173
          %5210 = vst [vmem:[#allocation12 + $0x50] sm:$0xff] %v5174
          %5211 = vst [vmem:[#allocation12 + $0x58] sm:$0xff] %v5175
          %5212 = vst [vmem:[#allocation12 + $0x60] sm:$0xff] %v5176
          %5213 = vst [vmem:[#allocation12 + $0x68] sm:$0xff] %v5177
          %5214 = vst [vmem:[#allocation12 + $0x70] sm:$0xff] %v5178
          %5215 = vst [vmem:[#allocation12 + $0x78] sm:$0xff] %v5179
          %5216 = vst [vmem:[#allocation12 + $0x80] sm:$0xff] %v5180
          %5217 = vst [vmem:[#allocation12 + $0x88] sm:$0xff] %v5181
          %5218 = vst [vmem:[#allocation12 + $0x90] sm:$0xff] %v5182
          %5219 = vst [vmem:[#allocation12 + $0x98] sm:$0xff] %v5183
          %5220 = vst [vmem:[#allocation12 + $0xa0] sm:$0xff] %v5184
          %5221 = vst [vmem:[#allocation12 + $0xa8] sm:$0xff] %v5185
          %5222 = vst [vmem:[#allocation12 + $0xb0] sm:$0xff] %v5186
          %5223 = vst [vmem:[#allocation12 + $0xb8] sm:$0xff] %v5187
          %5224 = vst [vmem:[#allocation12 + $0xc0] sm:$0xff] %v5188
          %5225 = vst [vmem:[#allocation12 + $0xc8] sm:$0xff] %v5189
          %5226 = vst [vmem:[#allocation12 + $0xd0] sm:$0xff] %v5190
          %5227 = vst [vmem:[#allocation12 + $0xd8] sm:$0xff] %v5191
          %5228 = vst [vmem:[#allocation12 + $0xe0] sm:$0xff] %v5192
          %5229 = vst [vmem:[#allocation12 + $0xe8] sm:$0xff] %v5193
          %5230 = vst [vmem:[#allocation12 + $0xf0] sm:$0xff] %v5194
          %5231 = vst [vmem:[#allocation12 + $0xf8] sm:$0xff] %v5195
          %5232 = vst [vmem:[#allocation12 + $0x100] sm:$0xff] %v5196
          %5233 = vst [vmem:[#allocation12 + $0x108] sm:$0xff] %v5197
          %5234 = vst [vmem:[#allocation12 + $0x110] sm:$0xff] %v5198
          %5235 = vst [vmem:[#allocation12 + $0x118] sm:$0xff] %v5199
        $region68: #{tpu_custom_call.1} parent=39 // pred_fallthru
          _
        // Predicated region
        $region69: #{tpu_custom_call.1} parent=39 // pred_check
          %p5236 = pneg %p174
        $region70: #{tpu_custom_call.1} parent=39 // pred_check_branch
          %5238 = sbr.rel (%p5236) target = $region72
        $region71: #{tpu_custom_call.1} parent=39 // pred_region
          %s5239 = smul.u32 18, %s23
          %5241 = vsyncadd [#allocation6], 0
          %s5242 = smul.addr %s5239, 2
          %s5243 = smul.addr %s5242, 8
          %s5244 = scalar_lea.hbm %s5, %s5243
          %s5245 = sshll.u32 [#allocation12], 4
          %s5246 = int_to_ptr.vmem [resolvable:$true] %s5245
          %s5247 = sshll.u32 %s5244, 4
          %s5248 = int_to_ptr.hbm [resolvable:$true] %s5247
          %5253 = dma.vmem_to_hbm [thread:$0]  %s5246, 4608, %s5248, [#allocation6], 256, 256, 16
        $region72: #{tpu_custom_call.1} parent=39 // pred_fallthru
          _
        // Predicated region
        $region73: #{tpu_custom_call.1} parent=39 // pred_check
          %p5254 = pneg %p174
        $region74: #{tpu_custom_call.1} parent=39 // pred_check_branch
          %5256 = sbr.rel (%p5254) target = $region76
        $region75: #{tpu_custom_call.1} parent=39 // pred_region
          %5258 = dma.done [#allocation6], 4608
        $region76: #{tpu_custom_call.1} parent=39 // pred_fallthru
          _
      $region40: #{tpu_custom_call.1} parent=5 // pred_fallthru
        _
      %p5259 = scmp.le.s32.totalorder 2, %s14
      // Predicated region
      $region77: #{tpu_custom_call.1} parent=5 // pred_check
        %p5260 = pneg %p5259
      $region78: #{tpu_custom_call.1} parent=5 // pred_check_branch
        %5262 = sbr.rel (%p5260) target = $region80
      $region79: #{tpu_custom_call.1} parent=5 // pred_region
        %s5263 = ssub.s32 %s14, 2
      $region80: #{tpu_custom_call.1} parent=5 // pred_fallthru
        _
    $region6: #{tpu_custom_call.1} parent=1 // loop_footer
      %s18 = sadd.s32 1, %s14
    $region7: #{tpu_custom_call.1} parent=1 // loop_footer_branch
      %13 = sbr.rel target = $region3
    $region8: #{tpu_custom_call.1} parent=1 // loop_exit
      _
    %5264 = vsyncpa [#allocation5], 1
    %s5265 = scalar_lea.sflag [#allocation5], 1
    %5266 = vsyncpa %s5265, 1
    %5267 = vsyncpa [#allocation8], 1
    %5268 = vsyncpa [#allocation6], 1
    %s5269 = scalar_lea.sflag [#allocation6], 1
    %5270 = vsyncpa %s5269, 1

</llo_original>
